<compile_context>
chip_gen: v6e
topology: v6e:2x2x1
jax: 0.10.0
libtpu: 0.0.40
codegen_flags: <defaults>
</compile_context>

<pallas_src>
import jax
import jax.numpy as jnp
from jax.experimental import pallas as pl
from jax.experimental.pallas import tpu as pltpu

# --- hyper-parameters (stand-ins for cmd_args) -------------------------------
MAX_LV = 3             # cmd_args.max_lv
FEAT_DIM = 16          # cmd_args.feat_dim
LATENT_DIM = 128       # cmd_args.latent_dim
OUT_DIM = 128          # cmd_args.out_dim (> 0, so out_params branch is taken)
HIDDEN = 128           # cmd_args.hidden
NUM_CLASS = 8          # cmd_args.num_class
NUM_CLASS_PAD = 128    # lane-dense padded class dim for the logits store

N_NODES = 256          # nodes per graph-batch
N_GRAPHS = 16          # graphs per graph-batch (equal per batch -> exact means)
N_BATCHES = 4          # graph-batches per pallas_call
B_STEP = 2             # graph-batches processed per grid step (rows stacked)
N_STEPS = N_BATCHES // B_STEP   # 2 -> even grid: both v7x TensorCores busy
BLK = 128              # adjacency diagonal super-tile size (MXU-native)
N_BLOCKS = N_NODES // BLK

ROWS = B_STEP * N_NODES          # 512 stacked node rows per grid step
G_ROWS = B_STEP * N_GRAPHS       # 32 stacked graph rows per grid step
STATS_ROWS = 8                   # spare sublane rows: row 0 = [loss, acc, 0..]
ROWS_OUT = G_ROWS + STATS_ROWS   # 40 (multiple of 8)

assert N_BATCHES % B_STEP == 0
assert N_NODES % BLK == 0
assert N_NODES % N_GRAPHS == 0
assert BLK % (N_NODES // N_GRAPHS) == 0   # graph blocks never cross a super-tile


def classifier_kernel(tags_ref, n2n_ref, subg_ref, labels_ref,
                      w_n2l_ref, b_n2l_ref, w_conv_ref, b_conv_ref,
                      w_out_ref, b_out_ref, w_h1_ref, b_h1_ref,
                      w_h2_ref, b_h2_ref,
                      out_ref):
    bf16 = jnp.bfloat16
    f32 = jnp.float32

    # ---- EmbedMeanField.mean_field (B_STEP batches, node rows stacked) ----
    # One-hot(node_tags) built in-kernel, directly in bf16.
    tags = tags_ref[...]                                        # [ROWS, 1] int32
    feat_iota = jax.lax.broadcasted_iota(jnp.int32, (ROWS, FEAT_DIM), 1)
    onehot = (feat_iota == tags).astype(bf16)                   # [ROWS, F]

    # TODO(synk): replace this degenerate K=16 one-hot matmul with a true
    #             row-gather of w_n2l once Mosaic vector gather is robust here.
    input_message = (jnp.dot(onehot, w_n2l_ref[...],
                             preferred_element_type=f32)
                     + b_n2l_ref[...])                          # [ROWS, L] f32
    cur = jnp.maximum(input_message, 0.0)

    # hoisted out of the MAX_LV loop: bias + skip connection, broadcast once
    msg_plus_bias = input_message + b_conv_ref[...]             # [ROWS, L]

    w_conv = w_conv_ref[...]                                    # [L, L] bf16
    for _ in range(MAX_LV):
        cur_bf = cur.astype(bf16)
        # block-diagonal adjacency: per (batch, 128-node block) matmuls; the
        # off-diagonal 128x128 super-tiles are all-zero and never touched.
        pools = []
        for b in range(B_STEP):
            for k in range(N_BLOCKS):
                r = b * N_NODES + k * BLK
                pools.append(jnp.dot(n2n_ref[b, k, :, :],
                                     cur_bf[r:r + BLK, :],
                                     preferred_element_type=f32))
        n2npool = jnp.concatenate(pools, axis=0)                # [ROWS, L]
        cur = jnp.maximum(
            jnp.dot(n2npool.astype(bf16), w_conv,
                    preferred_element_type=f32) + msg_plus_bias, 0.0)

    reluact = jnp.maximum(
        jnp.dot(cur.astype(bf16), w_out_ref[...],
                preferred_element_type=f32) + b_out_ref[...], 0.0)   # [ROWS, O]

    # graph pooling: per-batch subg @ reluact, stacked to [G_ROWS, O]
    embeds = []
    for b in range(B_STEP):
        embeds.append(jnp.dot(
            subg_ref[b, :, :],
            reluact[b * N_NODES:(b + 1) * N_NODES, :].astype(bf16),
            preferred_element_type=f32))
    embed = jnp.maximum(jnp.concatenate(embeds, axis=0), 0.0)        # [G_ROWS, O]

    # ---- MLPClassifier (G_ROWS = 32 stacked graph rows) ----
    h1 = jnp.maximum(
        jnp.dot(embed.astype(bf16), w_h1_ref[...],
                preferred_element_type=f32) + b_h1_ref[...], 0.0)    # [G_ROWS, H]
    z = (jnp.dot(h1.astype(bf16), w_h2_ref[...],
                 preferred_element_type=f32) + b_h2_ref[...])        # [G_ROWS, C_PAD]

    # log_softmax over the padded lane axis; pad columns carry f32 bias -1e30 so
    # exp(pad) == 0 and the result on the real NUM_CLASS columns is unchanged.
    zmax = jnp.max(z, axis=1, keepdims=True)
    zs = z - zmax
    lse = jnp.log(jnp.sum(jnp.exp(zs), axis=1, keepdims=True))
    logp = zs - lse                                                  # [G_ROWS, C_PAD]

    labels = labels_ref[...]                                         # [G_ROWS, 1]
    class_iota = jax.lax.broadcasted_iota(jnp.int32, (G_ROWS, NUM_CLASS_PAD), 1)
    picked = jnp.sum(jnp.where(class_iota == labels, logp, 0.0),
                     axis=1, keepdims=True)
    loss = -jnp.mean(picked)                                         # nll_loss (mean)

    rowmax = jnp.max(logp, axis=1, keepdims=True)
    pred = jnp.min(jnp.where(logp == rowmax, class_iota, NUM_CLASS_PAD),
                   axis=1, keepdims=True)                            # first argmax
    acc = jnp.mean((pred == labels).astype(f32))

    # per-step stats folded into spare rows of the single lane-dense output
    lane = jax.lax.broadcasted_iota(jnp.int32, (STATS_ROWS, NUM_CLASS_PAD), 1)
    row = jax.lax.broadcasted_iota(jnp.int32, (STATS_ROWS, NUM_CLASS_PAD), 0)
    stats = jnp.where(row == 0,
                      jnp.where(lane == 0, loss,
                                jnp.where(lane == 1, acc, 0.0)),
                      0.0)
    out_ref[...] = jnp.concatenate([logp, stats], axis=0)            # [ROWS_OUT, C_PAD]


def _rows_spec(rows):
    """Flat per-node / per-graph column vectors: step s -> rows [s*rows, (s+1)*rows)."""
    return pl.BlockSpec((rows, 1), lambda s: (s, 0))


def _step_spec(*tail):
    """Per-graph-batch arrays, sliced B_STEP batches at a time along the lead axis."""
    tail = tuple(tail)
    return pl.BlockSpec((B_STEP,) + tail, lambda s: (s,) + (0,) * len(tail))


def _shared_spec(*shape):
    """Weight / bias shared across the grid: constant block -> VMEM-resident."""
    shape = tuple(shape)
    return pl.BlockSpec(shape, lambda s: (0,) * len(shape))


@jax.jit
def classifier_forward(node_tags, n2n_blocks, subg, labels, params):
    in_specs = [
        _rows_spec(ROWS),                       # node_tags flat (int32)
        _step_spec(N_BLOCKS, BLK, BLK),         # n2n diagonal super-tiles (bf16)
        _step_spec(N_GRAPHS, N_NODES),          # subg pooling (bf16)
        _rows_spec(G_ROWS),                     # labels flat (int32)
        _shared_spec(FEAT_DIM, LATENT_DIM),     # w_n2l
        _shared_spec(1, LATENT_DIM),            # b_n2l
        _shared_spec(LATENT_DIM, LATENT_DIM),   # w_conv
        _shared_spec(1, LATENT_DIM),            # b_conv
        _shared_spec(LATENT_DIM, OUT_DIM),      # w_out
        _shared_spec(1, OUT_DIM),               # b_out
        _shared_spec(OUT_DIM, HIDDEN),          # w_h1
        _shared_spec(1, HIDDEN),                # b_h1
        _shared_spec(HIDDEN, NUM_CLASS_PAD),    # w_h2 (zero-padded columns)
        _shared_spec(1, NUM_CLASS_PAD),         # b_h2 (-1e30 padded columns, f32)
    ]
    out_spec = pl.BlockSpec((None, ROWS_OUT, NUM_CLASS_PAD), lambda s: (s, 0, 0))

    out = pl.pallas_call(
        classifier_kernel,
        grid=(N_STEPS,),
        in_specs=in_specs,
        out_specs=out_spec,
        out_shape=jax.ShapeDtypeStruct((N_STEPS, ROWS_OUT, NUM_CLASS_PAD),
                                       jnp.float32),
        compiler_params=pltpu.CompilerParams(
            dimension_semantics=("parallel",),      # megacore split on v7x
            vmem_limit_bytes=16 * 1024 * 1024),     # working set < 3 MiB
    )(node_tags, n2n_blocks, subg, labels, *params)

    logits = out[:, :G_ROWS, :NUM_CLASS].reshape(N_BATCHES * N_GRAPHS, NUM_CLASS)
    # every grid step averages over exactly B_STEP*N_GRAPHS graphs, so
    # mean-of-means equals the global mean (enforced by the static asserts above)
    loss = jnp.mean(out[:, G_ROWS, 0])
    acc = jnp.mean(out[:, G_ROWS, 1])
    return logits, loss, acc


def init_params(key):
    """Deterministic init. Weights stored pre-transposed [in, out] in bf16 so
    the kernel does x @ W (== torch x @ W.T); biases kept f32. The classifier
    head is padded to NUM_CLASS_PAD lanes (zero weight cols, -1e30 f32 bias --
    must stay f32 so the pad logits remain finite) so the padded log_softmax
    equals the unpadded one on the real classes."""
    def lin(k, fan_in, fan_out):
        kw, kb = jax.random.split(k)
        w = (jax.random.normal(kw, (fan_in, fan_out), jnp.float32) * 0.1
             ).astype(jnp.bfloat16)
        b = jax.random.normal(kb, (1, fan_out), jnp.float32) * 0.1
        return w, b

    ks = jax.random.split(key, 5)
    w_n2l, b_n2l = lin(ks[0], FEAT_DIM, LATENT_DIM)      # s2v.w_n2l
    w_conv, b_conv = lin(ks[1], LATENT_DIM, LATENT_DIM)  # s2v.conv_params
    w_out, b_out = lin(ks[2], LATENT_DIM, OUT_DIM)       # s2v.out_params
    w_h1, b_h1 = lin(ks[3], OUT_DIM, HIDDEN)             # mlp.h1_weights
    w_h2, b_h2 = lin(ks[4], HIDDEN, NUM_CLASS)           # mlp.h2_weights
    pad = NUM_CLASS_PAD - NUM_CLASS
    w_h2 = jnp.concatenate([w_h2, jnp.zeros((HIDDEN, pad), jnp.bfloat16)], axis=1)
    b_h2 = jnp.concatenate([b_h2, jnp.full((1, pad), -1e30, jnp.float32)], axis=1)
    return (w_n2l, b_n2l, w_conv, b_conv, w_out, b_out,
            w_h1, b_h1, w_h2, b_h2)


def make_batch(key):
    """Synthetic batched graphs: flat int32 node tags, the 128x128 diagonal
    super-tiles of the block-diagonal adjacency (bf16, exact 0/1), and the
    graph-membership pooling matrix subg (bf16)."""
    k_tag, k_adj, k_lab = jax.random.split(key, 3)

    node_tags = jax.random.randint(k_tag, (N_BATCHES * N_NODES, 1), 0, FEAT_DIM,
                                   dtype=jnp.int32)

    nodes_per_graph = N_NODES // N_GRAPHS
    graph_id = jnp.arange(N_NODES) // nodes_per_graph

    adj = (jax.random.uniform(k_adj, (N_BATCHES, N_NODES, N_NODES)) < 0.15
           ).astype(jnp.float32)
    adj = jnp.maximum(adj, jnp.swapaxes(adj, 1, 2))                   # symmetric
    adj = adj * (1.0 - jnp.eye(N_NODES, dtype=jnp.float32))[None]     # no self-loop
    block_mask = (graph_id[:, None] == graph_id[None, :]).astype(jnp.float32)
    n2n_full = adj * block_mask[None]                                 # block-diagonal

    # Graphs are contiguous and BLK % nodes_per_graph == 0, so every off-diagonal
    # 128x128 super-tile of n2n_full is exactly zero: keep only diagonal tiles.
    n2n_blocks = jnp.stack(
        [n2n_full[:, k * BLK:(k + 1) * BLK, k * BLK:(k + 1) * BLK]
         for k in range(N_BLOCKS)], axis=1).astype(jnp.bfloat16)      # [B, NB, 128, 128]

    subg = (jnp.arange(N_GRAPHS)[:, None] == graph_id[None, :]).astype(jnp.bfloat16)
    subg = jnp.broadcast_to(subg, (N_BATCHES, N_GRAPHS, N_NODES)) * jnp.ones(
        (N_BATCHES, 1, 1), jnp.bfloat16)

    labels = jax.random.randint(k_lab, (N_BATCHES * N_GRAPHS, 1), 0, NUM_CLASS,
                                dtype=jnp.int32)
    return node_tags, n2n_blocks, subg, labels


if __name__ == "__main__":
    key = jax.random.PRNGKey(0)
    k_data, k_params = jax.random.split(key)

    # TODO(synk): PrepareFeatureLabel's python-side graph-list batching is
    #             reproduced as wrapper glue (make_batch), not in-kernel.
    node_tags, n2n_blocks, subg, labels = make_batch(k_data)
    params = init_params(k_params)

    logits, loss, acc = classifier_forward(node_tags, n2n_blocks, subg, labels,
                                           params)
    jax.block_until_ready((logits, loss, acc))

    assert logits.shape == (N_BATCHES * N_GRAPHS, NUM_CLASS)
    assert bool(jnp.all(jnp.isfinite(logits)))
    assert bool(jnp.isfinite(loss))
    assert 0.0 <= float(acc) <= 1.0
    print("KERNEL_OK")
</pallas_src>

<mosaic_0001>
module attributes {stable_mosaic.version = 11 : i64} {
  func.func @classifier_kernel(%arg0: i32, %arg1: memref<512x1xi32, #tpu.memory_space<vmem>>, %arg2: memref<2x2x128x128xbf16, #tpu.memory_space<vmem>>, %arg3: memref<2x16x256xbf16, #tpu.memory_space<vmem>>, %arg4: memref<32x1xi32, #tpu.memory_space<vmem>>, %arg5: memref<16x128xbf16, #tpu.memory_space<vmem>>, %arg6: memref<1x128xf32, #tpu.memory_space<vmem>>, %arg7: memref<128x128xbf16, #tpu.memory_space<vmem>>, %arg8: memref<1x128xf32, #tpu.memory_space<vmem>>, %arg9: memref<128x128xbf16, #tpu.memory_space<vmem>>, %arg10: memref<1x128xf32, #tpu.memory_space<vmem>>, %arg11: memref<128x128xbf16, #tpu.memory_space<vmem>>, %arg12: memref<1x128xf32, #tpu.memory_space<vmem>>, %arg13: memref<128x128xbf16, #tpu.memory_space<vmem>>, %arg14: memref<1x128xf32, #tpu.memory_space<vmem>>, %arg15: memref<1x40x128xf32, #tpu.memory_space<vmem>>) attributes {dimension_semantics = [#tpu.dimension_semantics<parallel>], iteration_bounds = array<i64: 2>, scalar_prefetch = 0 : i64, scratch_operands = 0 : i64, tpu.core_type = #tpu.core_type<tc>, window_params = [{transform_indices = @transform_0, window_bounds = array<i64: 512, 1>}, {transform_indices = @transform_1, window_bounds = array<i64: 2, 2, 128, 128>}, {transform_indices = @transform_2, window_bounds = array<i64: 2, 16, 256>}, {transform_indices = @transform_3, window_bounds = array<i64: 32, 1>}, {pipeline_mode = #tpu.pipeline_mode<synchronous>, transform_indices = @transform_4, window_bounds = array<i64: 16, 128>}, {pipeline_mode = #tpu.pipeline_mode<synchronous>, transform_indices = @transform_5, window_bounds = array<i64: 1, 128>}, {pipeline_mode = #tpu.pipeline_mode<synchronous>, transform_indices = @transform_6, window_bounds = array<i64: 128, 128>}, {pipeline_mode = #tpu.pipeline_mode<synchronous>, transform_indices = @transform_7, window_bounds = array<i64: 1, 128>}, {pipeline_mode = #tpu.pipeline_mode<synchronous>, transform_indices = @transform_8, window_bounds = array<i64: 128, 128>}, {pipeline_mode = #tpu.pipeline_mode<synchronous>, transform_indices = @transform_9, window_bounds = array<i64: 1, 128>}, {pipeline_mode = #tpu.pipeline_mode<synchronous>, transform_indices = @transform_10, window_bounds = array<i64: 128, 128>}, {pipeline_mode = #tpu.pipeline_mode<synchronous>, transform_indices = @transform_11, window_bounds = array<i64: 1, 128>}, {pipeline_mode = #tpu.pipeline_mode<synchronous>, transform_indices = @transform_12, window_bounds = array<i64: 128, 128>}, {pipeline_mode = #tpu.pipeline_mode<synchronous>, transform_indices = @transform_13, window_bounds = array<i64: 1, 128>}, {transform_indices = @transform_14, window_bounds = array<i64: 1, 40, 128>}]} {
    %c0 = arith.constant 0 : index
    %c0_0 = arith.constant 0 : index
    %0 = vector.load %arg1[%c0, %c0_0] : memref<512x1xi32, #tpu.memory_space<vmem>>, vector<512x1xi32>
    %1 = tpu.iota {dimensions = array<i32: 1>} : vector<512x16xi32>
    %2 = vector.broadcast %0 : vector<512x1xi32> to vector<512x16xi32>
    %3 = arith.cmpi eq, %1, %2 : vector<512x16xi32>
    %4 = arith.extui %3 : vector<512x16xi1> to vector<512x16xi32>
    %5 = arith.sitofp %4 : vector<512x16xi32> to vector<512x16xf32>
    %6 = arith.truncf %5 : vector<512x16xf32> to vector<512x16xbf16>
    %c0_1 = arith.constant 0 : index
    %c0_2 = arith.constant 0 : index
    %7 = vector.load %arg5[%c0_1, %c0_2] : memref<16x128xbf16, #tpu.memory_space<vmem>>, vector<16x128xbf16>
    %cst = arith.constant dense<0.000000e+00> : vector<512x128xf32>
    %8 = tpu.matmul %6, %7, %cst {dimension_numbers = #tpu.dot_dimension_numbers<[1], [0], [0], [1], [0, 0, 1, 1], [], []>} : vector<512x16xbf16>, vector<16x128xbf16>, vector<512x128xf32> -> vector<512x128xf32>
    %c0_3 = arith.constant 0 : index
    %c0_4 = arith.constant 0 : index
    %9 = vector.load %arg6[%c0_3, %c0_4] : memref<1x128xf32, #tpu.memory_space<vmem>>, vector<1x128xf32>
    %10 = vector.broadcast %9 : vector<1x128xf32> to vector<512x128xf32>
    %11 = arith.addf %8, %10 : vector<512x128xf32>
    %cst_5 = arith.constant 0.000000e+00 : f32
    %12 = vector.broadcast %cst_5 : f32 to vector<512x128xf32>
    %13 = arith.maximumf %11, %12 : vector<512x128xf32>
    %c0_6 = arith.constant 0 : index
    %c0_7 = arith.constant 0 : index
    %14 = vector.load %arg8[%c0_6, %c0_7] : memref<1x128xf32, #tpu.memory_space<vmem>>, vector<1x128xf32>
    %15 = vector.broadcast %14 : vector<1x128xf32> to vector<512x128xf32>
    %16 = arith.addf %11, %15 : vector<512x128xf32>
    %c0_8 = arith.constant 0 : index
    %c0_9 = arith.constant 0 : index
    %17 = vector.load %arg7[%c0_8, %c0_9] : memref<128x128xbf16, #tpu.memory_space<vmem>>, vector<128x128xbf16>
    %18 = arith.truncf %13 : vector<512x128xf32> to vector<512x128xbf16>
    %c0_10 = arith.constant 0 : index
    %c0_11 = arith.constant 0 : index
    %c0_12 = arith.constant 0 : index
    %c0_13 = arith.constant 0 : index
    %19 = vector.load %arg2[%c0_10, %c0_11, %c0_12, %c0_13] : memref<2x2x128x128xbf16, #tpu.memory_space<vmem>>, vector<1x1x128x128xbf16>
    %20 = vector.shape_cast %19 : vector<1x1x128x128xbf16> to vector<128x128xbf16>
    %21 = vector.extract_strided_slice %18 {offsets = [0, 0], sizes = [128, 128], strides = [1, 1]} : vector<512x128xbf16> to vector<128x128xbf16>
    %cst_14 = arith.constant dense<0.000000e+00> : vector<128x128xf32>
    %22 = tpu.matmul %20, %21, %cst_14 {dimension_numbers = #tpu.dot_dimension_numbers<[1], [0], [0], [1], [0, 0, 1, 1], [], []>} : vector<128x128xbf16>, vector<128x128xbf16>, vector<128x128xf32> -> vector<128x128xf32>
    %c0_15 = arith.constant 0 : index
    %c1 = arith.constant 1 : index
    %c0_16 = arith.constant 0 : index
    %c0_17 = arith.constant 0 : index
    %23 = vector.load %arg2[%c0_15, %c1, %c0_16, %c0_17] : memref<2x2x128x128xbf16, #tpu.memory_space<vmem>>, vector<1x1x128x128xbf16>
    %24 = vector.shape_cast %23 : vector<1x1x128x128xbf16> to vector<128x128xbf16>
    %25 = vector.extract_strided_slice %18 {offsets = [128, 0], sizes = [128, 128], strides = [1, 1]} : vector<512x128xbf16> to vector<128x128xbf16>
    %cst_18 = arith.constant dense<0.000000e+00> : vector<128x128xf32>
    %26 = tpu.matmul %24, %25, %cst_18 {dimension_numbers = #tpu.dot_dimension_numbers<[1], [0], [0], [1], [0, 0, 1, 1], [], []>} : vector<128x128xbf16>, vector<128x128xbf16>, vector<128x128xf32> -> vector<128x128xf32>
    %c1_19 = arith.constant 1 : index
    %c0_20 = arith.constant 0 : index
    %c0_21 = arith.constant 0 : index
    %c0_22 = arith.constant 0 : index
    %27 = vector.load %arg2[%c1_19, %c0_20, %c0_21, %c0_22] : memref<2x2x128x128xbf16, #tpu.memory_space<vmem>>, vector<1x1x128x128xbf16>
    %28 = vector.shape_cast %27 : vector<1x1x128x128xbf16> to vector<128x128xbf16>
    %29 = vector.extract_strided_slice %18 {offsets = [256, 0], sizes = [128, 128], strides = [1, 1]} : vector<512x128xbf16> to vector<128x128xbf16>
    %cst_23 = arith.constant dense<0.000000e+00> : vector<128x128xf32>
    %30 = tpu.matmul %28, %29, %cst_23 {dimension_numbers = #tpu.dot_dimension_numbers<[1], [0], [0], [1], [0, 0, 1, 1], [], []>} : vector<128x128xbf16>, vector<128x128xbf16>, vector<128x128xf32> -> vector<128x128xf32>
    %c1_24 = arith.constant 1 : index
    %c1_25 = arith.constant 1 : index
    %c0_26 = arith.constant 0 : index
    %c0_27 = arith.constant 0 : index
    %31 = vector.load %arg2[%c1_24, %c1_25, %c0_26, %c0_27] : memref<2x2x128x128xbf16, #tpu.memory_space<vmem>>, vector<1x1x128x128xbf16>
    %32 = vector.shape_cast %31 : vector<1x1x128x128xbf16> to vector<128x128xbf16>
    %33 = vector.extract_strided_slice %18 {offsets = [384, 0], sizes = [128, 128], strides = [1, 1]} : vector<512x128xbf16> to vector<128x128xbf16>
    %cst_28 = arith.constant dense<0.000000e+00> : vector<128x128xf32>
    %34 = tpu.matmul %32, %33, %cst_28 {dimension_numbers = #tpu.dot_dimension_numbers<[1], [0], [0], [1], [0, 0, 1, 1], [], []>} : vector<128x128xbf16>, vector<128x128xbf16>, vector<128x128xf32> -> vector<128x128xf32>
    %35 = tpu.concatenate %22, %26, %30, %34 in 0 : vector<128x128xf32>, vector<128x128xf32>, vector<128x128xf32>, vector<128x128xf32> -> vector<512x128xf32>
    %36 = arith.truncf %35 : vector<512x128xf32> to vector<512x128xbf16>
    %cst_29 = arith.constant dense<0.000000e+00> : vector<512x128xf32>
    %37 = tpu.matmul %36, %17, %cst_29 {dimension_numbers = #tpu.dot_dimension_numbers<[1], [0], [0], [1], [0, 0, 1, 1], [], []>} : vector<512x128xbf16>, vector<128x128xbf16>, vector<512x128xf32> -> vector<512x128xf32>
    %38 = arith.addf %37, %16 : vector<512x128xf32>
    %cst_30 = arith.constant 0.000000e+00 : f32
    %39 = vector.broadcast %cst_30 : f32 to vector<512x128xf32>
    %40 = arith.maximumf %38, %39 : vector<512x128xf32>
    %41 = arith.truncf %40 : vector<512x128xf32> to vector<512x128xbf16>
    %c0_31 = arith.constant 0 : index
    %c0_32 = arith.constant 0 : index
    %c0_33 = arith.constant 0 : index
    %c0_34 = arith.constant 0 : index
    %42 = vector.load %arg2[%c0_31, %c0_32, %c0_33, %c0_34] : memref<2x2x128x128xbf16, #tpu.memory_space<vmem>>, vector<1x1x128x128xbf16>
    %43 = vector.shape_cast %42 : vector<1x1x128x128xbf16> to vector<128x128xbf16>
    %44 = vector.extract_strided_slice %41 {offsets = [0, 0], sizes = [128, 128], strides = [1, 1]} : vector<512x128xbf16> to vector<128x128xbf16>
    %cst_35 = arith.constant dense<0.000000e+00> : vector<128x128xf32>
    %45 = tpu.matmul %43, %44, %cst_35 {dimension_numbers = #tpu.dot_dimension_numbers<[1], [0], [0], [1], [0, 0, 1, 1], [], []>} : vector<128x128xbf16>, vector<128x128xbf16>, vector<128x128xf32> -> vector<128x128xf32>
    %c0_36 = arith.constant 0 : index
    %c1_37 = arith.constant 1 : index
    %c0_38 = arith.constant 0 : index
    %c0_39 = arith.constant 0 : index
    %46 = vector.load %arg2[%c0_36, %c1_37, %c0_38, %c0_39] : memref<2x2x128x128xbf16, #tpu.memory_space<vmem>>, vector<1x1x128x128xbf16>
    %47 = vector.shape_cast %46 : vector<1x1x128x128xbf16> to vector<128x128xbf16>
    %48 = vector.extract_strided_slice %41 {offsets = [128, 0], sizes = [128, 128], strides = [1, 1]} : vector<512x128xbf16> to vector<128x128xbf16>
    %cst_40 = arith.constant dense<0.000000e+00> : vector<128x128xf32>
    %49 = tpu.matmul %47, %48, %cst_40 {dimension_numbers = #tpu.dot_dimension_numbers<[1], [0], [0], [1], [0, 0, 1, 1], [], []>} : vector<128x128xbf16>, vector<128x128xbf16>, vector<128x128xf32> -> vector<128x128xf32>
    %c1_41 = arith.constant 1 : index
    %c0_42 = arith.constant 0 : index
    %c0_43 = arith.constant 0 : index
    %c0_44 = arith.constant 0 : index
    %50 = vector.load %arg2[%c1_41, %c0_42, %c0_43, %c0_44] : memref<2x2x128x128xbf16, #tpu.memory_space<vmem>>, vector<1x1x128x128xbf16>
    %51 = vector.shape_cast %50 : vector<1x1x128x128xbf16> to vector<128x128xbf16>
    %52 = vector.extract_strided_slice %41 {offsets = [256, 0], sizes = [128, 128], strides = [1, 1]} : vector<512x128xbf16> to vector<128x128xbf16>
    %cst_45 = arith.constant dense<0.000000e+00> : vector<128x128xf32>
    %53 = tpu.matmul %51, %52, %cst_45 {dimension_numbers = #tpu.dot_dimension_numbers<[1], [0], [0], [1], [0, 0, 1, 1], [], []>} : vector<128x128xbf16>, vector<128x128xbf16>, vector<128x128xf32> -> vector<128x128xf32>
    %c1_46 = arith.constant 1 : index
    %c1_47 = arith.constant 1 : index
    %c0_48 = arith.constant 0 : index
    %c0_49 = arith.constant 0 : index
    %54 = vector.load %arg2[%c1_46, %c1_47, %c0_48, %c0_49] : memref<2x2x128x128xbf16, #tpu.memory_space<vmem>>, vector<1x1x128x128xbf16>
    %55 = vector.shape_cast %54 : vector<1x1x128x128xbf16> to vector<128x128xbf16>
    %56 = vector.extract_strided_slice %41 {offsets = [384, 0], sizes = [128, 128], strides = [1, 1]} : vector<512x128xbf16> to vector<128x128xbf16>
    %cst_50 = arith.constant dense<0.000000e+00> : vector<128x128xf32>
    %57 = tpu.matmul %55, %56, %cst_50 {dimension_numbers = #tpu.dot_dimension_numbers<[1], [0], [0], [1], [0, 0, 1, 1], [], []>} : vector<128x128xbf16>, vector<128x128xbf16>, vector<128x128xf32> -> vector<128x128xf32>
    %58 = tpu.concatenate %45, %49, %53, %57 in 0 : vector<128x128xf32>, vector<128x128xf32>, vector<128x128xf32>, vector<128x128xf32> -> vector<512x128xf32>
    %59 = arith.truncf %58 : vector<512x128xf32> to vector<512x128xbf16>
    %cst_51 = arith.constant dense<0.000000e+00> : vector<512x128xf32>
    %60 = tpu.matmul %59, %17, %cst_51 {dimension_numbers = #tpu.dot_dimension_numbers<[1], [0], [0], [1], [0, 0, 1, 1], [], []>} : vector<512x128xbf16>, vector<128x128xbf16>, vector<512x128xf32> -> vector<512x128xf32>
    %61 = arith.addf %60, %16 : vector<512x128xf32>
    %cst_52 = arith.constant 0.000000e+00 : f32
    %62 = vector.broadcast %cst_52 : f32 to vector<512x128xf32>
    %63 = arith.maximumf %61, %62 : vector<512x128xf32>
    %64 = arith.truncf %63 : vector<512x128xf32> to vector<512x128xbf16>
    %c0_53 = arith.constant 0 : index
    %c0_54 = arith.constant 0 : index
    %c0_55 = arith.constant 0 : index
    %c0_56 = arith.constant 0 : index
    %65 = vector.load %arg2[%c0_53, %c0_54, %c0_55, %c0_56] : memref<2x2x128x128xbf16, #tpu.memory_space<vmem>>, vector<1x1x128x128xbf16>
    %66 = vector.shape_cast %65 : vector<1x1x128x128xbf16> to vector<128x128xbf16>
    %67 = vector.extract_strided_slice %64 {offsets = [0, 0], sizes = [128, 128], strides = [1, 1]} : vector<512x128xbf16> to vector<128x128xbf16>
    %cst_57 = arith.constant dense<0.000000e+00> : vector<128x128xf32>
    %68 = tpu.matmul %66, %67, %cst_57 {dimension_numbers = #tpu.dot_dimension_numbers<[1], [0], [0], [1], [0, 0, 1, 1], [], []>} : vector<128x128xbf16>, vector<128x128xbf16>, vector<128x128xf32> -> vector<128x128xf32>
    %c0_58 = arith.constant 0 : index
    %c1_59 = arith.constant 1 : index
    %c0_60 = arith.constant 0 : index
    %c0_61 = arith.constant 0 : index
    %69 = vector.load %arg2[%c0_58, %c1_59, %c0_60, %c0_61] : memref<2x2x128x128xbf16, #tpu.memory_space<vmem>>, vector<1x1x128x128xbf16>
    %70 = vector.shape_cast %69 : vector<1x1x128x128xbf16> to vector<128x128xbf16>
    %71 = vector.extract_strided_slice %64 {offsets = [128, 0], sizes = [128, 128], strides = [1, 1]} : vector<512x128xbf16> to vector<128x128xbf16>
    %cst_62 = arith.constant dense<0.000000e+00> : vector<128x128xf32>
    %72 = tpu.matmul %70, %71, %cst_62 {dimension_numbers = #tpu.dot_dimension_numbers<[1], [0], [0], [1], [0, 0, 1, 1], [], []>} : vector<128x128xbf16>, vector<128x128xbf16>, vector<128x128xf32> -> vector<128x128xf32>
    %c1_63 = arith.constant 1 : index
    %c0_64 = arith.constant 0 : index
    %c0_65 = arith.constant 0 : index
    %c0_66 = arith.constant 0 : index
    %73 = vector.load %arg2[%c1_63, %c0_64, %c0_65, %c0_66] : memref<2x2x128x128xbf16, #tpu.memory_space<vmem>>, vector<1x1x128x128xbf16>
    %74 = vector.shape_cast %73 : vector<1x1x128x128xbf16> to vector<128x128xbf16>
    %75 = vector.extract_strided_slice %64 {offsets = [256, 0], sizes = [128, 128], strides = [1, 1]} : vector<512x128xbf16> to vector<128x128xbf16>
    %cst_67 = arith.constant dense<0.000000e+00> : vector<128x128xf32>
    %76 = tpu.matmul %74, %75, %cst_67 {dimension_numbers = #tpu.dot_dimension_numbers<[1], [0], [0], [1], [0, 0, 1, 1], [], []>} : vector<128x128xbf16>, vector<128x128xbf16>, vector<128x128xf32> -> vector<128x128xf32>
    %c1_68 = arith.constant 1 : index
    %c1_69 = arith.constant 1 : index
    %c0_70 = arith.constant 0 : index
    %c0_71 = arith.constant 0 : index
    %77 = vector.load %arg2[%c1_68, %c1_69, %c0_70, %c0_71] : memref<2x2x128x128xbf16, #tpu.memory_space<vmem>>, vector<1x1x128x128xbf16>
    %78 = vector.shape_cast %77 : vector<1x1x128x128xbf16> to vector<128x128xbf16>
    %79 = vector.extract_strided_slice %64 {offsets = [384, 0], sizes = [128, 128], strides = [1, 1]} : vector<512x128xbf16> to vector<128x128xbf16>
    %cst_72 = arith.constant dense<0.000000e+00> : vector<128x128xf32>
    %80 = tpu.matmul %78, %79, %cst_72 {dimension_numbers = #tpu.dot_dimension_numbers<[1], [0], [0], [1], [0, 0, 1, 1], [], []>} : vector<128x128xbf16>, vector<128x128xbf16>, vector<128x128xf32> -> vector<128x128xf32>
    %81 = tpu.concatenate %68, %72, %76, %80 in 0 : vector<128x128xf32>, vector<128x128xf32>, vector<128x128xf32>, vector<128x128xf32> -> vector<512x128xf32>
    %82 = arith.truncf %81 : vector<512x128xf32> to vector<512x128xbf16>
    %cst_73 = arith.constant dense<0.000000e+00> : vector<512x128xf32>
    %83 = tpu.matmul %82, %17, %cst_73 {dimension_numbers = #tpu.dot_dimension_numbers<[1], [0], [0], [1], [0, 0, 1, 1], [], []>} : vector<512x128xbf16>, vector<128x128xbf16>, vector<512x128xf32> -> vector<512x128xf32>
    %84 = arith.addf %83, %16 : vector<512x128xf32>
    %cst_74 = arith.constant 0.000000e+00 : f32
    %85 = vector.broadcast %cst_74 : f32 to vector<512x128xf32>
    %86 = arith.maximumf %84, %85 : vector<512x128xf32>
    %87 = arith.truncf %86 : vector<512x128xf32> to vector<512x128xbf16>
    %c0_75 = arith.constant 0 : index
    %c0_76 = arith.constant 0 : index
    %88 = vector.load %arg9[%c0_75, %c0_76] : memref<128x128xbf16, #tpu.memory_space<vmem>>, vector<128x128xbf16>
    %cst_77 = arith.constant dense<0.000000e+00> : vector<512x128xf32>
    %89 = tpu.matmul %87, %88, %cst_77 {dimension_numbers = #tpu.dot_dimension_numbers<[1], [0], [0], [1], [0, 0, 1, 1], [], []>} : vector<512x128xbf16>, vector<128x128xbf16>, vector<512x128xf32> -> vector<512x128xf32>
    %c0_78 = arith.constant 0 : index
    %c0_79 = arith.constant 0 : index
    %90 = vector.load %arg10[%c0_78, %c0_79] : memref<1x128xf32, #tpu.memory_space<vmem>>, vector<1x128xf32>
    %91 = vector.broadcast %90 : vector<1x128xf32> to vector<512x128xf32>
    %92 = arith.addf %89, %91 : vector<512x128xf32>
    %cst_80 = arith.constant 0.000000e+00 : f32
    %93 = vector.broadcast %cst_80 : f32 to vector<512x128xf32>
    %94 = arith.maximumf %92, %93 : vector<512x128xf32>
    %c0_81 = arith.constant 0 : index
    %c0_82 = arith.constant 0 : index
    %c0_83 = arith.constant 0 : index
    %95 = vector.load %arg3[%c0_81, %c0_82, %c0_83] : memref<2x16x256xbf16, #tpu.memory_space<vmem>>, vector<1x16x256xbf16>
    %96 = vector.shape_cast %95 : vector<1x16x256xbf16> to vector<16x256xbf16>
    %97 = vector.extract_strided_slice %94 {offsets = [0, 0], sizes = [256, 128], strides = [1, 1]} : vector<512x128xf32> to vector<256x128xf32>
    %98 = arith.truncf %97 : vector<256x128xf32> to vector<256x128xbf16>
    %cst_84 = arith.constant dense<0.000000e+00> : vector<16x128xf32>
    %99 = tpu.matmul %96, %98, %cst_84 {dimension_numbers = #tpu.dot_dimension_numbers<[1], [0], [0], [1], [0, 0, 1, 1], [], []>} : vector<16x256xbf16>, vector<256x128xbf16>, vector<16x128xf32> -> vector<16x128xf32>
    %c1_85 = arith.constant 1 : index
    %c0_86 = arith.constant 0 : index
    %c0_87 = arith.constant 0 : index
    %100 = vector.load %arg3[%c1_85, %c0_86, %c0_87] : memref<2x16x256xbf16, #tpu.memory_space<vmem>>, vector<1x16x256xbf16>
    %101 = vector.shape_cast %100 : vector<1x16x256xbf16> to vector<16x256xbf16>
    %102 = vector.extract_strided_slice %94 {offsets = [256, 0], sizes = [256, 128], strides = [1, 1]} : vector<512x128xf32> to vector<256x128xf32>
    %103 = arith.truncf %102 : vector<256x128xf32> to vector<256x128xbf16>
    %cst_88 = arith.constant dense<0.000000e+00> : vector<16x128xf32>
    %104 = tpu.matmul %101, %103, %cst_88 {dimension_numbers = #tpu.dot_dimension_numbers<[1], [0], [0], [1], [0, 0, 1, 1], [], []>} : vector<16x256xbf16>, vector<256x128xbf16>, vector<16x128xf32> -> vector<16x128xf32>
    %105 = tpu.concatenate %99, %104 in 0 : vector<16x128xf32>, vector<16x128xf32> -> vector<32x128xf32>
    %cst_89 = arith.constant 0.000000e+00 : f32
    %106 = vector.broadcast %cst_89 : f32 to vector<32x128xf32>
    %107 = arith.maximumf %105, %106 : vector<32x128xf32>
    %108 = arith.truncf %107 : vector<32x128xf32> to vector<32x128xbf16>
    %c0_90 = arith.constant 0 : index
    %c0_91 = arith.constant 0 : index
    %109 = vector.load %arg11[%c0_90, %c0_91] : memref<128x128xbf16, #tpu.memory_space<vmem>>, vector<128x128xbf16>
    %cst_92 = arith.constant dense<0.000000e+00> : vector<32x128xf32>
    %110 = tpu.matmul %108, %109, %cst_92 {dimension_numbers = #tpu.dot_dimension_numbers<[1], [0], [0], [1], [0, 0, 1, 1], [], []>} : vector<32x128xbf16>, vector<128x128xbf16>, vector<32x128xf32> -> vector<32x128xf32>
    %c0_93 = arith.constant 0 : index
    %c0_94 = arith.constant 0 : index
    %111 = vector.load %arg12[%c0_93, %c0_94] : memref<1x128xf32, #tpu.memory_space<vmem>>, vector<1x128xf32>
    %112 = vector.broadcast %111 : vector<1x128xf32> to vector<32x128xf32>
    %113 = arith.addf %110, %112 : vector<32x128xf32>
    %cst_95 = arith.constant 0.000000e+00 : f32
    %114 = vector.broadcast %cst_95 : f32 to vector<32x128xf32>
    %115 = arith.maximumf %113, %114 : vector<32x128xf32>
    %116 = arith.truncf %115 : vector<32x128xf32> to vector<32x128xbf16>
    %c0_96 = arith.constant 0 : index
    %c0_97 = arith.constant 0 : index
    %117 = vector.load %arg13[%c0_96, %c0_97] : memref<128x128xbf16, #tpu.memory_space<vmem>>, vector<128x128xbf16>
    %cst_98 = arith.constant dense<0.000000e+00> : vector<32x128xf32>
    %118 = tpu.matmul %116, %117, %cst_98 {dimension_numbers = #tpu.dot_dimension_numbers<[1], [0], [0], [1], [0, 0, 1, 1], [], []>} : vector<32x128xbf16>, vector<128x128xbf16>, vector<32x128xf32> -> vector<32x128xf32>
    %c0_99 = arith.constant 0 : index
    %c0_100 = arith.constant 0 : index
    %119 = vector.load %arg14[%c0_99, %c0_100] : memref<1x128xf32, #tpu.memory_space<vmem>>, vector<1x128xf32>
    %120 = vector.broadcast %119 : vector<1x128xf32> to vector<32x128xf32>
    %121 = arith.addf %118, %120 : vector<32x128xf32>
    %cst_101 = arith.constant dense<0xFF800000> : vector<32xf32>
    %122 = vector.multi_reduction <maximumf>, %121, %cst_101 [1] : vector<32x128xf32> to vector<32xf32>
    %123 = vector.shape_cast %122 : vector<32xf32> to vector<32x1xf32>
    %124 = vector.broadcast %123 : vector<32x1xf32> to vector<32x128xf32>
    %125 = arith.subf %121, %124 : vector<32x128xf32>
    %126 = math.exp %125 : vector<32x128xf32>
    %cst_102 = arith.constant dense<0.000000e+00> : vector<32xf32>
    %127 = vector.multi_reduction <add>, %126, %cst_102 [1] : vector<32x128xf32> to vector<32xf32>
    %128 = vector.shape_cast %127 : vector<32xf32> to vector<32x1xf32>
    %129 = math.log %128 : vector<32x1xf32>
    %130 = vector.broadcast %129 : vector<32x1xf32> to vector<32x128xf32>
    %131 = arith.subf %125, %130 : vector<32x128xf32>
    %c0_103 = arith.constant 0 : index
    %c0_104 = arith.constant 0 : index
    %132 = vector.load %arg4[%c0_103, %c0_104] : memref<32x1xi32, #tpu.memory_space<vmem>>, vector<32x1xi32>
    %133 = tpu.iota {dimensions = array<i32: 1>} : vector<32x128xi32>
    %134 = vector.broadcast %132 : vector<32x1xi32> to vector<32x128xi32>
    %135 = arith.cmpi eq, %133, %134 : vector<32x128xi32>
    %cst_105 = arith.constant 0.000000e+00 : f32
    %136 = vector.broadcast %cst_105 : f32 to vector<32x128xf32>
    %137 = arith.select %135, %131, %136 : vector<32x128xi1>, vector<32x128xf32>
    %cst_106 = arith.constant dense<0.000000e+00> : vector<32xf32>
    %138 = vector.multi_reduction <add>, %137, %cst_106 [1] : vector<32x128xf32> to vector<32xf32>
    %139 = vector.shape_cast %138 : vector<32xf32> to vector<32x1xf32>
    %140 = vector.shape_cast %139 : vector<32x1xf32> to vector<1x32x1xf32>
    %cst_107 = arith.constant dense<0.000000e+00> : vector<1xf32>
    %141 = vector.multi_reduction <add>, %140, %cst_107 [1, 2] : vector<1x32x1xf32> to vector<1xf32>
    %142 = vector.shape_cast %141 : vector<1xf32> to vector<1x1x1xf32>
    %143 = vector.extract %142[0, 0, 0] : f32 from vector<1x1x1xf32>
    %cst_108 = arith.constant 3.200000e+01 : f32
    %144 = arith.divf %143, %cst_108 : f32
    %cst_109 = arith.constant 0.000000e+00 : f32
    %145 = arith.subf %cst_109, %144 : f32
    %cst_110 = arith.constant dense<0xFF800000> : vector<32xf32>
    %146 = vector.multi_reduction <maximumf>, %131, %cst_110 [1] : vector<32x128xf32> to vector<32xf32>
    %147 = vector.shape_cast %146 : vector<32xf32> to vector<32x1xf32>
    %148 = vector.broadcast %147 : vector<32x1xf32> to vector<32x128xf32>
    %149 = arith.cmpf oeq, %131, %148 : vector<32x128xf32>
    %c128_i32 = arith.constant 128 : i32
    %150 = vector.broadcast %c128_i32 : i32 to vector<32x128xi32>
    %151 = arith.select %149, %133, %150 : vector<32x128xi1>, vector<32x128xi32>
    %cst_111 = arith.constant dense<2147483647> : vector<32xi32>
    %152 = vector.multi_reduction <minsi>, %151, %cst_111 [1] : vector<32x128xi32> to vector<32xi32>
    %153 = vector.shape_cast %152 : vector<32xi32> to vector<32x1xi32>
    %154 = arith.cmpi eq, %153, %132 : vector<32x1xi32>
    %155 = arith.extui %154 : vector<32x1xi1> to vector<32x1xi32>
    %156 = arith.sitofp %155 : vector<32x1xi32> to vector<32x1xf32>
    %157 = vector.shape_cast %156 : vector<32x1xf32> to vector<1x32x1xf32>
    %cst_112 = arith.constant dense<0.000000e+00> : vector<1xf32>
    %158 = vector.multi_reduction <add>, %157, %cst_112 [1, 2] : vector<1x32x1xf32> to vector<1xf32>
    %159 = vector.shape_cast %158 : vector<1xf32> to vector<1x1x1xf32>
    %160 = vector.extract %159[0, 0, 0] : f32 from vector<1x1x1xf32>
    %cst_113 = arith.constant 3.200000e+01 : f32
    %161 = arith.divf %160, %cst_113 : f32
    %162 = tpu.iota {dimensions = array<i32: 1>} : vector<8x128xi32>
    %163 = tpu.iota {dimensions = array<i32: 0>} : vector<8x128xi32>
    %c0_i32 = arith.constant 0 : i32
    %164 = vector.broadcast %c0_i32 : i32 to vector<8x128xi32>
    %165 = arith.cmpi eq, %163, %164 : vector<8x128xi32>
    %c0_i32_114 = arith.constant 0 : i32
    %166 = vector.broadcast %c0_i32_114 : i32 to vector<8x128xi32>
    %167 = arith.cmpi eq, %162, %166 : vector<8x128xi32>
    %c1_i32 = arith.constant 1 : i32
    %168 = vector.broadcast %c1_i32 : i32 to vector<8x128xi32>
    %169 = arith.cmpi eq, %162, %168 : vector<8x128xi32>
    %cst_115 = arith.constant 0.000000e+00 : f32
    %170 = vector.broadcast %161 : f32 to vector<8x128xf32>
    %171 = vector.broadcast %cst_115 : f32 to vector<8x128xf32>
    %172 = arith.select %169, %170, %171 : vector<8x128xi1>, vector<8x128xf32>
    %173 = vector.broadcast %145 : f32 to vector<8x128xf32>
    %174 = arith.select %167, %173, %172 : vector<8x128xi1>, vector<8x128xf32>
    %cst_116 = arith.constant 0.000000e+00 : f32
    %175 = vector.broadcast %cst_116 : f32 to vector<8x128xf32>
    %176 = arith.select %165, %174, %175 : vector<8x128xi1>, vector<8x128xf32>
    %177 = tpu.concatenate %131, %176 in 0 : vector<32x128xf32>, vector<8x128xf32> -> vector<40x128xf32>
    %c0_117 = arith.constant 0 : index
    %c0_118 = arith.constant 0 : index
    %c0_119 = arith.constant 0 : index
    %178 = vector.load %arg15[%c0_117, %c0_118, %c0_119] : memref<1x40x128xf32, #tpu.memory_space<vmem>>, vector<1x40x128xf32>
    %179 = vector.shape_cast %178 : vector<1x40x128xf32> to vector<40x128xf32>
    %180 = vector.shape_cast %177 : vector<40x128xf32> to vector<1x40x128xf32>
    tpu.vector_store %arg15[%c0_117, %c0_118, %c0_119], %180 {strides = array<i32>} : memref<1x40x128xf32, #tpu.memory_space<vmem>>, vector<1x40x128xf32>,
    return
  }
  func.func @transform_0(%arg0: i32) -> (i32, i32) {
    %c0_i32 = arith.constant 0 : i32
    %c0_i32_0 = arith.constant 0 : i32
    return %arg0, %c0_i32 : i32, i32
  }
  func.func @transform_1(%arg0: i32) -> (i32, i32, i32, i32) {
    %c0_i32 = arith.constant 0 : i32
    %c0_i32_0 = arith.constant 0 : i32
    %c0_i32_1 = arith.constant 0 : i32
    %c0_i32_2 = arith.constant 0 : i32
    return %arg0, %c0_i32, %c0_i32_0, %c0_i32_1 : i32, i32, i32, i32
  }
  func.func @transform_2(%arg0: i32) -> (i32, i32, i32) {
    %c0_i32 = arith.constant 0 : i32
    %c0_i32_0 = arith.constant 0 : i32
    %c0_i32_1 = arith.constant 0 : i32
    return %arg0, %c0_i32, %c0_i32_0 : i32, i32, i32
  }
  func.func @transform_3(%arg0: i32) -> (i32, i32) {
    %c0_i32 = arith.constant 0 : i32
    %c0_i32_0 = arith.constant 0 : i32
    return %arg0, %c0_i32 : i32, i32
  }
  func.func @transform_4(%arg0: i32) -> (i32, i32) {
    %c0_i32 = arith.constant 0 : i32
    %c0_i32_0 = arith.constant 0 : i32
    %c0_i32_1 = arith.constant 0 : i32
    return %c0_i32, %c0_i32_0 : i32, i32
  }
  func.func @transform_5(%arg0: i32) -> (i32, i32) {
    %c0_i32 = arith.constant 0 : i32
    %c0_i32_0 = arith.constant 0 : i32
    %c0_i32_1 = arith.constant 0 : i32
    return %c0_i32, %c0_i32_0 : i32, i32
  }
  func.func @transform_6(%arg0: i32) -> (i32, i32) {
    %c0_i32 = arith.constant 0 : i32
    %c0_i32_0 = arith.constant 0 : i32
    %c0_i32_1 = arith.constant 0 : i32
    return %c0_i32, %c0_i32_0 : i32, i32
  }
  func.func @transform_7(%arg0: i32) -> (i32, i32) {
    %c0_i32 = arith.constant 0 : i32
    %c0_i32_0 = arith.constant 0 : i32
    %c0_i32_1 = arith.constant 0 : i32
    return %c0_i32, %c0_i32_0 : i32, i32
  }
  func.func @transform_8(%arg0: i32) -> (i32, i32) {
    %c0_i32 = arith.constant 0 : i32
    %c0_i32_0 = arith.constant 0 : i32
    %c0_i32_1 = arith.constant 0 : i32
    return %c0_i32, %c0_i32_0 : i32, i32
  }
  func.func @transform_9(%arg0: i32) -> (i32, i32) {
    %c0_i32 = arith.constant 0 : i32
    %c0_i32_0 = arith.constant 0 : i32
    %c0_i32_1 = arith.constant 0 : i32
    return %c0_i32, %c0_i32_0 : i32, i32
  }
  func.func @transform_10(%arg0: i32) -> (i32, i32) {
    %c0_i32 = arith.constant 0 : i32
    %c0_i32_0 = arith.constant 0 : i32
    %c0_i32_1 = arith.constant 0 : i32
    return %c0_i32, %c0_i32_0 : i32, i32
  }
  func.func @transform_11(%arg0: i32) -> (i32, i32) {
    %c0_i32 = arith.constant 0 : i32
    %c0_i32_0 = arith.constant 0 : i32
    %c0_i32_1 = arith.constant 0 : i32
    return %c0_i32, %c0_i32_0 : i32, i32
  }
  func.func @transform_12(%arg0: i32) -> (i32, i32) {
    %c0_i32 = arith.constant 0 : i32
    %c0_i32_0 = arith.constant 0 : i32
    %c0_i32_1 = arith.constant 0 : i32
    return %c0_i32, %c0_i32_0 : i32, i32
  }
  func.func @transform_13(%arg0: i32) -> (i32, i32) {
    %c0_i32 = arith.constant 0 : i32
    %c0_i32_0 = arith.constant 0 : i32
    %c0_i32_1 = arith.constant 0 : i32
    return %c0_i32, %c0_i32_0 : i32, i32
  }
  func.func @transform_14(%arg0: i32) -> (i32, i32, i32) {
    %c0_i32 = arith.constant 0 : i32
    %c0_i32_0 = arith.constant 0 : i32
    %c0_i32_1 = arith.constant 0 : i32
    return %arg0, %c0_i32, %c0_i32_0 : i32, i32, i32
  }
}

</mosaic_0001>

<llo_original>
// kernel: classifier_forward.1
$region0: #{classifier_forward.1}
  #allocation0 [shape = 'u32[]', space=smem, size = 0x4, offset = 0x4, fixed_abs, tag = 'smem constant byte address 0x4 - core index']
  #allocation1 [shape = 'u32[144,128]{1,0:T(1,128)}', space=vmem, size = 0x12000, scoped, tag = 'internal scratch']
  %s0 = inlined_call_operand.vmem [shape: s32[1024,1], index: 0, kind: input, shape index: {}]
  %s1 = inlined_call_operand.vmem [shape: bf16[4,2,128,128], index: 1, kind: input, shape index: {}]
  %s2 = inlined_call_operand.vmem [shape: bf16[4,16,256], index: 2, kind: input, shape index: {}]
  %s3 = inlined_call_operand.vmem [shape: s32[64,1], index: 3, kind: input, shape index: {}]
  %s4 = inlined_call_operand.vmem [shape: bf16[16,128], index: 4, kind: input, shape index: {}]
  %s5 = inlined_call_operand.vmem [shape: f32[1,128], index: 5, kind: input, shape index: {}]
  %s6 = inlined_call_operand.vmem [shape: bf16[128,128], index: 6, kind: input, shape index: {}]
  %s7 = inlined_call_operand.vmem [shape: f32[1,128], index: 7, kind: input, shape index: {}]
  %s8 = inlined_call_operand.vmem [shape: bf16[128,128], index: 8, kind: input, shape index: {}]
  %s9 = inlined_call_operand.vmem [shape: f32[1,128], index: 9, kind: input, shape index: {}]
  %s10 = inlined_call_operand.vmem [shape: bf16[128,128], index: 10, kind: input, shape index: {}]
  %s11 = inlined_call_operand.vmem [shape: f32[1,128], index: 11, kind: input, shape index: {}]
  %s12 = inlined_call_operand.vmem [shape: bf16[128,128], index: 12, kind: input, shape index: {}]
  %s13 = inlined_call_operand.vmem [shape: f32[1,128], index: 13, kind: input, shape index: {}]
  %s14 = inlined_call_operand.vmem [shape: f32[2,40,128], index: 14, kind: output, shape index: {}]
  %s15 = sld [smem:[#allocation0]]
  $region89: #{classifier_forward.1} parent=0
    _
  %s17 = ssub.s32 1, %s15
  %s18 = scalar_select 0, %s17, %s15
  loop: start=0, step=1, limit=4
  $region2: #{classifier_forward.1} parent=0 // loop_pre_header
    _
  $region3: #{classifier_forward.1} parent=0 // loop_header
    %s20 = sphi 0, %s24
    %p21 = scmp.ge.s32.totalorder %s20, 4
    %s30 = sphi 0, %s32
    %s33 = sphi 0, %s30
    %s34 = sphi 0, %s33
    %s50 = sphi 0, %s34
    %s56 = sphi 0, %s58
    %s59 = sphi 0, %s56
    %s60 = sphi 0, %s59
    %s76 = sphi 0, %s60
    %s82 = sphi 0, %s84
    %s85 = sphi 0, %s82
    %s86 = sphi 0, %s85
    %s102 = sphi 0, %s86
    %s108 = sphi 0, %s110
    %s111 = sphi 0, %s108
    %s112 = sphi 0, %s111
    %s128 = sphi 0, %s112
    %s132 = sphi 0, %s132
    %s134 = sphi 0, %s132
    %s135 = sphi 0, %s134
    %s149 = sphi 0, %s135
    %s153 = sphi 0, %s153
    %s155 = sphi 0, %s153
    %s156 = sphi 0, %s155
    %s170 = sphi 0, %s156
    %s174 = sphi 0, %s174
    %s176 = sphi 0, %s174
    %s177 = sphi 0, %s176
    %s191 = sphi 0, %s177
    %s195 = sphi 0, %s195
    %s197 = sphi 0, %s195
    %s198 = sphi 0, %s197
    %s212 = sphi 0, %s198
    %s216 = sphi 0, %s216
    %s218 = sphi 0, %s216
    %s219 = sphi 0, %s218
    %s233 = sphi 0, %s219
    %s237 = sphi 0, %s237
    %s239 = sphi 0, %s237
    %s240 = sphi 0, %s239
    %s254 = sphi 0, %s240
    %s258 = sphi 0, %s258
    %s260 = sphi 0, %s258
    %s261 = sphi 0, %s260
    %s275 = sphi 0, %s261
    %s279 = sphi 0, %s279
    %s281 = sphi 0, %s279
    %s282 = sphi 0, %s281
    %s296 = sphi 0, %s282
    %s300 = sphi 0, %s300
    %s302 = sphi 0, %s300
    %s303 = sphi 0, %s302
    %s317 = sphi 0, %s303
    %s321 = sphi 0, %s321
    %s323 = sphi 0, %s321
    %s324 = sphi 0, %s323
    %s338 = sphi 0, %s324
    %s344 = sphi 0, %s346
    %s347 = sphi 0, %s344
    %s348 = sphi 0, %s347
    %s364 = sphi 0, %s348
  $region4: #{classifier_forward.1} parent=0 // loop_header_branch
    %23 = sbr.rel (%p21) target = $region8
  $region5: #{classifier_forward.1} parent=0 // loop_body
    %s25 = ssub.s32 %s20, 1
    %s26 = ssub.s32 %s20, 2
    %s27 = sadd.s32 %s20, 1
    %s28 = ssub.s32 %s20, %s27
    %p29 = scmp.eq.s32.totalorder %s28, 0
    %s31 = sadd.s32 %s30, 1
    %s32 = scalar_select %p29, %s30, %s31
    %p35 = pneg %p29
    %p36 = scmp.eq.s32.totalorder %s20, 1
    %p37 = por %p35, %p36
    %p38 = scmp.ne.s32.totalorder %s30, %s33
    %p39 = scmp.eq.s32.totalorder %s20, 0
    %p40 = por %p38, %p39
    %p41 = scmp.ne.s32.totalorder %s30, %s33
    %p42 = scmp.eq.s32.totalorder %s25, 1
    %p43 = por %p41, %p42
    %p44 = scmp.ne.s32.totalorder %s33, %s34
    %p45 = scmp.eq.s32.totalorder %s25, 0
    %p46 = por %p44, %p45
    %p47 = scmp.ne.s32.totalorder %s33, %s34
    %p48 = scmp.eq.s32.totalorder %s26, 1
    %p49 = por %p47, %p48
    %p51 = scmp.ne.s32.totalorder %s34, %s50
    %p52 = scmp.eq.s32.totalorder %s26, 0
    %p53 = por %p51, %p52
    %s54 = ssub.s32 %s20, %s27
    %p55 = scmp.eq.s32.totalorder %s54, 0
    %s57 = sadd.s32 %s56, 1
    %s58 = scalar_select %p55, %s56, %s57
    %p61 = pneg %p55
    %p62 = scmp.eq.s32.totalorder %s20, 1
    %p63 = por %p61, %p62
    %p64 = scmp.ne.s32.totalorder %s56, %s59
    %p65 = scmp.eq.s32.totalorder %s20, 0
    %p66 = por %p64, %p65
    %p67 = scmp.ne.s32.totalorder %s56, %s59
    %p68 = scmp.eq.s32.totalorder %s25, 1
    %p69 = por %p67, %p68
    %p70 = scmp.ne.s32.totalorder %s59, %s60
    %p71 = scmp.eq.s32.totalorder %s25, 0
    %p72 = por %p70, %p71
    %p73 = scmp.ne.s32.totalorder %s59, %s60
    %p74 = scmp.eq.s32.totalorder %s26, 1
    %p75 = por %p73, %p74
    %p77 = scmp.ne.s32.totalorder %s60, %s76
    %p78 = scmp.eq.s32.totalorder %s26, 0
    %p79 = por %p77, %p78
    %s80 = ssub.s32 %s20, %s27
    %p81 = scmp.eq.s32.totalorder %s80, 0
    %s83 = sadd.s32 %s82, 1
    %s84 = scalar_select %p81, %s82, %s83
    %p87 = pneg %p81
    %p88 = scmp.eq.s32.totalorder %s20, 1
    %p89 = por %p87, %p88
    %p90 = scmp.ne.s32.totalorder %s82, %s85
    %p91 = scmp.eq.s32.totalorder %s20, 0
    %p92 = por %p90, %p91
    %p93 = scmp.ne.s32.totalorder %s82, %s85
    %p94 = scmp.eq.s32.totalorder %s25, 1
    %p95 = por %p93, %p94
    %p96 = scmp.ne.s32.totalorder %s85, %s86
    %p97 = scmp.eq.s32.totalorder %s25, 0
    %p98 = por %p96, %p97
    %p99 = scmp.ne.s32.totalorder %s85, %s86
    %p100 = scmp.eq.s32.totalorder %s26, 1
    %p101 = por %p99, %p100
    %p103 = scmp.ne.s32.totalorder %s86, %s102
    %p104 = scmp.eq.s32.totalorder %s26, 0
    %p105 = por %p103, %p104
    %s106 = ssub.s32 %s20, %s27
    %p107 = scmp.eq.s32.totalorder %s106, 0
    %s109 = sadd.s32 %s108, 1
    %s110 = scalar_select %p107, %s108, %s109
    %p113 = pneg %p107
    %p114 = scmp.eq.s32.totalorder %s20, 1
    %p115 = por %p113, %p114
    %p116 = scmp.ne.s32.totalorder %s108, %s111
    %p117 = scmp.eq.s32.totalorder %s20, 0
    %p118 = por %p116, %p117
    %p119 = scmp.ne.s32.totalorder %s108, %s111
    %p120 = scmp.eq.s32.totalorder %s25, 1
    %p121 = por %p119, %p120
    %p122 = scmp.ne.s32.totalorder %s111, %s112
    %p123 = scmp.eq.s32.totalorder %s25, 0
    %p124 = por %p122, %p123
    %p125 = scmp.ne.s32.totalorder %s111, %s112
    %p126 = scmp.eq.s32.totalorder %s26, 1
    %p127 = por %p125, %p126
    %p129 = scmp.ne.s32.totalorder %s112, %s128
    %p130 = scmp.eq.s32.totalorder %s26, 0
    %p131 = por %p129, %p130
    %s133 = sadd.s32 %s132, 1
    %p136 = scmp.eq.s32.totalorder %s20, 1
    %p137 = scmp.ne.s32.totalorder %s132, %s134
    %p138 = scmp.eq.s32.totalorder %s20, 0
    %p139 = por %p137, %p138
    %p140 = scmp.ne.s32.totalorder %s132, %s134
    %p141 = scmp.eq.s32.totalorder %s25, 1
    %p142 = por %p140, %p141
    %p143 = scmp.ne.s32.totalorder %s134, %s135
    %p144 = scmp.eq.s32.totalorder %s25, 0
    %p145 = por %p143, %p144
    %p146 = scmp.ne.s32.totalorder %s134, %s135
    %p147 = scmp.eq.s32.totalorder %s26, 1
    %p148 = por %p146, %p147
    %p150 = scmp.ne.s32.totalorder %s135, %s149
    %p151 = scmp.eq.s32.totalorder %s26, 0
    %p152 = por %p150, %p151
    %s154 = sadd.s32 %s153, 1
    %p157 = scmp.eq.s32.totalorder %s20, 1
    %p158 = scmp.ne.s32.totalorder %s153, %s155
    %p159 = scmp.eq.s32.totalorder %s20, 0
    %p160 = por %p158, %p159
    %p161 = scmp.ne.s32.totalorder %s153, %s155
    %p162 = scmp.eq.s32.totalorder %s25, 1
    %p163 = por %p161, %p162
    %p164 = scmp.ne.s32.totalorder %s155, %s156
    %p165 = scmp.eq.s32.totalorder %s25, 0
    %p166 = por %p164, %p165
    %p167 = scmp.ne.s32.totalorder %s155, %s156
    %p168 = scmp.eq.s32.totalorder %s26, 1
    %p169 = por %p167, %p168
    %p171 = scmp.ne.s32.totalorder %s156, %s170
    %p172 = scmp.eq.s32.totalorder %s26, 0
    %p173 = por %p171, %p172
    %s175 = sadd.s32 %s174, 1
    %p178 = scmp.eq.s32.totalorder %s20, 1
    %p179 = scmp.ne.s32.totalorder %s174, %s176
    %p180 = scmp.eq.s32.totalorder %s20, 0
    %p181 = por %p179, %p180
    %p182 = scmp.ne.s32.totalorder %s174, %s176
    %p183 = scmp.eq.s32.totalorder %s25, 1
    %p184 = por %p182, %p183
    %p185 = scmp.ne.s32.totalorder %s176, %s177
    %p186 = scmp.eq.s32.totalorder %s25, 0
    %p187 = por %p185, %p186
    %p188 = scmp.ne.s32.totalorder %s176, %s177
    %p189 = scmp.eq.s32.totalorder %s26, 1
    %p190 = por %p188, %p189
    %p192 = scmp.ne.s32.totalorder %s177, %s191
    %p193 = scmp.eq.s32.totalorder %s26, 0
    %p194 = por %p192, %p193
    %s196 = sadd.s32 %s195, 1
    %p199 = scmp.eq.s32.totalorder %s20, 1
    %p200 = scmp.ne.s32.totalorder %s195, %s197
    %p201 = scmp.eq.s32.totalorder %s20, 0
    %p202 = por %p200, %p201
    %p203 = scmp.ne.s32.totalorder %s195, %s197
    %p204 = scmp.eq.s32.totalorder %s25, 1
    %p205 = por %p203, %p204
    %p206 = scmp.ne.s32.totalorder %s197, %s198
    %p207 = scmp.eq.s32.totalorder %s25, 0
    %p208 = por %p206, %p207
    %p209 = scmp.ne.s32.totalorder %s197, %s198
    %p210 = scmp.eq.s32.totalorder %s26, 1
    %p211 = por %p209, %p210
    %p213 = scmp.ne.s32.totalorder %s198, %s212
    %p214 = scmp.eq.s32.totalorder %s26, 0
    %p215 = por %p213, %p214
    %s217 = sadd.s32 %s216, 1
    %p220 = scmp.eq.s32.totalorder %s20, 1
    %p221 = scmp.ne.s32.totalorder %s216, %s218
    %p222 = scmp.eq.s32.totalorder %s20, 0
    %p223 = por %p221, %p222
    %p224 = scmp.ne.s32.totalorder %s216, %s218
    %p225 = scmp.eq.s32.totalorder %s25, 1
    %p226 = por %p224, %p225
    %p227 = scmp.ne.s32.totalorder %s218, %s219
    %p228 = scmp.eq.s32.totalorder %s25, 0
    %p229 = por %p227, %p228
    %p230 = scmp.ne.s32.totalorder %s218, %s219
    %p231 = scmp.eq.s32.totalorder %s26, 1
    %p232 = por %p230, %p231
    %p234 = scmp.ne.s32.totalorder %s219, %s233
    %p235 = scmp.eq.s32.totalorder %s26, 0
    %p236 = por %p234, %p235
    %s238 = sadd.s32 %s237, 1
    %p241 = scmp.eq.s32.totalorder %s20, 1
    %p242 = scmp.ne.s32.totalorder %s237, %s239
    %p243 = scmp.eq.s32.totalorder %s20, 0
    %p244 = por %p242, %p243
    %p245 = scmp.ne.s32.totalorder %s237, %s239
    %p246 = scmp.eq.s32.totalorder %s25, 1
    %p247 = por %p245, %p246
    %p248 = scmp.ne.s32.totalorder %s239, %s240
    %p249 = scmp.eq.s32.totalorder %s25, 0
    %p250 = por %p248, %p249
    %p251 = scmp.ne.s32.totalorder %s239, %s240
    %p252 = scmp.eq.s32.totalorder %s26, 1
    %p253 = por %p251, %p252
    %p255 = scmp.ne.s32.totalorder %s240, %s254
    %p256 = scmp.eq.s32.totalorder %s26, 0
    %p257 = por %p255, %p256
    %s259 = sadd.s32 %s258, 1
    %p262 = scmp.eq.s32.totalorder %s20, 1
    %p263 = scmp.ne.s32.totalorder %s258, %s260
    %p264 = scmp.eq.s32.totalorder %s20, 0
    %p265 = por %p263, %p264
    %p266 = scmp.ne.s32.totalorder %s258, %s260
    %p267 = scmp.eq.s32.totalorder %s25, 1
    %p268 = por %p266, %p267
    %p269 = scmp.ne.s32.totalorder %s260, %s261
    %p270 = scmp.eq.s32.totalorder %s25, 0
    %p271 = por %p269, %p270
    %p272 = scmp.ne.s32.totalorder %s260, %s261
    %p273 = scmp.eq.s32.totalorder %s26, 1
    %p274 = por %p272, %p273
    %p276 = scmp.ne.s32.totalorder %s261, %s275
    %p277 = scmp.eq.s32.totalorder %s26, 0
    %p278 = por %p276, %p277
    %s280 = sadd.s32 %s279, 1
    %p283 = scmp.eq.s32.totalorder %s20, 1
    %p284 = scmp.ne.s32.totalorder %s279, %s281
    %p285 = scmp.eq.s32.totalorder %s20, 0
    %p286 = por %p284, %p285
    %p287 = scmp.ne.s32.totalorder %s279, %s281
    %p288 = scmp.eq.s32.totalorder %s25, 1
    %p289 = por %p287, %p288
    %p290 = scmp.ne.s32.totalorder %s281, %s282
    %p291 = scmp.eq.s32.totalorder %s25, 0
    %p292 = por %p290, %p291
    %p293 = scmp.ne.s32.totalorder %s281, %s282
    %p294 = scmp.eq.s32.totalorder %s26, 1
    %p295 = por %p293, %p294
    %p297 = scmp.ne.s32.totalorder %s282, %s296
    %p298 = scmp.eq.s32.totalorder %s26, 0
    %p299 = por %p297, %p298
    %s301 = sadd.s32 %s300, 1
    %p304 = scmp.eq.s32.totalorder %s20, 1
    %p305 = scmp.ne.s32.totalorder %s300, %s302
    %p306 = scmp.eq.s32.totalorder %s20, 0
    %p307 = por %p305, %p306
    %p308 = scmp.ne.s32.totalorder %s300, %s302
    %p309 = scmp.eq.s32.totalorder %s25, 1
    %p310 = por %p308, %p309
    %p311 = scmp.ne.s32.totalorder %s302, %s303
    %p312 = scmp.eq.s32.totalorder %s25, 0
    %p313 = por %p311, %p312
    %p314 = scmp.ne.s32.totalorder %s302, %s303
    %p315 = scmp.eq.s32.totalorder %s26, 1
    %p316 = por %p314, %p315
    %p318 = scmp.ne.s32.totalorder %s303, %s317
    %p319 = scmp.eq.s32.totalorder %s26, 0
    %p320 = por %p318, %p319
    %s322 = sadd.s32 %s321, 1
    %p325 = scmp.eq.s32.totalorder %s20, 1
    %p326 = scmp.ne.s32.totalorder %s321, %s323
    %p327 = scmp.eq.s32.totalorder %s20, 0
    %p328 = por %p326, %p327
    %p329 = scmp.ne.s32.totalorder %s321, %s323
    %p330 = scmp.eq.s32.totalorder %s25, 1
    %p331 = por %p329, %p330
    %p332 = scmp.ne.s32.totalorder %s323, %s324
    %p333 = scmp.eq.s32.totalorder %s25, 0
    %p334 = por %p332, %p333
    %p335 = scmp.ne.s32.totalorder %s323, %s324
    %p336 = scmp.eq.s32.totalorder %s26, 1
    %p337 = por %p335, %p336
    %p339 = scmp.ne.s32.totalorder %s324, %s338
    %p340 = scmp.eq.s32.totalorder %s26, 0
    %p341 = por %p339, %p340
    %s342 = ssub.s32 %s20, %s27
    %p343 = scmp.eq.s32.totalorder %s342, 0
    %s345 = sadd.s32 %s344, 1
    %s346 = scalar_select %p343, %s344, %s345
    %p349 = pneg %p343
    %p350 = scmp.eq.s32.totalorder %s20, 1
    %p351 = por %p349, %p350
    %p352 = scmp.ne.s32.totalorder %s344, %s347
    %p353 = scmp.eq.s32.totalorder %s20, 0
    %p354 = por %p352, %p353
    %p355 = scmp.ne.s32.totalorder %s344, %s347
    %p356 = scmp.eq.s32.totalorder %s25, 1
    %p357 = por %p355, %p356
    %p358 = scmp.ne.s32.totalorder %s347, %s348
    %p359 = scmp.eq.s32.totalorder %s25, 0
    %p360 = por %p358, %p359
    %p361 = scmp.ne.s32.totalorder %s347, %s348
    %p362 = scmp.eq.s32.totalorder %s26, 1
    %p363 = por %p361, %p362
    %p365 = scmp.ne.s32.totalorder %s348, %s364
    %p366 = scmp.eq.s32.totalorder %s26, 0
    %p367 = por %p365, %p366
    %p368 = scmp.le.s32.totalorder 1, %s20
    %p369 = scmp.lt.s32.totalorder %s20, 3
    %p370 = pnand %p368, %p369
    %p371 = pneg %p370
    // Predicated region
    $region9: #{classifier_forward.1} parent=5 // pred_check
      _
    $region10: #{classifier_forward.1} parent=5 // pred_check_branch
      %373 = sbr.rel (%p370) target = $region12
    $region11: #{classifier_forward.1} parent=5 // pred_region
      %s374 = ssub.s32 %s20, 1
      // Predicated region
      $region13: #{classifier_forward.1} parent=11 // pred_check
        %p375 = pneg %p145
      $region14: #{classifier_forward.1} parent=11 // pred_check_branch
        %377 = sbr.rel (%p375) target = $region16
      $region15: #{classifier_forward.1} parent=11 // pred_region
        _
      $region16: #{classifier_forward.1} parent=11 // pred_fallthru
        _
      // Predicated region
      $region17: #{classifier_forward.1} parent=11 // pred_check
        %p378 = pneg %p166
      $region18: #{classifier_forward.1} parent=11 // pred_check_branch
        %380 = sbr.rel (%p378) target = $region20
      $region19: #{classifier_forward.1} parent=11 // pred_region
        _
      $region20: #{classifier_forward.1} parent=11 // pred_fallthru
        _
      // Predicated region
      $region21: #{classifier_forward.1} parent=11 // pred_check
        %p381 = pneg %p187
      $region22: #{classifier_forward.1} parent=11 // pred_check_branch
        %383 = sbr.rel (%p381) target = $region24
      $region23: #{classifier_forward.1} parent=11 // pred_region
        _
      $region24: #{classifier_forward.1} parent=11 // pred_fallthru
        _
      // Predicated region
      $region25: #{classifier_forward.1} parent=11 // pred_check
        %p384 = pneg %p208
      $region26: #{classifier_forward.1} parent=11 // pred_check_branch
        %386 = sbr.rel (%p384) target = $region28
      $region27: #{classifier_forward.1} parent=11 // pred_region
        _
      $region28: #{classifier_forward.1} parent=11 // pred_fallthru
        _
      // Predicated region
      $region29: #{classifier_forward.1} parent=11 // pred_check
        %p387 = pneg %p229
      $region30: #{classifier_forward.1} parent=11 // pred_check_branch
        %389 = sbr.rel (%p387) target = $region32
      $region31: #{classifier_forward.1} parent=11 // pred_region
        _
      $region32: #{classifier_forward.1} parent=11 // pred_fallthru
        _
      // Predicated region
      $region33: #{classifier_forward.1} parent=11 // pred_check
        %p390 = pneg %p250
      $region34: #{classifier_forward.1} parent=11 // pred_check_branch
        %392 = sbr.rel (%p390) target = $region36
      $region35: #{classifier_forward.1} parent=11 // pred_region
        _
      $region36: #{classifier_forward.1} parent=11 // pred_fallthru
        _
      // Predicated region
      $region37: #{classifier_forward.1} parent=11 // pred_check
        %p393 = pneg %p271
      $region38: #{classifier_forward.1} parent=11 // pred_check_branch
        %395 = sbr.rel (%p393) target = $region40
      $region39: #{classifier_forward.1} parent=11 // pred_region
        _
      $region40: #{classifier_forward.1} parent=11 // pred_fallthru
        _
      // Predicated region
      $region41: #{classifier_forward.1} parent=11 // pred_check
        %p396 = pneg %p292
      $region42: #{classifier_forward.1} parent=11 // pred_check_branch
        %398 = sbr.rel (%p396) target = $region44
      $region43: #{classifier_forward.1} parent=11 // pred_region
        _
      $region44: #{classifier_forward.1} parent=11 // pred_fallthru
        _
      // Predicated region
      $region45: #{classifier_forward.1} parent=11 // pred_check
        %p399 = pneg %p313
      $region46: #{classifier_forward.1} parent=11 // pred_check_branch
        %401 = sbr.rel (%p399) target = $region48
      $region47: #{classifier_forward.1} parent=11 // pred_region
        _
      $region48: #{classifier_forward.1} parent=11 // pred_fallthru
        _
      // Predicated region
      $region49: #{classifier_forward.1} parent=11 // pred_check
        %p402 = pneg %p334
      $region50: #{classifier_forward.1} parent=11 // pred_check_branch
        %404 = sbr.rel (%p402) target = $region52
      $region51: #{classifier_forward.1} parent=11 // pred_region
        _
      $region52: #{classifier_forward.1} parent=11 // pred_fallthru
        _
    $region12: #{classifier_forward.1} parent=5 // pred_fallthru
      _
    %p405 = scmp.lt.s32.totalorder %s20, 2
    // Predicated region
    $region53: #{classifier_forward.1} parent=5 // pred_check
      %p406 = pneg %p405
    $region54: #{classifier_forward.1} parent=5 // pred_check_branch
      %408 = sbr.rel (%p406) target = $region56
    $region55: #{classifier_forward.1} parent=5 // pred_region
      // Predicated region
      $region57: #{classifier_forward.1} parent=55 // pred_check
        %p409 = pneg %p40
      $region58: #{classifier_forward.1} parent=55 // pred_check_branch
        %411 = sbr.rel (%p409) target = $region60
      $region59: #{classifier_forward.1} parent=55 // pred_region
        %s412 = smul.u32 64, %s20
        %p413 = scmp.lt.s32.totalorder %s412, 127
        %s414 = scalar_select %p413, %s412, 127
        %s415 = smul.addr %s414, 8
        %s416 = scalar_lea.vmem %s0, %s415
        %s417 = smul.u32 64, %s20
      $region60: #{classifier_forward.1} parent=55 // pred_fallthru
        _
      // Predicated region
      $region61: #{classifier_forward.1} parent=55 // pred_check
        %p418 = pneg %p66
      $region62: #{classifier_forward.1} parent=55 // pred_check_branch
        %420 = sbr.rel (%p418) target = $region64
      $region63: #{classifier_forward.1} parent=55 // pred_region
        %s421 = smul.u32 2, %s20
        %p422 = scmp.lt.s32.totalorder %s421, 3
        %s423 = scalar_select %p422, %s421, 3
        %s424 = smul.addr %s423, 32
        %s425 = smul.addr %s424, 4
        %s426 = scalar_lea.vmem %s1, %s425
        %s427 = smul.u32 2, %s20
      $region64: #{classifier_forward.1} parent=55 // pred_fallthru
        _
      // Predicated region
      $region65: #{classifier_forward.1} parent=55 // pred_check
        %p428 = pneg %p92
      $region66: #{classifier_forward.1} parent=55 // pred_check_branch
        %430 = sbr.rel (%p428) target = $region68
      $region67: #{classifier_forward.1} parent=55 // pred_region
        %s431 = smul.u32 2, %s20
        %p432 = scmp.lt.s32.totalorder %s431, 3
        %s433 = scalar_select %p432, %s431, 3
        %s434 = smul.addr %s433, 4
        %s435 = smul.addr %s434, 4
        %s436 = scalar_lea.vmem %s2, %s435
        %s437 = smul.u32 2, %s20
      $region68: #{classifier_forward.1} parent=55 // pred_fallthru
        _
      // Predicated region
      $region69: #{classifier_forward.1} parent=55 // pred_check
        %p438 = pneg %p118
      $region70: #{classifier_forward.1} parent=55 // pred_check_branch
        %440 = sbr.rel (%p438) target = $region72
      $region71: #{classifier_forward.1} parent=55 // pred_region
        %s441 = smul.u32 4, %s20
        %p442 = scmp.lt.s32.totalorder %s441, 7
        %s443 = scalar_select %p442, %s441, 7
        %s444 = smul.addr %s443, 8
        %s445 = scalar_lea.vmem %s3, %s444
        %s446 = smul.u32 4, %s20
      $region72: #{classifier_forward.1} parent=55 // pred_fallthru
        _
    $region56: #{classifier_forward.1} parent=5 // pred_fallthru
      _
    %p447 = scmp.le.s32.totalorder 1, %s20
    %p448 = scmp.lt.s32.totalorder %s20, 3
    %p449 = pnand %p447, %p448
    %p450 = pneg %p449
    // Predicated region
    $region73: #{classifier_forward.1} parent=5 // pred_check
      _
    $region74: #{classifier_forward.1} parent=5 // pred_check_branch
      %452 = sbr.rel (%p449) target = $region76
    $region75: #{classifier_forward.1} parent=5 // pred_region
      %s453 = ssub.s32 %s20, 1
      %s454 = smul.u32 64, %s25
      %p455 = scmp.lt.s32.totalorder %s454, 127
      %s456 = scalar_select %p455, %s454, 127
      %s457 = smul.addr %s456, 8
      %s458 = scalar_lea.vmem %s0, %s457
      %p459 = pneg %p46
      %p460 = pneg %p43
      %s461 = smul.u32 2, %s25
      %p462 = scmp.lt.s32.totalorder %s461, 3
      %s463 = scalar_select %p462, %s461, 3
      %s464 = smul.addr %s463, 32
      %s465 = smul.addr %s464, 4
      %s466 = scalar_lea.vmem %s1, %s465
      %p467 = pneg %p72
      %p468 = pneg %p69
      %s469 = smul.u32 2, %s25
      %p470 = scmp.lt.s32.totalorder %s469, 3
      %s471 = scalar_select %p470, %s469, 3
      %s472 = smul.addr %s471, 4
      %s473 = smul.addr %s472, 4
      %s474 = scalar_lea.vmem %s2, %s473
      %p475 = pneg %p98
      %p476 = pneg %p95
      %s477 = smul.u32 4, %s25
      %p478 = scmp.lt.s32.totalorder %s477, 7
      %s479 = scalar_select %p478, %s477, 7
      %s480 = smul.addr %s479, 8
      %s481 = scalar_lea.vmem %s3, %s480
      %p482 = pneg %p124
      %p483 = pneg %p121
      %p484 = pneg %p145
      %p485 = pneg %p142
      %p486 = pneg %p166
      %p487 = pneg %p163
      %p488 = pneg %p187
      %p489 = pneg %p184
      %p490 = pneg %p208
      %p491 = pneg %p205
      %p492 = pneg %p229
      %p493 = pneg %p226
      %p494 = pneg %p250
      %p495 = pneg %p247
      %p496 = pneg %p271
      %p497 = pneg %p268
      %p498 = pneg %p292
      %p499 = pneg %p289
      %p500 = pneg %p313
      %p501 = pneg %p310
      %p502 = pneg %p334
      %p503 = pneg %p331
      %p504 = pneg %p360
      %p505 = pneg %p357
      %p506 = scmp.lt.s32.totalorder %s25, 1
      %s507 = scalar_select %p506, %s25, 1
      %s508 = smul.addr %s507, 5
      %s509 = smul.addr %s508, 8
      %s510 = scalar_lea.vmem %s14, %s509
      %s511 = smul.u32 64, %s25
      %p512 = scmp.lt.s32.totalorder %s511, 127
      %s513 = scalar_select %p512, %s511, 127
      %s514 = smul.addr %s513, 8
      %s515 = scalar_lea.vmem %s0, %s514
      %s516 = smul.u32 64, %s25
      %s517 = smul.u32 2, %s25
      %p518 = scmp.lt.s32.totalorder %s517, 3
      %s519 = scalar_select %p518, %s517, 3
      %s520 = smul.addr %s519, 32
      %s521 = smul.addr %s520, 4
      %s522 = scalar_lea.vmem %s1, %s521
      %s523 = smul.u32 2, %s25
      %s524 = smul.u32 2, %s25
      %p525 = scmp.lt.s32.totalorder %s524, 3
      %s526 = scalar_select %p525, %s524, 3
      %s527 = smul.addr %s526, 4
      %s528 = smul.addr %s527, 4
      %s529 = scalar_lea.vmem %s2, %s528
      %s530 = smul.u32 2, %s25
      %s531 = smul.u32 4, %s25
      %p532 = scmp.lt.s32.totalorder %s531, 7
      %s533 = scalar_select %p532, %s531, 7
      %s534 = smul.addr %s533, 8
      %s535 = scalar_lea.vmem %s3, %s534
      %s536 = smul.u32 4, %s25
      %p537 = scmp.lt.s32.totalorder %s25, 1
      %s538 = scalar_select %p537, %s25, 1
      %s539 = smul.addr %s538, 5
      %s540 = smul.addr %s539, 8
      %s541 = scalar_lea.vmem %s14, %s540
      %v543 = vld [vmem:[%s515] sm:$0xff]
      %v544 = vld [vmem:[%s515 + $0x8] sm:$0xff]
      %v545 = vld [vmem:[%s515 + $0x10] sm:$0xff]
      %v546 = vld [vmem:[%s515 + $0x18] sm:$0xff]
      %v547 = vld [vmem:[%s515 + $0x20] sm:$0xff]
      %v548 = vld [vmem:[%s515 + $0x28] sm:$0xff]
      %v549 = vld [vmem:[%s515 + $0x30] sm:$0xff]
      %v550 = vld [vmem:[%s515 + $0x38] sm:$0xff]
      %v551 = vld [vmem:[%s515 + $0x40] sm:$0xff]
      %v552 = vld [vmem:[%s515 + $0x48] sm:$0xff]
      %v553 = vld [vmem:[%s515 + $0x50] sm:$0xff]
      %v554 = vld [vmem:[%s515 + $0x58] sm:$0xff]
      %v555 = vld [vmem:[%s515 + $0x60] sm:$0xff]
      %v556 = vld [vmem:[%s515 + $0x68] sm:$0xff]
      %v557 = vld [vmem:[%s515 + $0x70] sm:$0xff]
      %v558 = vld [vmem:[%s515 + $0x78] sm:$0xff]
      %v559 = vld [vmem:[%s515 + $0x80] sm:$0xff]
      %v560 = vld [vmem:[%s515 + $0x88] sm:$0xff]
      %v561 = vld [vmem:[%s515 + $0x90] sm:$0xff]
      %v562 = vld [vmem:[%s515 + $0x98] sm:$0xff]
      %v563 = vld [vmem:[%s515 + $0xa0] sm:$0xff]
      %v564 = vld [vmem:[%s515 + $0xa8] sm:$0xff]
      %v565 = vld [vmem:[%s515 + $0xb0] sm:$0xff]
      %v566 = vld [vmem:[%s515 + $0xb8] sm:$0xff]
      %v567 = vld [vmem:[%s515 + $0xc0] sm:$0xff]
      %v568 = vld [vmem:[%s515 + $0xc8] sm:$0xff]
      %v569 = vld [vmem:[%s515 + $0xd0] sm:$0xff]
      %v570 = vld [vmem:[%s515 + $0xd8] sm:$0xff]
      %v571 = vld [vmem:[%s515 + $0xe0] sm:$0xff]
      %v572 = vld [vmem:[%s515 + $0xe8] sm:$0xff]
      %v573 = vld [vmem:[%s515 + $0xf0] sm:$0xff]
      %v574 = vld [vmem:[%s515 + $0xf8] sm:$0xff]
      %v575 = vld [vmem:[%s515 + $0x100] sm:$0xff]
      %v576 = vld [vmem:[%s515 + $0x108] sm:$0xff]
      %v577 = vld [vmem:[%s515 + $0x110] sm:$0xff]
      %v578 = vld [vmem:[%s515 + $0x118] sm:$0xff]
      %v579 = vld [vmem:[%s515 + $0x120] sm:$0xff]
      %v580 = vld [vmem:[%s515 + $0x128] sm:$0xff]
      %v581 = vld [vmem:[%s515 + $0x130] sm:$0xff]
      %v582 = vld [vmem:[%s515 + $0x138] sm:$0xff]
      %v583 = vld [vmem:[%s515 + $0x140] sm:$0xff]
      %v584 = vld [vmem:[%s515 + $0x148] sm:$0xff]
      %v585 = vld [vmem:[%s515 + $0x150] sm:$0xff]
      %v586 = vld [vmem:[%s515 + $0x158] sm:$0xff]
      %v587 = vld [vmem:[%s515 + $0x160] sm:$0xff]
      %v588 = vld [vmem:[%s515 + $0x168] sm:$0xff]
      %v589 = vld [vmem:[%s515 + $0x170] sm:$0xff]
      %v590 = vld [vmem:[%s515 + $0x178] sm:$0xff]
      %v591 = vld [vmem:[%s515 + $0x180] sm:$0xff]
      %v592 = vld [vmem:[%s515 + $0x188] sm:$0xff]
      %v593 = vld [vmem:[%s515 + $0x190] sm:$0xff]
      %v594 = vld [vmem:[%s515 + $0x198] sm:$0xff]
      %v595 = vld [vmem:[%s515 + $0x1a0] sm:$0xff]
      %v596 = vld [vmem:[%s515 + $0x1a8] sm:$0xff]
      %v597 = vld [vmem:[%s515 + $0x1b0] sm:$0xff]
      %v598 = vld [vmem:[%s515 + $0x1b8] sm:$0xff]
      %v599 = vld [vmem:[%s515 + $0x1c0] sm:$0xff]
      %v600 = vld [vmem:[%s515 + $0x1c8] sm:$0xff]
      %v601 = vld [vmem:[%s515 + $0x1d0] sm:$0xff]
      %v602 = vld [vmem:[%s515 + $0x1d8] sm:$0xff]
      %v603 = vld [vmem:[%s515 + $0x1e0] sm:$0xff]
      %v604 = vld [vmem:[%s515 + $0x1e8] sm:$0xff]
      %v605 = vld [vmem:[%s515 + $0x1f0] sm:$0xff]
      %v606 = vld [vmem:[%s515 + $0x1f8] sm:$0xff]
      %v607 = vlaneseq
      %v608 = vand.u32 %v607, 127
      %609 = vset.pattern.permute.xlu0 0
      %610 = vperm.xlu0 %609, %v543
      %v611 = vpop.permute.xlu0 %610
      %612 = vset.pattern.permute.xlu0 0
      %613 = vperm.xlu0 %612, %v544
      %v614 = vpop.permute.xlu0 %613
      %615 = vset.pattern.permute.xlu0 0
      %616 = vperm.xlu0 %615, %v545
      %v617 = vpop.permute.xlu0 %616
      %618 = vset.pattern.permute.xlu0 0
      %619 = vperm.xlu0 %618, %v546
      %v620 = vpop.permute.xlu0 %619
      %621 = vset.pattern.permute.xlu0 0
      %622 = vperm.xlu0 %621, %v547
      %v623 = vpop.permute.xlu0 %622
      %624 = vset.pattern.permute.xlu0 0
      %625 = vperm.xlu0 %624, %v548
      %v626 = vpop.permute.xlu0 %625
      %627 = vset.pattern.permute.xlu0 0
      %628 = vperm.xlu0 %627, %v549
      %v629 = vpop.permute.xlu0 %628
      %630 = vset.pattern.permute.xlu0 0
      %631 = vperm.xlu0 %630, %v550
      %v632 = vpop.permute.xlu0 %631
      %633 = vset.pattern.permute.xlu0 0
      %634 = vperm.xlu0 %633, %v551
      %v635 = vpop.permute.xlu0 %634
      %636 = vset.pattern.permute.xlu0 0
      %637 = vperm.xlu0 %636, %v552
      %v638 = vpop.permute.xlu0 %637
      %639 = vset.pattern.permute.xlu0 0
      %640 = vperm.xlu0 %639, %v553
      %v641 = vpop.permute.xlu0 %640
      %642 = vset.pattern.permute.xlu0 0
      %643 = vperm.xlu0 %642, %v554
      %v644 = vpop.permute.xlu0 %643
      %645 = vset.pattern.permute.xlu0 0
      %646 = vperm.xlu0 %645, %v555
      %v647 = vpop.permute.xlu0 %646
      %648 = vset.pattern.permute.xlu0 0
      %649 = vperm.xlu0 %648, %v556
      %v650 = vpop.permute.xlu0 %649
      %651 = vset.pattern.permute.xlu0 0
      %652 = vperm.xlu0 %651, %v557
      %v653 = vpop.permute.xlu0 %652
      %654 = vset.pattern.permute.xlu0 0
      %655 = vperm.xlu0 %654, %v558
      %v656 = vpop.permute.xlu0 %655
      %657 = vset.pattern.permute.xlu0 0
      %658 = vperm.xlu0 %657, %v559
      %v659 = vpop.permute.xlu0 %658
      %660 = vset.pattern.permute.xlu0 0
      %661 = vperm.xlu0 %660, %v560
      %v662 = vpop.permute.xlu0 %661
      %663 = vset.pattern.permute.xlu0 0
      %664 = vperm.xlu0 %663, %v561
      %v665 = vpop.permute.xlu0 %664
      %666 = vset.pattern.permute.xlu0 0
      %667 = vperm.xlu0 %666, %v562
      %v668 = vpop.permute.xlu0 %667
      %669 = vset.pattern.permute.xlu0 0
      %670 = vperm.xlu0 %669, %v563
      %v671 = vpop.permute.xlu0 %670
      %672 = vset.pattern.permute.xlu0 0
      %673 = vperm.xlu0 %672, %v564
      %v674 = vpop.permute.xlu0 %673
      %675 = vset.pattern.permute.xlu0 0
      %676 = vperm.xlu0 %675, %v565
      %v677 = vpop.permute.xlu0 %676
      %678 = vset.pattern.permute.xlu0 0
      %679 = vperm.xlu0 %678, %v566
      %v680 = vpop.permute.xlu0 %679
      %681 = vset.pattern.permute.xlu0 0
      %682 = vperm.xlu0 %681, %v567
      %v683 = vpop.permute.xlu0 %682
      %684 = vset.pattern.permute.xlu0 0
      %685 = vperm.xlu0 %684, %v568
      %v686 = vpop.permute.xlu0 %685
      %687 = vset.pattern.permute.xlu0 0
      %688 = vperm.xlu0 %687, %v569
      %v689 = vpop.permute.xlu0 %688
      %690 = vset.pattern.permute.xlu0 0
      %691 = vperm.xlu0 %690, %v570
      %v692 = vpop.permute.xlu0 %691
      %693 = vset.pattern.permute.xlu0 0
      %694 = vperm.xlu0 %693, %v571
      %v695 = vpop.permute.xlu0 %694
      %696 = vset.pattern.permute.xlu0 0
      %697 = vperm.xlu0 %696, %v572
      %v698 = vpop.permute.xlu0 %697
      %699 = vset.pattern.permute.xlu0 0
      %700 = vperm.xlu0 %699, %v573
      %v701 = vpop.permute.xlu0 %700
      %702 = vset.pattern.permute.xlu0 0
      %703 = vperm.xlu0 %702, %v574
      %v704 = vpop.permute.xlu0 %703
      %705 = vset.pattern.permute.xlu0 0
      %706 = vperm.xlu0 %705, %v575
      %v707 = vpop.permute.xlu0 %706
      %708 = vset.pattern.permute.xlu0 0
      %709 = vperm.xlu0 %708, %v576
      %v710 = vpop.permute.xlu0 %709
      %711 = vset.pattern.permute.xlu0 0
      %712 = vperm.xlu0 %711, %v577
      %v713 = vpop.permute.xlu0 %712
      %714 = vset.pattern.permute.xlu0 0
      %715 = vperm.xlu0 %714, %v578
      %v716 = vpop.permute.xlu0 %715
      %717 = vset.pattern.permute.xlu0 0
      %718 = vperm.xlu0 %717, %v579
      %v719 = vpop.permute.xlu0 %718
      %720 = vset.pattern.permute.xlu0 0
      %721 = vperm.xlu0 %720, %v580
      %v722 = vpop.permute.xlu0 %721
      %723 = vset.pattern.permute.xlu0 0
      %724 = vperm.xlu0 %723, %v581
      %v725 = vpop.permute.xlu0 %724
      %726 = vset.pattern.permute.xlu0 0
      %727 = vperm.xlu0 %726, %v582
      %v728 = vpop.permute.xlu0 %727
      %729 = vset.pattern.permute.xlu0 0
      %730 = vperm.xlu0 %729, %v583
      %v731 = vpop.permute.xlu0 %730
      %732 = vset.pattern.permute.xlu0 0
      %733 = vperm.xlu0 %732, %v584
      %v734 = vpop.permute.xlu0 %733
      %735 = vset.pattern.permute.xlu0 0
      %736 = vperm.xlu0 %735, %v585
      %v737 = vpop.permute.xlu0 %736
      %738 = vset.pattern.permute.xlu0 0
      %739 = vperm.xlu0 %738, %v586
      %v740 = vpop.permute.xlu0 %739
      %741 = vset.pattern.permute.xlu0 0
      %742 = vperm.xlu0 %741, %v587
      %v743 = vpop.permute.xlu0 %742
      %744 = vset.pattern.permute.xlu0 0
      %745 = vperm.xlu0 %744, %v588
      %v746 = vpop.permute.xlu0 %745
      %747 = vset.pattern.permute.xlu0 0
      %748 = vperm.xlu0 %747, %v589
      %v749 = vpop.permute.xlu0 %748
      %750 = vset.pattern.permute.xlu0 0
      %751 = vperm.xlu0 %750, %v590
      %v752 = vpop.permute.xlu0 %751
      %753 = vset.pattern.permute.xlu0 0
      %754 = vperm.xlu0 %753, %v591
      %v755 = vpop.permute.xlu0 %754
      %756 = vset.pattern.permute.xlu0 0
      %757 = vperm.xlu0 %756, %v592
      %v758 = vpop.permute.xlu0 %757
      %759 = vset.pattern.permute.xlu0 0
      %760 = vperm.xlu0 %759, %v593
      %v761 = vpop.permute.xlu0 %760
      %762 = vset.pattern.permute.xlu0 0
      %763 = vperm.xlu0 %762, %v594
      %v764 = vpop.permute.xlu0 %763
      %765 = vset.pattern.permute.xlu0 0
      %766 = vperm.xlu0 %765, %v595
      %v767 = vpop.permute.xlu0 %766
      %768 = vset.pattern.permute.xlu0 0
      %769 = vperm.xlu0 %768, %v596
      %v770 = vpop.permute.xlu0 %769
      %771 = vset.pattern.permute.xlu0 0
      %772 = vperm.xlu0 %771, %v597
      %v773 = vpop.permute.xlu0 %772
      %774 = vset.pattern.permute.xlu0 0
      %775 = vperm.xlu0 %774, %v598
      %v776 = vpop.permute.xlu0 %775
      %777 = vset.pattern.permute.xlu0 0
      %778 = vperm.xlu0 %777, %v599
      %v779 = vpop.permute.xlu0 %778
      %780 = vset.pattern.permute.xlu0 0
      %781 = vperm.xlu0 %780, %v600
      %v782 = vpop.permute.xlu0 %781
      %783 = vset.pattern.permute.xlu0 0
      %784 = vperm.xlu0 %783, %v601
      %v785 = vpop.permute.xlu0 %784
      %786 = vset.pattern.permute.xlu0 0
      %787 = vperm.xlu0 %786, %v602
      %v788 = vpop.permute.xlu0 %787
      %789 = vset.pattern.permute.xlu0 0
      %790 = vperm.xlu0 %789, %v603
      %v791 = vpop.permute.xlu0 %790
      %792 = vset.pattern.permute.xlu0 0
      %793 = vperm.xlu0 %792, %v604
      %v794 = vpop.permute.xlu0 %793
      %795 = vset.pattern.permute.xlu0 0
      %796 = vperm.xlu0 %795, %v605
      %v797 = vpop.permute.xlu0 %796
      %798 = vset.pattern.permute.xlu0 0
      %799 = vperm.xlu0 %798, %v606
      %v800 = vpop.permute.xlu0 %799
      %vm801 = vcmp.eq.s32.totalorder %v608, %v611
      %vm802 = vcmp.eq.s32.totalorder %v608, %v614
      %vm803 = vcmp.eq.s32.totalorder %v608, %v617
      %vm804 = vcmp.eq.s32.totalorder %v608, %v620
      %vm805 = vcmp.eq.s32.totalorder %v608, %v623
      %vm806 = vcmp.eq.s32.totalorder %v608, %v626
      %vm807 = vcmp.eq.s32.totalorder %v608, %v629
      %vm808 = vcmp.eq.s32.totalorder %v608, %v632
      %vm809 = vcmp.eq.s32.totalorder %v608, %v635
      %vm810 = vcmp.eq.s32.totalorder %v608, %v638
      %vm811 = vcmp.eq.s32.totalorder %v608, %v641
      %vm812 = vcmp.eq.s32.totalorder %v608, %v644
      %vm813 = vcmp.eq.s32.totalorder %v608, %v647
      %vm814 = vcmp.eq.s32.totalorder %v608, %v650
      %vm815 = vcmp.eq.s32.totalorder %v608, %v653
      %vm816 = vcmp.eq.s32.totalorder %v608, %v656
      %vm817 = vcmp.eq.s32.totalorder %v608, %v659
      %vm818 = vcmp.eq.s32.totalorder %v608, %v662
      %vm819 = vcmp.eq.s32.totalorder %v608, %v665
      %vm820 = vcmp.eq.s32.totalorder %v608, %v668
      %vm821 = vcmp.eq.s32.totalorder %v608, %v671
      %vm822 = vcmp.eq.s32.totalorder %v608, %v674
      %vm823 = vcmp.eq.s32.totalorder %v608, %v677
      %vm824 = vcmp.eq.s32.totalorder %v608, %v680
      %vm825 = vcmp.eq.s32.totalorder %v608, %v683
      %vm826 = vcmp.eq.s32.totalorder %v608, %v686
      %vm827 = vcmp.eq.s32.totalorder %v608, %v689
      %vm828 = vcmp.eq.s32.totalorder %v608, %v692
      %vm829 = vcmp.eq.s32.totalorder %v608, %v695
      %vm830 = vcmp.eq.s32.totalorder %v608, %v698
      %vm831 = vcmp.eq.s32.totalorder %v608, %v701
      %vm832 = vcmp.eq.s32.totalorder %v608, %v704
      %vm833 = vcmp.eq.s32.totalorder %v608, %v707
      %vm834 = vcmp.eq.s32.totalorder %v608, %v710
      %vm835 = vcmp.eq.s32.totalorder %v608, %v713
      %vm836 = vcmp.eq.s32.totalorder %v608, %v716
      %vm837 = vcmp.eq.s32.totalorder %v608, %v719
      %vm838 = vcmp.eq.s32.totalorder %v608, %v722
      %vm839 = vcmp.eq.s32.totalorder %v608, %v725
      %vm840 = vcmp.eq.s32.totalorder %v608, %v728
      %vm841 = vcmp.eq.s32.totalorder %v608, %v731
      %vm842 = vcmp.eq.s32.totalorder %v608, %v734
      %vm843 = vcmp.eq.s32.totalorder %v608, %v737
      %vm844 = vcmp.eq.s32.totalorder %v608, %v740
      %vm845 = vcmp.eq.s32.totalorder %v608, %v743
      %vm846 = vcmp.eq.s32.totalorder %v608, %v746
      %vm847 = vcmp.eq.s32.totalorder %v608, %v749
      %vm848 = vcmp.eq.s32.totalorder %v608, %v752
      %vm849 = vcmp.eq.s32.totalorder %v608, %v755
      %vm850 = vcmp.eq.s32.totalorder %v608, %v758
      %vm851 = vcmp.eq.s32.totalorder %v608, %v761
      %vm852 = vcmp.eq.s32.totalorder %v608, %v764
      %vm853 = vcmp.eq.s32.totalorder %v608, %v767
      %vm854 = vcmp.eq.s32.totalorder %v608, %v770
      %vm855 = vcmp.eq.s32.totalorder %v608, %v773
      %vm856 = vcmp.eq.s32.totalorder %v608, %v776
      %vm857 = vcmp.eq.s32.totalorder %v608, %v779
      %vm858 = vcmp.eq.s32.totalorder %v608, %v782
      %vm859 = vcmp.eq.s32.totalorder %v608, %v785
      %vm860 = vcmp.eq.s32.totalorder %v608, %v788
      %vm861 = vcmp.eq.s32.totalorder %v608, %v791
      %vm862 = vcmp.eq.s32.totalorder %v608, %v794
      %vm863 = vcmp.eq.s32.totalorder %v608, %v797
      %vm864 = vcmp.eq.s32.totalorder %v608, %v800
      %v865 = vsel %vm801, 1, 0
      %v866 = vsel %vm802, 1, 0
      %v867 = vsel %vm803, 1, 0
      %v868 = vsel %vm804, 1, 0
      %v869 = vsel %vm805, 1, 0
      %v870 = vsel %vm806, 1, 0
      %v871 = vsel %vm807, 1, 0
      %v872 = vsel %vm808, 1, 0
      %v873 = vsel %vm809, 1, 0
      %v874 = vsel %vm810, 1, 0
      %v875 = vsel %vm811, 1, 0
      %v876 = vsel %vm812, 1, 0
      %v877 = vsel %vm813, 1, 0
      %v878 = vsel %vm814, 1, 0
      %v879 = vsel %vm815, 1, 0
      %v880 = vsel %vm816, 1, 0
      %v881 = vsel %vm817, 1, 0
      %v882 = vsel %vm818, 1, 0
      %v883 = vsel %vm819, 1, 0
      %v884 = vsel %vm820, 1, 0
      %v885 = vsel %vm821, 1, 0
      %v886 = vsel %vm822, 1, 0
      %v887 = vsel %vm823, 1, 0
      %v888 = vsel %vm824, 1, 0
      %v889 = vsel %vm825, 1, 0
      %v890 = vsel %vm826, 1, 0
      %v891 = vsel %vm827, 1, 0
      %v892 = vsel %vm828, 1, 0
      %v893 = vsel %vm829, 1, 0
      %v894 = vsel %vm830, 1, 0
      %v895 = vsel %vm831, 1, 0
      %v896 = vsel %vm832, 1, 0
      %v897 = vsel %vm833, 1, 0
      %v898 = vsel %vm834, 1, 0
      %v899 = vsel %vm835, 1, 0
      %v900 = vsel %vm836, 1, 0
      %v901 = vsel %vm837, 1, 0
      %v902 = vsel %vm838, 1, 0
      %v903 = vsel %vm839, 1, 0
      %v904 = vsel %vm840, 1, 0
      %v905 = vsel %vm841, 1, 0
      %v906 = vsel %vm842, 1, 0
      %v907 = vsel %vm843, 1, 0
      %v908 = vsel %vm844, 1, 0
      %v909 = vsel %vm845, 1, 0
      %v910 = vsel %vm846, 1, 0
      %v911 = vsel %vm847, 1, 0
      %v912 = vsel %vm848, 1, 0
      %v913 = vsel %vm849, 1, 0
      %v914 = vsel %vm850, 1, 0
      %v915 = vsel %vm851, 1, 0
      %v916 = vsel %vm852, 1, 0
      %v917 = vsel %vm853, 1, 0
      %v918 = vsel %vm854, 1, 0
      %v919 = vsel %vm855, 1, 0
      %v920 = vsel %vm856, 1, 0
      %v921 = vsel %vm857, 1, 0
      %v922 = vsel %vm858, 1, 0
      %v923 = vsel %vm859, 1, 0
      %v924 = vsel %vm860, 1, 0
      %v925 = vsel %vm861, 1, 0
      %v926 = vsel %vm862, 1, 0
      %v927 = vsel %vm863, 1, 0
      %v928 = vsel %vm864, 1, 0
      %v929 = vcvt.s32.f32 %v865
      %v930 = vcvt.s32.f32 %v866
      %v931 = vcvt.s32.f32 %v867
      %v932 = vcvt.s32.f32 %v868
      %v933 = vcvt.s32.f32 %v869
      %v934 = vcvt.s32.f32 %v870
      %v935 = vcvt.s32.f32 %v871
      %v936 = vcvt.s32.f32 %v872
      %v937 = vcvt.s32.f32 %v873
      %v938 = vcvt.s32.f32 %v874
      %v939 = vcvt.s32.f32 %v875
      %v940 = vcvt.s32.f32 %v876
      %v941 = vcvt.s32.f32 %v877
      %v942 = vcvt.s32.f32 %v878
      %v943 = vcvt.s32.f32 %v879
      %v944 = vcvt.s32.f32 %v880
      %v945 = vcvt.s32.f32 %v881
      %v946 = vcvt.s32.f32 %v882
      %v947 = vcvt.s32.f32 %v883
      %v948 = vcvt.s32.f32 %v884
      %v949 = vcvt.s32.f32 %v885
      %v950 = vcvt.s32.f32 %v886
      %v951 = vcvt.s32.f32 %v887
      %v952 = vcvt.s32.f32 %v888
      %v953 = vcvt.s32.f32 %v889
      %v954 = vcvt.s32.f32 %v890
      %v955 = vcvt.s32.f32 %v891
      %v956 = vcvt.s32.f32 %v892
      %v957 = vcvt.s32.f32 %v893
      %v958 = vcvt.s32.f32 %v894
      %v959 = vcvt.s32.f32 %v895
      %v960 = vcvt.s32.f32 %v896
      %v961 = vcvt.s32.f32 %v897
      %v962 = vcvt.s32.f32 %v898
      %v963 = vcvt.s32.f32 %v899
      %v964 = vcvt.s32.f32 %v900
      %v965 = vcvt.s32.f32 %v901
      %v966 = vcvt.s32.f32 %v902
      %v967 = vcvt.s32.f32 %v903
      %v968 = vcvt.s32.f32 %v904
      %v969 = vcvt.s32.f32 %v905
      %v970 = vcvt.s32.f32 %v906
      %v971 = vcvt.s32.f32 %v907
      %v972 = vcvt.s32.f32 %v908
      %v973 = vcvt.s32.f32 %v909
      %v974 = vcvt.s32.f32 %v910
      %v975 = vcvt.s32.f32 %v911
      %v976 = vcvt.s32.f32 %v912
      %v977 = vcvt.s32.f32 %v913
      %v978 = vcvt.s32.f32 %v914
      %v979 = vcvt.s32.f32 %v915
      %v980 = vcvt.s32.f32 %v916
      %v981 = vcvt.s32.f32 %v917
      %v982 = vcvt.s32.f32 %v918
      %v983 = vcvt.s32.f32 %v919
      %v984 = vcvt.s32.f32 %v920
      %v985 = vcvt.s32.f32 %v921
      %v986 = vcvt.s32.f32 %v922
      %v987 = vcvt.s32.f32 %v923
      %v988 = vcvt.s32.f32 %v924
      %v989 = vcvt.s32.f32 %v925
      %v990 = vcvt.s32.f32 %v926
      %v991 = vcvt.s32.f32 %v927
      %v992 = vcvt.s32.f32 %v928
      %v993 = vpack.c.bf16 %v930, %v929
      %v994 = vpack.c.bf16 %v932, %v931
      %v995 = vpack.c.bf16 %v934, %v933
      %v996 = vpack.c.bf16 %v936, %v935
      %v997 = vpack.c.bf16 %v938, %v937
      %v998 = vpack.c.bf16 %v940, %v939
      %v999 = vpack.c.bf16 %v942, %v941
      %v1000 = vpack.c.bf16 %v944, %v943
      %v1001 = vpack.c.bf16 %v946, %v945
      %v1002 = vpack.c.bf16 %v948, %v947
      %v1003 = vpack.c.bf16 %v950, %v949
      %v1004 = vpack.c.bf16 %v952, %v951
      %v1005 = vpack.c.bf16 %v954, %v953
      %v1006 = vpack.c.bf16 %v956, %v955
      %v1007 = vpack.c.bf16 %v958, %v957
      %v1008 = vpack.c.bf16 %v960, %v959
      %v1009 = vpack.c.bf16 %v962, %v961
      %v1010 = vpack.c.bf16 %v964, %v963
      %v1011 = vpack.c.bf16 %v966, %v965
      %v1012 = vpack.c.bf16 %v968, %v967
      %v1013 = vpack.c.bf16 %v970, %v969
      %v1014 = vpack.c.bf16 %v972, %v971
      %v1015 = vpack.c.bf16 %v974, %v973
      %v1016 = vpack.c.bf16 %v976, %v975
      %v1017 = vpack.c.bf16 %v978, %v977
      %v1018 = vpack.c.bf16 %v980, %v979
      %v1019 = vpack.c.bf16 %v982, %v981
      %v1020 = vpack.c.bf16 %v984, %v983
      %v1021 = vpack.c.bf16 %v986, %v985
      %v1022 = vpack.c.bf16 %v988, %v987
      %v1023 = vpack.c.bf16 %v990, %v989
      %v1024 = vpack.c.bf16 %v992, %v991
      %v1025 = vld [vmem:[%s4] sm:$0xf]
      %v1026 = vld [vmem:[%s4 + $0x4] sm:$0xf]
      %v1027 = vld [vmem:[%s5] sm:$0x1]
      %v1029 = vlaneseq
      %v1030 = vshrl.u32 %v1029, 7
      %v1031 = vsub.s32 0, %v1030
      %v1032 = vrot.slane %v1027, %v1031
      %v1036 = vunpack.c.l.b16 %v1025
      %v1037 = vunpack.c.l.b16 %v1026
      %v1038 = vpack.c.b16 %v1037, %v1036
      %vm1040 = vcmask 130048
      %v1042 = vsel %vm1040, %v993, 0
      %v1045 = vsel %vm1040, %v994, 0
      %v1048 = vsel %vm1040, %v995, 0
      %v1051 = vsel %vm1040, %v996, 0
      %v1054 = vsel %vm1040, %v997, 0
      %v1057 = vsel %vm1040, %v998, 0
      %v1060 = vsel %vm1040, %v999, 0
      %v1063 = vsel %vm1040, %v1000, 0
      %v1066 = vsel %vm1040, %v1001, 0
      %v1069 = vsel %vm1040, %v1002, 0
      %v1072 = vsel %vm1040, %v1003, 0
      %v1075 = vsel %vm1040, %v1004, 0
      %v1078 = vsel %vm1040, %v1005, 0
      %v1081 = vsel %vm1040, %v1006, 0
      %v1084 = vsel %vm1040, %v1007, 0
      %v1087 = vsel %vm1040, %v1008, 0
      %v1090 = vsel %vm1040, %v1009, 0
      %v1093 = vsel %vm1040, %v1010, 0
      %v1096 = vsel %vm1040, %v1011, 0
      %v1099 = vsel %vm1040, %v1012, 0
      %v1102 = vsel %vm1040, %v1013, 0
      %v1105 = vsel %vm1040, %v1014, 0
      %v1108 = vsel %vm1040, %v1015, 0
      %v1111 = vsel %vm1040, %v1016, 0
      %v1114 = vsel %vm1040, %v1017, 0
      %v1117 = vsel %vm1040, %v1018, 0
      %v1120 = vsel %vm1040, %v1019, 0
      %v1123 = vsel %vm1040, %v1020, 0
      %v1126 = vsel %vm1040, %v1021, 0
      %v1129 = vsel %vm1040, %v1022, 0
      %v1132 = vsel %vm1040, %v1023, 0
      %v1135 = vsel %vm1040, %v1024, 0
      %1137 = vmatprep.subr.bf16.mxu0 0
      %1138 = vmatpush1.bf16.msra.mxu0 0
      %1139 = vmatprep.subr.bf16.mxu0 0
      %1140 = vmatpush1.bf16.msra.mxu0 0
      %1141 = vmatprep.subr.bf16.mxu0 0
      %1142 = vmatpush1.bf16.msra.mxu0 0
      %1143 = vmatprep.subr.bf16.mxu0 0
      %1144 = vmatpush1.bf16.msra.mxu0 0
      %1145 = vmatprep.subr.bf16.mxu0 0
      %1146 = vmatpush1.bf16.msra.mxu0 0
      %1147 = vmatprep.subr.bf16.mxu0 0
      %1148 = vmatpush1.bf16.msra.mxu0 0
      %1149 = vmatprep.subr.bf16.mxu0 0
      %1150 = vmatpush1.bf16.msra.mxu0 0
      %1151 = vmatprep.subr.bf16.mxu0 0
      %1152 = vmatpush1.bf16.msra.mxu0 %v1038
      %1153 = vmatprep.subr.bf16.mxu0 0
      %1154 = vmatpush2.bf16.msra.mxu0 0
      %1155 = vmatprep.subr.bf16.mxu0 0
      %1156 = vmatpush2.bf16.msra.mxu0 0
      %1157 = vmatprep.subr.bf16.mxu0 0
      %1158 = vmatpush2.bf16.msra.mxu0 0
      %1159 = vmatprep.subr.bf16.mxu0 0
      %1160 = vmatpush2.bf16.msra.mxu0 0
      %1161 = vmatprep.subr.bf16.mxu0 0
      %1162 = vmatpush2.bf16.msra.mxu0 0
      %1163 = vmatprep.subr.bf16.mxu0 0
      %1164 = vmatpush2.bf16.msra.mxu0 0
      %1165 = vmatprep.subr.bf16.mxu0 0
      %1166 = vmatpush2.bf16.msra.mxu0 0
      %1167 = vmatprep.subr.bf16.mxu0 0
      %1168 = vmatpush2.bf16.msra.mxu0 0
      %1169 = vmatprep.mubr.bf16.mxu0 0
      %1170 = vmatmul.mubr.bf16.gmra.mxu0 %v1042
      %v1171 = vpop.f32.mrf.mxu0
      %v1172 = vadd.f32 %v1032, %v1171
      %v1173 = vpop.f32.mrf.mxu0
      %v1174 = vpop.f32.mrf.mxu0
      %v1175 = vadd.f32 %v1032, %v1174
      %v1176 = vpop.f32.mrf.mxu0
      %1177 = vmatprep.mubr.bf16.mxu0 0
      %1178 = vmatmul.mubr.bf16.gmra.mxu0 %v1045
      %v1179 = vpop.f32.mrf.mxu0
      %v1180 = vadd.f32 %v1032, %v1179
      %v1181 = vpop.f32.mrf.mxu0
      %v1182 = vpop.f32.mrf.mxu0
      %v1183 = vadd.f32 %v1032, %v1182
      %v1184 = vpop.f32.mrf.mxu0
      %1185 = vmatprep.mubr.bf16.mxu0 0
      %1186 = vmatmul.mubr.bf16.gmra.mxu0 %v1048
      %v1187 = vpop.f32.mrf.mxu0
      %v1188 = vadd.f32 %v1032, %v1187
      %v1189 = vpop.f32.mrf.mxu0
      %v1190 = vpop.f32.mrf.mxu0
      %v1191 = vadd.f32 %v1032, %v1190
      %v1192 = vpop.f32.mrf.mxu0
      %1193 = vmatprep.mubr.bf16.mxu0 0
      %1194 = vmatmul.mubr.bf16.gmra.mxu0 %v1051
      %v1195 = vpop.f32.mrf.mxu0
      %v1196 = vadd.f32 %v1032, %v1195
      %v1197 = vpop.f32.mrf.mxu0
      %v1198 = vpop.f32.mrf.mxu0
      %v1199 = vadd.f32 %v1032, %v1198
      %v1200 = vpop.f32.mrf.mxu0
      %1201 = vmatprep.mubr.bf16.mxu0 0
      %1202 = vmatmul.mubr.bf16.gmra.mxu0 %v1054
      %v1203 = vpop.f32.mrf.mxu0
      %v1204 = vadd.f32 %v1032, %v1203
      %v1205 = vpop.f32.mrf.mxu0
      %v1206 = vpop.f32.mrf.mxu0
      %v1207 = vadd.f32 %v1032, %v1206
      %v1208 = vpop.f32.mrf.mxu0
      %1209 = vmatprep.mubr.bf16.mxu0 0
      %1210 = vmatmul.mubr.bf16.gmra.mxu0 %v1057
      %v1211 = vpop.f32.mrf.mxu0
      %v1212 = vadd.f32 %v1032, %v1211
      %v1213 = vpop.f32.mrf.mxu0
      %v1214 = vpop.f32.mrf.mxu0
      %v1215 = vadd.f32 %v1032, %v1214
      %v1216 = vpop.f32.mrf.mxu0
      %1217 = vmatprep.mubr.bf16.mxu0 0
      %1218 = vmatmul.mubr.bf16.gmra.mxu0 %v1060
      %v1219 = vpop.f32.mrf.mxu0
      %v1220 = vadd.f32 %v1032, %v1219
      %v1221 = vpop.f32.mrf.mxu0
      %v1222 = vpop.f32.mrf.mxu0
      %v1223 = vadd.f32 %v1032, %v1222
      %v1224 = vpop.f32.mrf.mxu0
      %1225 = vmatprep.mubr.bf16.mxu0 0
      %1226 = vmatmul.mubr.bf16.gmra.mxu0 %v1063
      %v1227 = vpop.f32.mrf.mxu0
      %v1228 = vadd.f32 %v1032, %v1227
      %v1229 = vpop.f32.mrf.mxu0
      %v1230 = vpop.f32.mrf.mxu0
      %v1231 = vadd.f32 %v1032, %v1230
      %v1232 = vpop.f32.mrf.mxu0
      %1233 = vmatprep.mubr.bf16.mxu0 0
      %1234 = vmatmul.mubr.bf16.gmra.mxu0 %v1066
      %v1235 = vpop.f32.mrf.mxu0
      %v1236 = vadd.f32 %v1032, %v1235
      %v1237 = vpop.f32.mrf.mxu0
      %v1238 = vpop.f32.mrf.mxu0
      %v1239 = vadd.f32 %v1032, %v1238
      %v1240 = vpop.f32.mrf.mxu0
      %1241 = vmatprep.mubr.bf16.mxu0 0
      %1242 = vmatmul.mubr.bf16.gmra.mxu0 %v1069
      %v1243 = vpop.f32.mrf.mxu0
      %v1244 = vadd.f32 %v1032, %v1243
      %v1245 = vpop.f32.mrf.mxu0
      %v1246 = vpop.f32.mrf.mxu0
      %v1247 = vadd.f32 %v1032, %v1246
      %v1248 = vpop.f32.mrf.mxu0
      %1249 = vmatprep.mubr.bf16.mxu0 0
      %1250 = vmatmul.mubr.bf16.gmra.mxu0 %v1072
      %v1251 = vpop.f32.mrf.mxu0
      %v1252 = vadd.f32 %v1032, %v1251
      %v1253 = vpop.f32.mrf.mxu0
      %v1254 = vpop.f32.mrf.mxu0
      %v1255 = vadd.f32 %v1032, %v1254
      %v1256 = vpop.f32.mrf.mxu0
      %1257 = vmatprep.mubr.bf16.mxu0 0
      %1258 = vmatmul.mubr.bf16.gmra.mxu0 %v1075
      %v1259 = vpop.f32.mrf.mxu0
      %v1260 = vadd.f32 %v1032, %v1259
      %v1261 = vpop.f32.mrf.mxu0
      %v1262 = vpop.f32.mrf.mxu0
      %v1263 = vadd.f32 %v1032, %v1262
      %v1264 = vpop.f32.mrf.mxu0
      %1265 = vmatprep.mubr.bf16.mxu0 0
      %1266 = vmatmul.mubr.bf16.gmra.mxu0 %v1078
      %v1267 = vpop.f32.mrf.mxu0
      %v1268 = vadd.f32 %v1032, %v1267
      %v1269 = vpop.f32.mrf.mxu0
      %v1270 = vpop.f32.mrf.mxu0
      %v1271 = vadd.f32 %v1032, %v1270
      %v1272 = vpop.f32.mrf.mxu0
      %1273 = vmatprep.mubr.bf16.mxu0 0
      %1274 = vmatmul.mubr.bf16.gmra.mxu0 %v1081
      %v1275 = vpop.f32.mrf.mxu0
      %v1276 = vadd.f32 %v1032, %v1275
      %v1277 = vpop.f32.mrf.mxu0
      %v1278 = vpop.f32.mrf.mxu0
      %v1279 = vadd.f32 %v1032, %v1278
      %v1280 = vpop.f32.mrf.mxu0
      %1281 = vmatprep.mubr.bf16.mxu0 0
      %1282 = vmatmul.mubr.bf16.gmra.mxu0 %v1084
      %v1283 = vpop.f32.mrf.mxu0
      %v1284 = vadd.f32 %v1032, %v1283
      %v1285 = vpop.f32.mrf.mxu0
      %v1286 = vpop.f32.mrf.mxu0
      %v1287 = vadd.f32 %v1032, %v1286
      %v1288 = vpop.f32.mrf.mxu0
      %1289 = vmatprep.mubr.bf16.mxu0 0
      %1290 = vmatmul.mubr.bf16.gmra.mxu0 %v1087
      %v1291 = vpop.f32.mrf.mxu0
      %v1292 = vadd.f32 %v1032, %v1291
      %v1293 = vpop.f32.mrf.mxu0
      %v1294 = vpop.f32.mrf.mxu0
      %v1295 = vadd.f32 %v1032, %v1294
      %v1296 = vpop.f32.mrf.mxu0
      %1297 = vmatprep.mubr.bf16.mxu0 0
      %1298 = vmatmul.mubr.bf16.gmra.mxu0 %v1090
      %v1299 = vpop.f32.mrf.mxu0
      %v1300 = vadd.f32 %v1032, %v1299
      %v1301 = vpop.f32.mrf.mxu0
      %v1302 = vpop.f32.mrf.mxu0
      %v1303 = vadd.f32 %v1032, %v1302
      %v1304 = vpop.f32.mrf.mxu0
      %1305 = vmatprep.mubr.bf16.mxu0 0
      %1306 = vmatmul.mubr.bf16.gmra.mxu0 %v1093
      %v1307 = vpop.f32.mrf.mxu0
      %v1308 = vadd.f32 %v1032, %v1307
      %v1309 = vpop.f32.mrf.mxu0
      %v1310 = vpop.f32.mrf.mxu0
      %v1311 = vadd.f32 %v1032, %v1310
      %v1312 = vpop.f32.mrf.mxu0
      %1313 = vmatprep.mubr.bf16.mxu0 0
      %1314 = vmatmul.mubr.bf16.gmra.mxu0 %v1096
      %v1315 = vpop.f32.mrf.mxu0
      %v1316 = vadd.f32 %v1032, %v1315
      %v1317 = vpop.f32.mrf.mxu0
      %v1318 = vpop.f32.mrf.mxu0
      %v1319 = vadd.f32 %v1032, %v1318
      %v1320 = vpop.f32.mrf.mxu0
      %1321 = vmatprep.mubr.bf16.mxu0 0
      %1322 = vmatmul.mubr.bf16.gmra.mxu0 %v1099
      %v1323 = vpop.f32.mrf.mxu0
      %v1324 = vadd.f32 %v1032, %v1323
      %v1325 = vpop.f32.mrf.mxu0
      %v1326 = vpop.f32.mrf.mxu0
      %v1327 = vadd.f32 %v1032, %v1326
      %v1328 = vpop.f32.mrf.mxu0
      %1329 = vmatprep.mubr.bf16.mxu0 0
      %1330 = vmatmul.mubr.bf16.gmra.mxu0 %v1102
      %v1331 = vpop.f32.mrf.mxu0
      %v1332 = vadd.f32 %v1032, %v1331
      %v1333 = vpop.f32.mrf.mxu0
      %v1334 = vpop.f32.mrf.mxu0
      %v1335 = vadd.f32 %v1032, %v1334
      %v1336 = vpop.f32.mrf.mxu0
      %1337 = vmatprep.mubr.bf16.mxu0 0
      %1338 = vmatmul.mubr.bf16.gmra.mxu0 %v1105
      %v1339 = vpop.f32.mrf.mxu0
      %v1340 = vadd.f32 %v1032, %v1339
      %v1341 = vpop.f32.mrf.mxu0
      %v1342 = vpop.f32.mrf.mxu0
      %v1343 = vadd.f32 %v1032, %v1342
      %v1344 = vpop.f32.mrf.mxu0
      %1345 = vmatprep.mubr.bf16.mxu0 0
      %1346 = vmatmul.mubr.bf16.gmra.mxu0 %v1108
      %v1347 = vpop.f32.mrf.mxu0
      %v1348 = vadd.f32 %v1032, %v1347
      %v1349 = vpop.f32.mrf.mxu0
      %v1350 = vpop.f32.mrf.mxu0
      %v1351 = vadd.f32 %v1032, %v1350
      %v1352 = vpop.f32.mrf.mxu0
      %1353 = vmatprep.mubr.bf16.mxu0 0
      %1354 = vmatmul.mubr.bf16.gmra.mxu0 %v1111
      %v1355 = vpop.f32.mrf.mxu0
      %v1356 = vadd.f32 %v1032, %v1355
      %v1357 = vpop.f32.mrf.mxu0
      %v1358 = vpop.f32.mrf.mxu0
      %v1359 = vadd.f32 %v1032, %v1358
      %v1360 = vpop.f32.mrf.mxu0
      %1361 = vmatprep.mubr.bf16.mxu0 0
      %1362 = vmatmul.mubr.bf16.gmra.mxu0 %v1114
      %v1363 = vpop.f32.mrf.mxu0
      %v1364 = vadd.f32 %v1032, %v1363
      %v1365 = vpop.f32.mrf.mxu0
      %v1366 = vpop.f32.mrf.mxu0
      %v1367 = vadd.f32 %v1032, %v1366
      %v1368 = vpop.f32.mrf.mxu0
      %1369 = vmatprep.mubr.bf16.mxu0 0
      %1370 = vmatmul.mubr.bf16.gmra.mxu0 %v1117
      %v1371 = vpop.f32.mrf.mxu0
      %v1372 = vadd.f32 %v1032, %v1371
      %v1373 = vpop.f32.mrf.mxu0
      %v1374 = vpop.f32.mrf.mxu0
      %v1375 = vadd.f32 %v1032, %v1374
      %v1376 = vpop.f32.mrf.mxu0
      %1377 = vmatprep.mubr.bf16.mxu0 0
      %1378 = vmatmul.mubr.bf16.gmra.mxu0 %v1120
      %v1379 = vpop.f32.mrf.mxu0
      %v1380 = vadd.f32 %v1032, %v1379
      %v1381 = vpop.f32.mrf.mxu0
      %v1382 = vpop.f32.mrf.mxu0
      %v1383 = vadd.f32 %v1032, %v1382
      %v1384 = vpop.f32.mrf.mxu0
      %1385 = vmatprep.mubr.bf16.mxu0 0
      %1386 = vmatmul.mubr.bf16.gmra.mxu0 %v1123
      %v1387 = vpop.f32.mrf.mxu0
      %v1388 = vadd.f32 %v1032, %v1387
      %v1389 = vpop.f32.mrf.mxu0
      %v1390 = vpop.f32.mrf.mxu0
      %v1391 = vadd.f32 %v1032, %v1390
      %v1392 = vpop.f32.mrf.mxu0
      %1393 = vmatprep.mubr.bf16.mxu0 0
      %1394 = vmatmul.mubr.bf16.gmra.mxu0 %v1126
      %v1395 = vpop.f32.mrf.mxu0
      %v1396 = vadd.f32 %v1032, %v1395
      %v1397 = vpop.f32.mrf.mxu0
      %v1398 = vpop.f32.mrf.mxu0
      %v1399 = vadd.f32 %v1032, %v1398
      %v1400 = vpop.f32.mrf.mxu0
      %1401 = vmatprep.mubr.bf16.mxu0 0
      %1402 = vmatmul.mubr.bf16.gmra.mxu0 %v1129
      %v1403 = vpop.f32.mrf.mxu0
      %v1404 = vadd.f32 %v1032, %v1403
      %v1405 = vpop.f32.mrf.mxu0
      %v1406 = vpop.f32.mrf.mxu0
      %v1407 = vadd.f32 %v1032, %v1406
      %v1408 = vpop.f32.mrf.mxu0
      %1409 = vmatprep.mubr.bf16.mxu0 0
      %1410 = vmatmul.mubr.bf16.gmra.mxu0 %v1132
      %v1411 = vpop.f32.mrf.mxu0
      %v1412 = vadd.f32 %v1032, %v1411
      %v1413 = vpop.f32.mrf.mxu0
      %v1414 = vpop.f32.mrf.mxu0
      %v1415 = vadd.f32 %v1032, %v1414
      %v1416 = vpop.f32.mrf.mxu0
      %1417 = vmatprep.mubr.bf16.mxu0 0
      %1418 = vmatmul.mubr.bf16.gmra.mxu0 %v1135
      %v1419 = vpop.f32.mrf.mxu0
      %v1420 = vadd.f32 %v1032, %v1419
      %v1421 = vpop.f32.mrf.mxu0
      %v1422 = vpop.f32.mrf.mxu0
      %v1423 = vadd.f32 %v1032, %v1422
      %v1424 = vpop.f32.mrf.mxu0
      %1425 = vdwg.mxu0
      %v1426 = vmax.f32 %v1172, 0.0
      %v1427 = vmax.f32 %v1175, 0.0
      %v1428 = vmax.f32 %v1180, 0.0
      %v1429 = vmax.f32 %v1183, 0.0
      %v1430 = vmax.f32 %v1188, 0.0
      %v1431 = vmax.f32 %v1191, 0.0
      %v1432 = vmax.f32 %v1196, 0.0
      %v1433 = vmax.f32 %v1199, 0.0
      %v1434 = vmax.f32 %v1204, 0.0
      %v1435 = vmax.f32 %v1207, 0.0
      %v1436 = vmax.f32 %v1212, 0.0
      %v1437 = vmax.f32 %v1215, 0.0
      %v1438 = vmax.f32 %v1220, 0.0
      %v1439 = vmax.f32 %v1223, 0.0
      %v1440 = vmax.f32 %v1228, 0.0
      %v1441 = vmax.f32 %v1231, 0.0
      %v1442 = vmax.f32 %v1236, 0.0
      %v1443 = vmax.f32 %v1239, 0.0
      %v1444 = vmax.f32 %v1244, 0.0
      %v1445 = vmax.f32 %v1247, 0.0
      %v1446 = vmax.f32 %v1252, 0.0
      %v1447 = vmax.f32 %v1255, 0.0
      %v1448 = vmax.f32 %v1260, 0.0
      %v1449 = vmax.f32 %v1263, 0.0
      %v1450 = vmax.f32 %v1268, 0.0
      %v1451 = vmax.f32 %v1271, 0.0
      %v1452 = vmax.f32 %v1276, 0.0
      %v1453 = vmax.f32 %v1279, 0.0
      %v1454 = vmax.f32 %v1284, 0.0
      %v1455 = vmax.f32 %v1287, 0.0
      %v1456 = vmax.f32 %v1292, 0.0
      %v1457 = vmax.f32 %v1295, 0.0
      %v1458 = vmax.f32 %v1300, 0.0
      %v1459 = vmax.f32 %v1303, 0.0
      %v1460 = vmax.f32 %v1308, 0.0
      %v1461 = vmax.f32 %v1311, 0.0
      %v1462 = vmax.f32 %v1316, 0.0
      %v1463 = vmax.f32 %v1319, 0.0
      %v1464 = vmax.f32 %v1324, 0.0
      %v1465 = vmax.f32 %v1327, 0.0
      %v1466 = vmax.f32 %v1332, 0.0
      %v1467 = vmax.f32 %v1335, 0.0
      %v1468 = vmax.f32 %v1340, 0.0
      %v1469 = vmax.f32 %v1343, 0.0
      %v1470 = vmax.f32 %v1348, 0.0
      %v1471 = vmax.f32 %v1351, 0.0
      %v1472 = vmax.f32 %v1356, 0.0
      %v1473 = vmax.f32 %v1359, 0.0
      %v1474 = vmax.f32 %v1364, 0.0
      %v1475 = vmax.f32 %v1367, 0.0
      %v1476 = vmax.f32 %v1372, 0.0
      %v1477 = vmax.f32 %v1375, 0.0
      %v1478 = vmax.f32 %v1380, 0.0
      %v1479 = vmax.f32 %v1383, 0.0
      %v1480 = vmax.f32 %v1388, 0.0
      %v1481 = vmax.f32 %v1391, 0.0
      %v1482 = vmax.f32 %v1396, 0.0
      %v1483 = vmax.f32 %v1399, 0.0
      %v1484 = vmax.f32 %v1404, 0.0
      %v1485 = vmax.f32 %v1407, 0.0
      %v1486 = vmax.f32 %v1412, 0.0
      %v1487 = vmax.f32 %v1415, 0.0
      %v1488 = vmax.f32 %v1420, 0.0
      %v1489 = vmax.f32 %v1423, 0.0
      %v1490 = vld [vmem:[%s7] sm:$0x1]
      %v1492 = vlaneseq
      %v1493 = vshrl.u32 %v1492, 7
      %v1494 = vsub.s32 0, %v1493
      %v1495 = vrot.slane %v1490, %v1494
      %v1497 = vadd.f32 %v1172, %v1495
      %v1498 = vadd.f32 %v1175, %v1495
      %v1499 = vadd.f32 %v1180, %v1495
      %v1500 = vadd.f32 %v1183, %v1495
      %v1501 = vadd.f32 %v1188, %v1495
      %v1502 = vadd.f32 %v1191, %v1495
      %v1503 = vadd.f32 %v1196, %v1495
      %v1504 = vadd.f32 %v1199, %v1495
      %v1505 = vadd.f32 %v1204, %v1495
      %v1506 = vadd.f32 %v1207, %v1495
      %v1507 = vadd.f32 %v1212, %v1495
      %v1508 = vadd.f32 %v1215, %v1495
      %v1509 = vadd.f32 %v1220, %v1495
      %v1510 = vadd.f32 %v1223, %v1495
      %v1511 = vadd.f32 %v1228, %v1495
      %v1512 = vadd.f32 %v1231, %v1495
      %v1513 = vadd.f32 %v1236, %v1495
      %v1514 = vadd.f32 %v1239, %v1495
      %v1515 = vadd.f32 %v1244, %v1495
      %v1516 = vadd.f32 %v1247, %v1495
      %v1517 = vadd.f32 %v1252, %v1495
      %v1518 = vadd.f32 %v1255, %v1495
      %v1519 = vadd.f32 %v1260, %v1495
      %v1520 = vadd.f32 %v1263, %v1495
      %v1521 = vadd.f32 %v1268, %v1495
      %v1522 = vadd.f32 %v1271, %v1495
      %v1523 = vadd.f32 %v1276, %v1495
      %v1524 = vadd.f32 %v1279, %v1495
      %v1525 = vadd.f32 %v1284, %v1495
      %v1526 = vadd.f32 %v1287, %v1495
      %v1527 = vadd.f32 %v1292, %v1495
      %v1528 = vadd.f32 %v1295, %v1495
      %v1529 = vadd.f32 %v1300, %v1495
      %v1530 = vadd.f32 %v1303, %v1495
      %v1531 = vadd.f32 %v1308, %v1495
      %v1532 = vadd.f32 %v1311, %v1495
      %v1533 = vadd.f32 %v1316, %v1495
      %v1534 = vadd.f32 %v1319, %v1495
      %v1535 = vadd.f32 %v1324, %v1495
      %v1536 = vadd.f32 %v1327, %v1495
      %v1537 = vadd.f32 %v1332, %v1495
      %v1538 = vadd.f32 %v1335, %v1495
      %v1539 = vadd.f32 %v1340, %v1495
      %v1540 = vadd.f32 %v1343, %v1495
      %v1541 = vadd.f32 %v1348, %v1495
      %v1542 = vadd.f32 %v1351, %v1495
      %v1543 = vadd.f32 %v1356, %v1495
      %v1544 = vadd.f32 %v1359, %v1495
      %v1545 = vadd.f32 %v1364, %v1495
      %v1546 = vadd.f32 %v1367, %v1495
      %v1547 = vadd.f32 %v1372, %v1495
      %v1548 = vadd.f32 %v1375, %v1495
      %v1549 = vadd.f32 %v1380, %v1495
      %v1550 = vadd.f32 %v1383, %v1495
      %v1551 = vadd.f32 %v1388, %v1495
      %v1552 = vadd.f32 %v1391, %v1495
      %v1553 = vadd.f32 %v1396, %v1495
      %v1554 = vadd.f32 %v1399, %v1495
      %v1555 = vadd.f32 %v1404, %v1495
      %v1556 = vadd.f32 %v1407, %v1495
      %v1557 = vadd.f32 %v1412, %v1495
      %v1558 = vadd.f32 %v1415, %v1495
      %v1559 = vadd.f32 %v1420, %v1495
      %v1560 = vadd.f32 %v1423, %v1495
      %v1561 = vld [vmem:[%s6] sm:$0xf]
      %v1562 = vld [vmem:[%s6 + $0x4] sm:$0xf]
      %v1563 = vld [vmem:[%s6 + $0x8] sm:$0xf]
      %v1564 = vld [vmem:[%s6 + $0xc] sm:$0xf]
      %v1565 = vld [vmem:[%s6 + $0x10] sm:$0xf]
      %v1566 = vld [vmem:[%s6 + $0x14] sm:$0xf]
      %v1567 = vld [vmem:[%s6 + $0x18] sm:$0xf]
      %v1568 = vld [vmem:[%s6 + $0x1c] sm:$0xf]
      %v1569 = vld [vmem:[%s6 + $0x20] sm:$0xf]
      %v1570 = vld [vmem:[%s6 + $0x24] sm:$0xf]
      %v1571 = vld [vmem:[%s6 + $0x28] sm:$0xf]
      %v1572 = vld [vmem:[%s6 + $0x2c] sm:$0xf]
      %v1573 = vld [vmem:[%s6 + $0x30] sm:$0xf]
      %v1574 = vld [vmem:[%s6 + $0x34] sm:$0xf]
      %v1575 = vld [vmem:[%s6 + $0x38] sm:$0xf]
      %v1576 = vld [vmem:[%s6 + $0x3c] sm:$0xf]
      %v1577 = vpack.c.bf16 %v1427, %v1426
      %v1578 = vpack.c.bf16 %v1429, %v1428
      %v1579 = vpack.c.bf16 %v1431, %v1430
      %v1580 = vpack.c.bf16 %v1433, %v1432
      %v1581 = vpack.c.bf16 %v1435, %v1434
      %v1582 = vpack.c.bf16 %v1437, %v1436
      %v1583 = vpack.c.bf16 %v1439, %v1438
      %v1584 = vpack.c.bf16 %v1441, %v1440
      %v1585 = vpack.c.bf16 %v1443, %v1442
      %v1586 = vpack.c.bf16 %v1445, %v1444
      %v1587 = vpack.c.bf16 %v1447, %v1446
      %v1588 = vpack.c.bf16 %v1449, %v1448
      %v1589 = vpack.c.bf16 %v1451, %v1450
      %v1590 = vpack.c.bf16 %v1453, %v1452
      %v1591 = vpack.c.bf16 %v1455, %v1454
      %v1592 = vpack.c.bf16 %v1457, %v1456
      %v1593 = vpack.c.bf16 %v1459, %v1458
      %v1594 = vpack.c.bf16 %v1461, %v1460
      %v1595 = vpack.c.bf16 %v1463, %v1462
      %v1596 = vpack.c.bf16 %v1465, %v1464
      %v1597 = vpack.c.bf16 %v1467, %v1466
      %v1598 = vpack.c.bf16 %v1469, %v1468
      %v1599 = vpack.c.bf16 %v1471, %v1470
      %v1600 = vpack.c.bf16 %v1473, %v1472
      %v1601 = vpack.c.bf16 %v1475, %v1474
      %v1602 = vpack.c.bf16 %v1477, %v1476
      %v1603 = vpack.c.bf16 %v1479, %v1478
      %v1604 = vpack.c.bf16 %v1481, %v1480
      %v1605 = vpack.c.bf16 %v1483, %v1482
      %v1606 = vpack.c.bf16 %v1485, %v1484
      %v1607 = vpack.c.bf16 %v1487, %v1486
      %v1608 = vpack.c.bf16 %v1489, %v1488
      %v1609 = vld [vmem:[%s522] sm:$0xf]
      %v1610 = vld [vmem:[%s522 + $0x4] sm:$0xf]
      %v1611 = vld [vmem:[%s522 + $0x8] sm:$0xf]
      %v1612 = vld [vmem:[%s522 + $0xc] sm:$0xf]
      %v1613 = vld [vmem:[%s522 + $0x10] sm:$0xf]
      %v1614 = vld [vmem:[%s522 + $0x14] sm:$0xf]
      %v1615 = vld [vmem:[%s522 + $0x18] sm:$0xf]
      %v1616 = vld [vmem:[%s522 + $0x1c] sm:$0xf]
      %v1617 = vld [vmem:[%s522 + $0x20] sm:$0xf]
      %v1618 = vld [vmem:[%s522 + $0x24] sm:$0xf]
      %v1619 = vld [vmem:[%s522 + $0x28] sm:$0xf]
      %v1620 = vld [vmem:[%s522 + $0x2c] sm:$0xf]
      %v1621 = vld [vmem:[%s522 + $0x30] sm:$0xf]
      %v1622 = vld [vmem:[%s522 + $0x34] sm:$0xf]
      %v1623 = vld [vmem:[%s522 + $0x38] sm:$0xf]
      %v1624 = vld [vmem:[%s522 + $0x3c] sm:$0xf]
      %v1641 = vunpack.c.l.b16 %v1609
      %v1642 = vunpack.c.l.b16 %v1610
      %v1643 = vunpack.c.l.b16 %v1611
      %v1644 = vunpack.c.l.b16 %v1612
      %v1645 = vunpack.c.l.b16 %v1613
      %v1646 = vunpack.c.l.b16 %v1614
      %v1647 = vunpack.c.l.b16 %v1615
      %v1648 = vunpack.c.l.b16 %v1616
      %v1649 = vunpack.c.l.b16 %v1617
      %v1650 = vunpack.c.l.b16 %v1618
      %v1651 = vunpack.c.l.b16 %v1619
      %v1652 = vunpack.c.l.b16 %v1620
      %v1653 = vunpack.c.l.b16 %v1621
      %v1654 = vunpack.c.l.b16 %v1622
      %v1655 = vunpack.c.l.b16 %v1623
      %v1656 = vunpack.c.l.b16 %v1624
      %v1657 = vpack.c.b16 %v1642, %v1641
      %v1658 = vpack.c.b16 %v1644, %v1643
      %v1659 = vpack.c.b16 %v1646, %v1645
      %v1660 = vpack.c.b16 %v1648, %v1647
      %v1661 = vpack.c.b16 %v1650, %v1649
      %v1662 = vpack.c.b16 %v1652, %v1651
      %v1663 = vpack.c.b16 %v1654, %v1653
      %v1664 = vpack.c.b16 %v1656, %v1655
      %1673 = vmatprep.subr.bf16.mxu0 0
      %1674 = vmatpush1.bf16.msra.mxu0 %v1584
      %1675 = vmatprep.subr.bf16.mxu0 0
      %1676 = vmatpush1.bf16.msra.mxu0 %v1583
      %1677 = vmatprep.subr.bf16.mxu0 0
      %1678 = vmatpush1.bf16.msra.mxu0 %v1582
      %1679 = vmatprep.subr.bf16.mxu0 0
      %1680 = vmatpush1.bf16.msra.mxu0 %v1581
      %1681 = vmatprep.subr.bf16.mxu0 0
      %1682 = vmatpush1.bf16.msra.mxu0 %v1580
      %1683 = vmatprep.subr.bf16.mxu0 0
      %1684 = vmatpush1.bf16.msra.mxu0 %v1579
      %1685 = vmatprep.subr.bf16.mxu0 0
      %1686 = vmatpush1.bf16.msra.mxu0 %v1578
      %1687 = vmatprep.subr.bf16.mxu0 0
      %1688 = vmatpush1.bf16.msra.mxu0 %v1577
      %1689 = vmatprep.subr.bf16.mxu0 0
      %1690 = vmatpush2.bf16.msra.mxu0 0
      %1691 = vmatprep.subr.bf16.mxu0 0
      %1692 = vmatpush2.bf16.msra.mxu0 0
      %1693 = vmatprep.subr.bf16.mxu0 0
      %1694 = vmatpush2.bf16.msra.mxu0 0
      %1695 = vmatprep.subr.bf16.mxu0 0
      %1696 = vmatpush2.bf16.msra.mxu0 0
      %1697 = vmatprep.subr.bf16.mxu0 0
      %1698 = vmatpush2.bf16.msra.mxu0 0
      %1699 = vmatprep.subr.bf16.mxu0 0
      %1700 = vmatpush2.bf16.msra.mxu0 0
      %1701 = vmatprep.subr.bf16.mxu0 0
      %1702 = vmatpush2.bf16.msra.mxu0 0
      %1703 = vmatprep.subr.bf16.mxu0 0
      %1704 = vmatpush2.bf16.msra.mxu0 0
      %1705 = vmatprep.mubr.bf16.mxu0 0
      %1706 = vmatmul.mubr.bf16.gmra.mxu0 %v1657
      %v1707 = vpop.f32.mrf.mxu0
      %v1708 = vadd.f32 0.0, %v1707
      %v1709 = vpop.f32.mrf.mxu0
      %v1710 = vpop.f32.mrf.mxu0
      %v1711 = vadd.f32 0.0, %v1710
      %v1712 = vpop.f32.mrf.mxu0
      %1713 = vmatprep.mubr.bf16.mxu0 0
      %1714 = vmatmul.mubr.bf16.gmra.mxu0 %v1658
      %v1715 = vpop.f32.mrf.mxu0
      %v1716 = vadd.f32 0.0, %v1715
      %v1717 = vpop.f32.mrf.mxu0
      %v1718 = vpop.f32.mrf.mxu0
      %v1719 = vadd.f32 0.0, %v1718
      %v1720 = vpop.f32.mrf.mxu0
      %1721 = vmatprep.mubr.bf16.mxu0 0
      %1722 = vmatmul.mubr.bf16.gmra.mxu0 %v1659
      %v1723 = vpop.f32.mrf.mxu0
      %v1724 = vadd.f32 0.0, %v1723
      %v1725 = vpop.f32.mrf.mxu0
      %v1726 = vpop.f32.mrf.mxu0
      %v1727 = vadd.f32 0.0, %v1726
      %v1728 = vpop.f32.mrf.mxu0
      %1729 = vmatprep.mubr.bf16.mxu0 0
      %1730 = vmatmul.mubr.bf16.gmra.mxu0 %v1660
      %v1731 = vpop.f32.mrf.mxu0
      %v1732 = vadd.f32 0.0, %v1731
      %v1733 = vpop.f32.mrf.mxu0
      %v1734 = vpop.f32.mrf.mxu0
      %v1735 = vadd.f32 0.0, %v1734
      %v1736 = vpop.f32.mrf.mxu0
      %1737 = vmatprep.mubr.bf16.mxu0 0
      %1738 = vmatmul.mubr.bf16.gmra.mxu0 %v1661
      %v1739 = vpop.f32.mrf.mxu0
      %v1740 = vadd.f32 0.0, %v1739
      %v1741 = vpop.f32.mrf.mxu0
      %v1742 = vpop.f32.mrf.mxu0
      %v1743 = vadd.f32 0.0, %v1742
      %v1744 = vpop.f32.mrf.mxu0
      %1745 = vmatprep.mubr.bf16.mxu0 0
      %1746 = vmatmul.mubr.bf16.gmra.mxu0 %v1662
      %v1747 = vpop.f32.mrf.mxu0
      %v1748 = vadd.f32 0.0, %v1747
      %v1749 = vpop.f32.mrf.mxu0
      %v1750 = vpop.f32.mrf.mxu0
      %v1751 = vadd.f32 0.0, %v1750
      %v1752 = vpop.f32.mrf.mxu0
      %1753 = vmatprep.mubr.bf16.mxu0 0
      %1754 = vmatmul.mubr.bf16.gmra.mxu0 %v1663
      %v1755 = vpop.f32.mrf.mxu0
      %v1756 = vadd.f32 0.0, %v1755
      %v1757 = vpop.f32.mrf.mxu0
      %v1758 = vpop.f32.mrf.mxu0
      %v1759 = vadd.f32 0.0, %v1758
      %v1760 = vpop.f32.mrf.mxu0
      %1761 = vmatprep.mubr.bf16.mxu0 0
      %1762 = vmatmul.mubr.bf16.gmra.mxu0 %v1664
      %v1763 = vpop.f32.mrf.mxu0
      %v1764 = vadd.f32 0.0, %v1763
      %v1765 = vpop.f32.mrf.mxu0
      %v1766 = vpop.f32.mrf.mxu0
      %v1767 = vadd.f32 0.0, %v1766
      %v1768 = vpop.f32.mrf.mxu0
      %1769 = vdwg.mxu0
      %s1770 = scalar_lea.vmem %s522, 64
      %v1771 = vld [vmem:[%s1770] sm:$0xf]
      %v1772 = vld [vmem:[%s1770 + $0x4] sm:$0xf]
      %v1773 = vld [vmem:[%s1770 + $0x8] sm:$0xf]
      %v1774 = vld [vmem:[%s1770 + $0xc] sm:$0xf]
      %v1775 = vld [vmem:[%s1770 + $0x10] sm:$0xf]
      %v1776 = vld [vmem:[%s1770 + $0x14] sm:$0xf]
      %v1777 = vld [vmem:[%s1770 + $0x18] sm:$0xf]
      %v1778 = vld [vmem:[%s1770 + $0x1c] sm:$0xf]
      %v1779 = vld [vmem:[%s1770 + $0x20] sm:$0xf]
      %v1780 = vld [vmem:[%s1770 + $0x24] sm:$0xf]
      %v1781 = vld [vmem:[%s1770 + $0x28] sm:$0xf]
      %v1782 = vld [vmem:[%s1770 + $0x2c] sm:$0xf]
      %v1783 = vld [vmem:[%s1770 + $0x30] sm:$0xf]
      %v1784 = vld [vmem:[%s1770 + $0x34] sm:$0xf]
      %v1785 = vld [vmem:[%s1770 + $0x38] sm:$0xf]
      %v1786 = vld [vmem:[%s1770 + $0x3c] sm:$0xf]
      %v1803 = vunpack.c.l.b16 %v1771
      %v1804 = vunpack.c.l.b16 %v1772
      %v1805 = vunpack.c.l.b16 %v1773
      %v1806 = vunpack.c.l.b16 %v1774
      %v1807 = vunpack.c.l.b16 %v1775
      %v1808 = vunpack.c.l.b16 %v1776
      %v1809 = vunpack.c.l.b16 %v1777
      %v1810 = vunpack.c.l.b16 %v1778
      %v1811 = vunpack.c.l.b16 %v1779
      %v1812 = vunpack.c.l.b16 %v1780
      %v1813 = vunpack.c.l.b16 %v1781
      %v1814 = vunpack.c.l.b16 %v1782
      %v1815 = vunpack.c.l.b16 %v1783
      %v1816 = vunpack.c.l.b16 %v1784
      %v1817 = vunpack.c.l.b16 %v1785
      %v1818 = vunpack.c.l.b16 %v1786
      %v1819 = vpack.c.b16 %v1804, %v1803
      %v1820 = vpack.c.b16 %v1806, %v1805
      %v1821 = vpack.c.b16 %v1808, %v1807
      %v1822 = vpack.c.b16 %v1810, %v1809
      %v1823 = vpack.c.b16 %v1812, %v1811
      %v1824 = vpack.c.b16 %v1814, %v1813
      %v1825 = vpack.c.b16 %v1816, %v1815
      %v1826 = vpack.c.b16 %v1818, %v1817
      %1835 = vmatprep.subr.bf16.mxu0 0
      %1836 = vmatpush1.bf16.msra.mxu0 %v1592
      %1837 = vmatprep.subr.bf16.mxu0 0
      %1838 = vmatpush1.bf16.msra.mxu0 %v1591
      %1839 = vmatprep.subr.bf16.mxu0 0
      %1840 = vmatpush1.bf16.msra.mxu0 %v1590
      %1841 = vmatprep.subr.bf16.mxu0 0
      %1842 = vmatpush1.bf16.msra.mxu0 %v1589
      %1843 = vmatprep.subr.bf16.mxu0 0
      %1844 = vmatpush1.bf16.msra.mxu0 %v1588
      %1845 = vmatprep.subr.bf16.mxu0 0
      %1846 = vmatpush1.bf16.msra.mxu0 %v1587
      %1847 = vmatprep.subr.bf16.mxu0 0
      %1848 = vmatpush1.bf16.msra.mxu0 %v1586
      %1849 = vmatprep.subr.bf16.mxu0 0
      %1850 = vmatpush1.bf16.msra.mxu0 %v1585
      %1851 = vmatprep.subr.bf16.mxu0 0
      %1852 = vmatpush2.bf16.msra.mxu0 0
      %1853 = vmatprep.subr.bf16.mxu0 0
      %1854 = vmatpush2.bf16.msra.mxu0 0
      %1855 = vmatprep.subr.bf16.mxu0 0
      %1856 = vmatpush2.bf16.msra.mxu0 0
      %1857 = vmatprep.subr.bf16.mxu0 0
      %1858 = vmatpush2.bf16.msra.mxu0 0
      %1859 = vmatprep.subr.bf16.mxu0 0
      %1860 = vmatpush2.bf16.msra.mxu0 0
      %1861 = vmatprep.subr.bf16.mxu0 0
      %1862 = vmatpush2.bf16.msra.mxu0 0
      %1863 = vmatprep.subr.bf16.mxu0 0
      %1864 = vmatpush2.bf16.msra.mxu0 0
      %1865 = vmatprep.subr.bf16.mxu0 0
      %1866 = vmatpush2.bf16.msra.mxu0 0
      %1867 = vmatprep.mubr.bf16.mxu0 0
      %1868 = vmatmul.mubr.bf16.gmra.mxu0 %v1819
      %v1869 = vpop.f32.mrf.mxu0
      %v1870 = vadd.f32 0.0, %v1869
      %v1871 = vpop.f32.mrf.mxu0
      %v1872 = vpop.f32.mrf.mxu0
      %v1873 = vadd.f32 0.0, %v1872
      %v1874 = vpop.f32.mrf.mxu0
      %1875 = vmatprep.mubr.bf16.mxu0 0
      %1876 = vmatmul.mubr.bf16.gmra.mxu0 %v1820
      %v1877 = vpop.f32.mrf.mxu0
      %v1878 = vadd.f32 0.0, %v1877
      %v1879 = vpop.f32.mrf.mxu0
      %v1880 = vpop.f32.mrf.mxu0
      %v1881 = vadd.f32 0.0, %v1880
      %v1882 = vpop.f32.mrf.mxu0
      %1883 = vmatprep.mubr.bf16.mxu0 0
      %1884 = vmatmul.mubr.bf16.gmra.mxu0 %v1821
      %v1885 = vpop.f32.mrf.mxu0
      %v1886 = vadd.f32 0.0, %v1885
      %v1887 = vpop.f32.mrf.mxu0
      %v1888 = vpop.f32.mrf.mxu0
      %v1889 = vadd.f32 0.0, %v1888
      %v1890 = vpop.f32.mrf.mxu0
      %1891 = vmatprep.mubr.bf16.mxu0 0
      %1892 = vmatmul.mubr.bf16.gmra.mxu0 %v1822
      %v1893 = vpop.f32.mrf.mxu0
      %v1894 = vadd.f32 0.0, %v1893
      %v1895 = vpop.f32.mrf.mxu0
      %v1896 = vpop.f32.mrf.mxu0
      %v1897 = vadd.f32 0.0, %v1896
      %v1898 = vpop.f32.mrf.mxu0
      %1899 = vmatprep.mubr.bf16.mxu0 0
      %1900 = vmatmul.mubr.bf16.gmra.mxu0 %v1823
      %v1901 = vpop.f32.mrf.mxu0
      %v1902 = vadd.f32 0.0, %v1901
      %v1903 = vpop.f32.mrf.mxu0
      %v1904 = vpop.f32.mrf.mxu0
      %v1905 = vadd.f32 0.0, %v1904
      %v1906 = vpop.f32.mrf.mxu0
      %1907 = vmatprep.mubr.bf16.mxu0 0
      %1908 = vmatmul.mubr.bf16.gmra.mxu0 %v1824
      %v1909 = vpop.f32.mrf.mxu0
      %v1910 = vadd.f32 0.0, %v1909
      %v1911 = vpop.f32.mrf.mxu0
      %v1912 = vpop.f32.mrf.mxu0
      %v1913 = vadd.f32 0.0, %v1912
      %v1914 = vpop.f32.mrf.mxu0
      %1915 = vmatprep.mubr.bf16.mxu0 0
      %1916 = vmatmul.mubr.bf16.gmra.mxu0 %v1825
      %v1917 = vpop.f32.mrf.mxu0
      %v1918 = vadd.f32 0.0, %v1917
      %v1919 = vpop.f32.mrf.mxu0
      %v1920 = vpop.f32.mrf.mxu0
      %v1921 = vadd.f32 0.0, %v1920
      %v1922 = vpop.f32.mrf.mxu0
      %1923 = vmatprep.mubr.bf16.mxu0 0
      %1924 = vmatmul.mubr.bf16.gmra.mxu0 %v1826
      %v1925 = vpop.f32.mrf.mxu0
      %v1926 = vadd.f32 0.0, %v1925
      %v1927 = vpop.f32.mrf.mxu0
      %v1928 = vpop.f32.mrf.mxu0
      %v1929 = vadd.f32 0.0, %v1928
      %v1930 = vpop.f32.mrf.mxu0
      %1931 = vdwg.mxu0
      %s1932 = scalar_lea.vmem %s522, 128
      %v1933 = vld [vmem:[%s1932] sm:$0xf]
      %v1934 = vld [vmem:[%s1932 + $0x4] sm:$0xf]
      %v1935 = vld [vmem:[%s1932 + $0x8] sm:$0xf]
      %v1936 = vld [vmem:[%s1932 + $0xc] sm:$0xf]
      %v1937 = vld [vmem:[%s1932 + $0x10] sm:$0xf]
      %v1938 = vld [vmem:[%s1932 + $0x14] sm:$0xf]
      %v1939 = vld [vmem:[%s1932 + $0x18] sm:$0xf]
      %v1940 = vld [vmem:[%s1932 + $0x1c] sm:$0xf]
      %v1941 = vld [vmem:[%s1932 + $0x20] sm:$0xf]
      %v1942 = vld [vmem:[%s1932 + $0x24] sm:$0xf]
      %v1943 = vld [vmem:[%s1932 + $0x28] sm:$0xf]
      %v1944 = vld [vmem:[%s1932 + $0x2c] sm:$0xf]
      %v1945 = vld [vmem:[%s1932 + $0x30] sm:$0xf]
      %v1946 = vld [vmem:[%s1932 + $0x34] sm:$0xf]
      %v1947 = vld [vmem:[%s1932 + $0x38] sm:$0xf]
      %v1948 = vld [vmem:[%s1932 + $0x3c] sm:$0xf]
      %v1965 = vunpack.c.l.b16 %v1933
      %v1966 = vunpack.c.l.b16 %v1934
      %v1967 = vunpack.c.l.b16 %v1935
      %v1968 = vunpack.c.l.b16 %v1936
      %v1969 = vunpack.c.l.b16 %v1937
      %v1970 = vunpack.c.l.b16 %v1938
      %v1971 = vunpack.c.l.b16 %v1939
      %v1972 = vunpack.c.l.b16 %v1940
      %v1973 = vunpack.c.l.b16 %v1941
      %v1974 = vunpack.c.l.b16 %v1942
      %v1975 = vunpack.c.l.b16 %v1943
      %v1976 = vunpack.c.l.b16 %v1944
      %v1977 = vunpack.c.l.b16 %v1945
      %v1978 = vunpack.c.l.b16 %v1946
      %v1979 = vunpack.c.l.b16 %v1947
      %v1980 = vunpack.c.l.b16 %v1948
      %v1981 = vpack.c.b16 %v1966, %v1965
      %v1982 = vpack.c.b16 %v1968, %v1967
      %v1983 = vpack.c.b16 %v1970, %v1969
      %v1984 = vpack.c.b16 %v1972, %v1971
      %v1985 = vpack.c.b16 %v1974, %v1973
      %v1986 = vpack.c.b16 %v1976, %v1975
      %v1987 = vpack.c.b16 %v1978, %v1977
      %v1988 = vpack.c.b16 %v1980, %v1979
      %1997 = vmatprep.subr.bf16.mxu0 0
      %1998 = vmatpush1.bf16.msra.mxu0 %v1600
      %1999 = vmatprep.subr.bf16.mxu0 0
      %2000 = vmatpush1.bf16.msra.mxu0 %v1599
      %2001 = vmatprep.subr.bf16.mxu0 0
      %2002 = vmatpush1.bf16.msra.mxu0 %v1598
      %2003 = vmatprep.subr.bf16.mxu0 0
      %2004 = vmatpush1.bf16.msra.mxu0 %v1597
      %2005 = vmatprep.subr.bf16.mxu0 0
      %2006 = vmatpush1.bf16.msra.mxu0 %v1596
      %2007 = vmatprep.subr.bf16.mxu0 0
      %2008 = vmatpush1.bf16.msra.mxu0 %v1595
      %2009 = vmatprep.subr.bf16.mxu0 0
      %2010 = vmatpush1.bf16.msra.mxu0 %v1594
      %2011 = vmatprep.subr.bf16.mxu0 0
      %2012 = vmatpush1.bf16.msra.mxu0 %v1593
      %2013 = vmatprep.subr.bf16.mxu0 0
      %2014 = vmatpush2.bf16.msra.mxu0 0
      %2015 = vmatprep.subr.bf16.mxu0 0
      %2016 = vmatpush2.bf16.msra.mxu0 0
      %2017 = vmatprep.subr.bf16.mxu0 0
      %2018 = vmatpush2.bf16.msra.mxu0 0
      %2019 = vmatprep.subr.bf16.mxu0 0
      %2020 = vmatpush2.bf16.msra.mxu0 0
      %2021 = vmatprep.subr.bf16.mxu0 0
      %2022 = vmatpush2.bf16.msra.mxu0 0
      %2023 = vmatprep.subr.bf16.mxu0 0
      %2024 = vmatpush2.bf16.msra.mxu0 0
      %2025 = vmatprep.subr.bf16.mxu0 0
      %2026 = vmatpush2.bf16.msra.mxu0 0
      %2027 = vmatprep.subr.bf16.mxu0 0
      %2028 = vmatpush2.bf16.msra.mxu0 0
      %2029 = vmatprep.mubr.bf16.mxu0 0
      %2030 = vmatmul.mubr.bf16.gmra.mxu0 %v1981
      %v2031 = vpop.f32.mrf.mxu0
      %v2032 = vadd.f32 0.0, %v2031
      %v2033 = vpop.f32.mrf.mxu0
      %v2034 = vpop.f32.mrf.mxu0
      %v2035 = vadd.f32 0.0, %v2034
      %v2036 = vpop.f32.mrf.mxu0
      %2037 = vmatprep.mubr.bf16.mxu0 0
      %2038 = vmatmul.mubr.bf16.gmra.mxu0 %v1982
      %v2039 = vpop.f32.mrf.mxu0
      %v2040 = vadd.f32 0.0, %v2039
      %v2041 = vpop.f32.mrf.mxu0
      %v2042 = vpop.f32.mrf.mxu0
      %v2043 = vadd.f32 0.0, %v2042
      %v2044 = vpop.f32.mrf.mxu0
      %2045 = vmatprep.mubr.bf16.mxu0 0
      %2046 = vmatmul.mubr.bf16.gmra.mxu0 %v1983
      %v2047 = vpop.f32.mrf.mxu0
      %v2048 = vadd.f32 0.0, %v2047
      %v2049 = vpop.f32.mrf.mxu0
      %v2050 = vpop.f32.mrf.mxu0
      %v2051 = vadd.f32 0.0, %v2050
      %v2052 = vpop.f32.mrf.mxu0
      %2053 = vmatprep.mubr.bf16.mxu0 0
      %2054 = vmatmul.mubr.bf16.gmra.mxu0 %v1984
      %v2055 = vpop.f32.mrf.mxu0
      %v2056 = vadd.f32 0.0, %v2055
      %v2057 = vpop.f32.mrf.mxu0
      %v2058 = vpop.f32.mrf.mxu0
      %v2059 = vadd.f32 0.0, %v2058
      %v2060 = vpop.f32.mrf.mxu0
      %2061 = vmatprep.mubr.bf16.mxu0 0
      %2062 = vmatmul.mubr.bf16.gmra.mxu0 %v1985
      %v2063 = vpop.f32.mrf.mxu0
      %v2064 = vadd.f32 0.0, %v2063
      %v2065 = vpop.f32.mrf.mxu0
      %v2066 = vpop.f32.mrf.mxu0
      %v2067 = vadd.f32 0.0, %v2066
      %v2068 = vpop.f32.mrf.mxu0
      %2069 = vmatprep.mubr.bf16.mxu0 0
      %2070 = vmatmul.mubr.bf16.gmra.mxu0 %v1986
      %v2071 = vpop.f32.mrf.mxu0
      %v2072 = vadd.f32 0.0, %v2071
      %v2073 = vpop.f32.mrf.mxu0
      %v2074 = vpop.f32.mrf.mxu0
      %v2075 = vadd.f32 0.0, %v2074
      %v2076 = vpop.f32.mrf.mxu0
      %2077 = vmatprep.mubr.bf16.mxu0 0
      %2078 = vmatmul.mubr.bf16.gmra.mxu0 %v1987
      %v2079 = vpop.f32.mrf.mxu0
      %v2080 = vadd.f32 0.0, %v2079
      %v2081 = vpop.f32.mrf.mxu0
      %v2082 = vpop.f32.mrf.mxu0
      %v2083 = vadd.f32 0.0, %v2082
      %v2084 = vpop.f32.mrf.mxu0
      %2085 = vmatprep.mubr.bf16.mxu0 0
      %2086 = vmatmul.mubr.bf16.gmra.mxu0 %v1988
      %v2087 = vpop.f32.mrf.mxu0
      %v2088 = vadd.f32 0.0, %v2087
      %v2089 = vpop.f32.mrf.mxu0
      %v2090 = vpop.f32.mrf.mxu0
      %v2091 = vadd.f32 0.0, %v2090
      %v2092 = vpop.f32.mrf.mxu0
      %2093 = vdwg.mxu0
      %s2094 = scalar_lea.vmem %s522, 192
      %v2095 = vld [vmem:[%s2094] sm:$0xf]
      %v2096 = vld [vmem:[%s2094 + $0x4] sm:$0xf]
      %v2097 = vld [vmem:[%s2094 + $0x8] sm:$0xf]
      %v2098 = vld [vmem:[%s2094 + $0xc] sm:$0xf]
      %v2099 = vld [vmem:[%s2094 + $0x10] sm:$0xf]
      %v2100 = vld [vmem:[%s2094 + $0x14] sm:$0xf]
      %v2101 = vld [vmem:[%s2094 + $0x18] sm:$0xf]
      %v2102 = vld [vmem:[%s2094 + $0x1c] sm:$0xf]
      %v2103 = vld [vmem:[%s2094 + $0x20] sm:$0xf]
      %v2104 = vld [vmem:[%s2094 + $0x24] sm:$0xf]
      %v2105 = vld [vmem:[%s2094 + $0x28] sm:$0xf]
      %v2106 = vld [vmem:[%s2094 + $0x2c] sm:$0xf]
      %v2107 = vld [vmem:[%s2094 + $0x30] sm:$0xf]
      %v2108 = vld [vmem:[%s2094 + $0x34] sm:$0xf]
      %v2109 = vld [vmem:[%s2094 + $0x38] sm:$0xf]
      %v2110 = vld [vmem:[%s2094 + $0x3c] sm:$0xf]
      %v2127 = vunpack.c.l.b16 %v2095
      %v2128 = vunpack.c.l.b16 %v2096
      %v2129 = vunpack.c.l.b16 %v2097
      %v2130 = vunpack.c.l.b16 %v2098
      %v2131 = vunpack.c.l.b16 %v2099
      %v2132 = vunpack.c.l.b16 %v2100
      %v2133 = vunpack.c.l.b16 %v2101
      %v2134 = vunpack.c.l.b16 %v2102
      %v2135 = vunpack.c.l.b16 %v2103
      %v2136 = vunpack.c.l.b16 %v2104
      %v2137 = vunpack.c.l.b16 %v2105
      %v2138 = vunpack.c.l.b16 %v2106
      %v2139 = vunpack.c.l.b16 %v2107
      %v2140 = vunpack.c.l.b16 %v2108
      %v2141 = vunpack.c.l.b16 %v2109
      %v2142 = vunpack.c.l.b16 %v2110
      %v2143 = vpack.c.b16 %v2128, %v2127
      %v2144 = vpack.c.b16 %v2130, %v2129
      %v2145 = vpack.c.b16 %v2132, %v2131
      %v2146 = vpack.c.b16 %v2134, %v2133
      %v2147 = vpack.c.b16 %v2136, %v2135
      %v2148 = vpack.c.b16 %v2138, %v2137
      %v2149 = vpack.c.b16 %v2140, %v2139
      %v2150 = vpack.c.b16 %v2142, %v2141
      %2159 = vmatprep.subr.bf16.mxu0 0
      %2160 = vmatpush1.bf16.msra.mxu0 %v1608
      %2161 = vmatprep.subr.bf16.mxu0 0
      %2162 = vmatpush1.bf16.msra.mxu0 %v1607
      %2163 = vmatprep.subr.bf16.mxu0 0
      %2164 = vmatpush1.bf16.msra.mxu0 %v1606
      %2165 = vmatprep.subr.bf16.mxu0 0
      %2166 = vmatpush1.bf16.msra.mxu0 %v1605
      %2167 = vmatprep.subr.bf16.mxu0 0
      %2168 = vmatpush1.bf16.msra.mxu0 %v1604
      %2169 = vmatprep.subr.bf16.mxu0 0
      %2170 = vmatpush1.bf16.msra.mxu0 %v1603
      %2171 = vmatprep.subr.bf16.mxu0 0
      %2172 = vmatpush1.bf16.msra.mxu0 %v1602
      %2173 = vmatprep.subr.bf16.mxu0 0
      %2174 = vmatpush1.bf16.msra.mxu0 %v1601
      %2175 = vmatprep.subr.bf16.mxu0 0
      %2176 = vmatpush2.bf16.msra.mxu0 0
      %2177 = vmatprep.subr.bf16.mxu0 0
      %2178 = vmatpush2.bf16.msra.mxu0 0
      %2179 = vmatprep.subr.bf16.mxu0 0
      %2180 = vmatpush2.bf16.msra.mxu0 0
      %2181 = vmatprep.subr.bf16.mxu0 0
      %2182 = vmatpush2.bf16.msra.mxu0 0
      %2183 = vmatprep.subr.bf16.mxu0 0
      %2184 = vmatpush2.bf16.msra.mxu0 0
      %2185 = vmatprep.subr.bf16.mxu0 0
      %2186 = vmatpush2.bf16.msra.mxu0 0
      %2187 = vmatprep.subr.bf16.mxu0 0
      %2188 = vmatpush2.bf16.msra.mxu0 0
      %2189 = vmatprep.subr.bf16.mxu0 0
      %2190 = vmatpush2.bf16.msra.mxu0 0
      %2191 = vmatprep.mubr.bf16.mxu0 0
      %2192 = vmatmul.mubr.bf16.gmra.mxu0 %v2143
      %v2193 = vpop.f32.mrf.mxu0
      %v2194 = vadd.f32 0.0, %v2193
      %v2195 = vpop.f32.mrf.mxu0
      %v2196 = vpop.f32.mrf.mxu0
      %v2197 = vadd.f32 0.0, %v2196
      %v2198 = vpop.f32.mrf.mxu0
      %2199 = vmatprep.mubr.bf16.mxu0 0
      %2200 = vmatmul.mubr.bf16.gmra.mxu0 %v2144
      %v2201 = vpop.f32.mrf.mxu0
      %v2202 = vadd.f32 0.0, %v2201
      %v2203 = vpop.f32.mrf.mxu0
      %v2204 = vpop.f32.mrf.mxu0
      %v2205 = vadd.f32 0.0, %v2204
      %v2206 = vpop.f32.mrf.mxu0
      %2207 = vmatprep.mubr.bf16.mxu0 0
      %2208 = vmatmul.mubr.bf16.gmra.mxu0 %v2145
      %v2209 = vpop.f32.mrf.mxu0
      %v2210 = vadd.f32 0.0, %v2209
      %v2211 = vpop.f32.mrf.mxu0
      %v2212 = vpop.f32.mrf.mxu0
      %v2213 = vadd.f32 0.0, %v2212
      %v2214 = vpop.f32.mrf.mxu0
      %2215 = vmatprep.mubr.bf16.mxu0 0
      %2216 = vmatmul.mubr.bf16.gmra.mxu0 %v2146
      %v2217 = vpop.f32.mrf.mxu0
      %v2218 = vadd.f32 0.0, %v2217
      %v2219 = vpop.f32.mrf.mxu0
      %v2220 = vpop.f32.mrf.mxu0
      %v2221 = vadd.f32 0.0, %v2220
      %v2222 = vpop.f32.mrf.mxu0
      %2223 = vmatprep.mubr.bf16.mxu0 0
      %2224 = vmatmul.mubr.bf16.gmra.mxu0 %v2147
      %v2225 = vpop.f32.mrf.mxu0
      %v2226 = vadd.f32 0.0, %v2225
      %v2227 = vpop.f32.mrf.mxu0
      %v2228 = vpop.f32.mrf.mxu0
      %v2229 = vadd.f32 0.0, %v2228
      %v2230 = vpop.f32.mrf.mxu0
      %2231 = vmatprep.mubr.bf16.mxu0 0
      %2232 = vmatmul.mubr.bf16.gmra.mxu0 %v2148
      %v2233 = vpop.f32.mrf.mxu0
      %v2234 = vadd.f32 0.0, %v2233
      %v2235 = vpop.f32.mrf.mxu0
      %v2236 = vpop.f32.mrf.mxu0
      %v2237 = vadd.f32 0.0, %v2236
      %v2238 = vpop.f32.mrf.mxu0
      %2239 = vmatprep.mubr.bf16.mxu0 0
      %2240 = vmatmul.mubr.bf16.gmra.mxu0 %v2149
      %v2241 = vpop.f32.mrf.mxu0
      %v2242 = vadd.f32 0.0, %v2241
      %v2243 = vpop.f32.mrf.mxu0
      %v2244 = vpop.f32.mrf.mxu0
      %v2245 = vadd.f32 0.0, %v2244
      %v2246 = vpop.f32.mrf.mxu0
      %2247 = vmatprep.mubr.bf16.mxu0 0
      %2248 = vmatmul.mubr.bf16.gmra.mxu0 %v2150
      %v2249 = vpop.f32.mrf.mxu0
      %v2250 = vadd.f32 0.0, %v2249
      %v2251 = vpop.f32.mrf.mxu0
      %v2252 = vpop.f32.mrf.mxu0
      %v2253 = vadd.f32 0.0, %v2252
      %v2254 = vpop.f32.mrf.mxu0
      %2255 = vdwg.mxu0
      %v2256 = vpack.c.bf16 %v1711, %v1708
      %v2257 = vpack.c.bf16 %v1719, %v1716
      %v2258 = vpack.c.bf16 %v1727, %v1724
      %v2259 = vpack.c.bf16 %v1735, %v1732
      %v2260 = vpack.c.bf16 %v1743, %v1740
      %v2261 = vpack.c.bf16 %v1751, %v1748
      %v2262 = vpack.c.bf16 %v1759, %v1756
      %v2263 = vpack.c.bf16 %v1767, %v1764
      %v2264 = vpack.c.bf16 %v1873, %v1870
      %v2265 = vpack.c.bf16 %v1881, %v1878
      %v2266 = vpack.c.bf16 %v1889, %v1886
      %v2267 = vpack.c.bf16 %v1897, %v1894
      %v2268 = vpack.c.bf16 %v1905, %v1902
      %v2269 = vpack.c.bf16 %v1913, %v1910
      %v2270 = vpack.c.bf16 %v1921, %v1918
      %v2271 = vpack.c.bf16 %v1929, %v1926
      %v2272 = vpack.c.bf16 %v2035, %v2032
      %v2273 = vpack.c.bf16 %v2043, %v2040
      %v2274 = vpack.c.bf16 %v2051, %v2048
      %v2275 = vpack.c.bf16 %v2059, %v2056
      %v2276 = vpack.c.bf16 %v2067, %v2064
      %v2277 = vpack.c.bf16 %v2075, %v2072
      %v2278 = vpack.c.bf16 %v2083, %v2080
      %v2279 = vpack.c.bf16 %v2091, %v2088
      %v2280 = vpack.c.bf16 %v2197, %v2194
      %v2281 = vpack.c.bf16 %v2205, %v2202
      %v2282 = vpack.c.bf16 %v2213, %v2210
      %v2283 = vpack.c.bf16 %v2221, %v2218
      %v2284 = vpack.c.bf16 %v2229, %v2226
      %v2285 = vpack.c.bf16 %v2237, %v2234
      %v2286 = vpack.c.bf16 %v2245, %v2242
      %v2287 = vpack.c.bf16 %v2253, %v2250
      %v2304 = vunpack.c.l.b16 %v1561
      %v2305 = vunpack.c.l.b16 %v1562
      %v2306 = vunpack.c.l.b16 %v1563
      %v2307 = vunpack.c.l.b16 %v1564
      %v2308 = vunpack.c.l.b16 %v1565
      %v2309 = vunpack.c.l.b16 %v1566
      %v2310 = vunpack.c.l.b16 %v1567
      %v2311 = vunpack.c.l.b16 %v1568
      %v2312 = vunpack.c.l.b16 %v1569
      %v2313 = vunpack.c.l.b16 %v1570
      %v2314 = vunpack.c.l.b16 %v1571
      %v2315 = vunpack.c.l.b16 %v1572
      %v2316 = vunpack.c.l.b16 %v1573
      %v2317 = vunpack.c.l.b16 %v1574
      %v2318 = vunpack.c.l.b16 %v1575
      %v2319 = vunpack.c.l.b16 %v1576
      %v2320 = vpack.c.b16 %v2305, %v2304
      %v2321 = vpack.c.b16 %v2307, %v2306
      %v2322 = vpack.c.b16 %v2309, %v2308
      %v2323 = vpack.c.b16 %v2311, %v2310
      %v2324 = vpack.c.b16 %v2313, %v2312
      %v2325 = vpack.c.b16 %v2315, %v2314
      %v2326 = vpack.c.b16 %v2317, %v2316
      %v2327 = vpack.c.b16 %v2319, %v2318
      %2336 = vmatprep.subr.bf16.mxu0 0
      %2337 = vmatpush1.bf16.msra.mxu0 %v2327
      %2338 = vmatprep.subr.bf16.mxu0 0
      %2339 = vmatpush1.bf16.msra.mxu0 %v2326
      %2340 = vmatprep.subr.bf16.mxu0 0
      %2341 = vmatpush1.bf16.msra.mxu0 %v2325
      %2342 = vmatprep.subr.bf16.mxu0 0
      %2343 = vmatpush1.bf16.msra.mxu0 %v2324
      %2344 = vmatprep.subr.bf16.mxu0 0
      %2345 = vmatpush1.bf16.msra.mxu0 %v2323
      %2346 = vmatprep.subr.bf16.mxu0 0
      %2347 = vmatpush1.bf16.msra.mxu0 %v2322
      %2348 = vmatprep.subr.bf16.mxu0 0
      %2349 = vmatpush1.bf16.msra.mxu0 %v2321
      %2350 = vmatprep.subr.bf16.mxu0 0
      %2351 = vmatpush1.bf16.msra.mxu0 %v2320
      %2352 = vmatprep.subr.bf16.mxu0 0
      %2353 = vmatpush2.bf16.msra.mxu0 0
      %2354 = vmatprep.subr.bf16.mxu0 0
      %2355 = vmatpush2.bf16.msra.mxu0 0
      %2356 = vmatprep.subr.bf16.mxu0 0
      %2357 = vmatpush2.bf16.msra.mxu0 0
      %2358 = vmatprep.subr.bf16.mxu0 0
      %2359 = vmatpush2.bf16.msra.mxu0 0
      %2360 = vmatprep.subr.bf16.mxu0 0
      %2361 = vmatpush2.bf16.msra.mxu0 0
      %2362 = vmatprep.subr.bf16.mxu0 0
      %2363 = vmatpush2.bf16.msra.mxu0 0
      %2364 = vmatprep.subr.bf16.mxu0 0
      %2365 = vmatpush2.bf16.msra.mxu0 0
      %2366 = vmatprep.subr.bf16.mxu0 0
      %2367 = vmatpush2.bf16.msra.mxu0 0
      %2368 = vmatprep.mubr.bf16.mxu0 0
      %2369 = vmatmul.mubr.bf16.gmra.mxu0 %v2256
      %v2370 = vpop.f32.mrf.mxu0
      %v2371 = vadd.f32 %v1497, %v2370
      %v2372 = vpop.f32.mrf.mxu0
      %v2373 = vpop.f32.mrf.mxu0
      %v2374 = vadd.f32 %v1498, %v2373
      %v2375 = vpop.f32.mrf.mxu0
      %2376 = vmatprep.mubr.bf16.mxu0 0
      %2377 = vmatmul.mubr.bf16.gmra.mxu0 %v2257
      %v2378 = vpop.f32.mrf.mxu0
      %v2379 = vadd.f32 %v1499, %v2378
      %v2380 = vpop.f32.mrf.mxu0
      %v2381 = vpop.f32.mrf.mxu0
      %v2382 = vadd.f32 %v1500, %v2381
      %v2383 = vpop.f32.mrf.mxu0
      %2384 = vmatprep.mubr.bf16.mxu0 0
      %2385 = vmatmul.mubr.bf16.gmra.mxu0 %v2258
      %v2386 = vpop.f32.mrf.mxu0
      %v2387 = vadd.f32 %v1501, %v2386
      %v2388 = vpop.f32.mrf.mxu0
      %v2389 = vpop.f32.mrf.mxu0
      %v2390 = vadd.f32 %v1502, %v2389
      %v2391 = vpop.f32.mrf.mxu0
      %2392 = vmatprep.mubr.bf16.mxu0 0
      %2393 = vmatmul.mubr.bf16.gmra.mxu0 %v2259
      %v2394 = vpop.f32.mrf.mxu0
      %v2395 = vadd.f32 %v1503, %v2394
      %v2396 = vpop.f32.mrf.mxu0
      %v2397 = vpop.f32.mrf.mxu0
      %v2398 = vadd.f32 %v1504, %v2397
      %v2399 = vpop.f32.mrf.mxu0
      %2400 = vmatprep.mubr.bf16.mxu0 0
      %2401 = vmatmul.mubr.bf16.gmra.mxu0 %v2260
      %v2402 = vpop.f32.mrf.mxu0
      %v2403 = vadd.f32 %v1505, %v2402
      %v2404 = vpop.f32.mrf.mxu0
      %v2405 = vpop.f32.mrf.mxu0
      %v2406 = vadd.f32 %v1506, %v2405
      %v2407 = vpop.f32.mrf.mxu0
      %2408 = vmatprep.mubr.bf16.mxu0 0
      %2409 = vmatmul.mubr.bf16.gmra.mxu0 %v2261
      %v2410 = vpop.f32.mrf.mxu0
      %v2411 = vadd.f32 %v1507, %v2410
      %v2412 = vpop.f32.mrf.mxu0
      %v2413 = vpop.f32.mrf.mxu0
      %v2414 = vadd.f32 %v1508, %v2413
      %v2415 = vpop.f32.mrf.mxu0
      %2416 = vmatprep.mubr.bf16.mxu0 0
      %2417 = vmatmul.mubr.bf16.gmra.mxu0 %v2262
      %v2418 = vpop.f32.mrf.mxu0
      %v2419 = vadd.f32 %v1509, %v2418
      %v2420 = vpop.f32.mrf.mxu0
      %v2421 = vpop.f32.mrf.mxu0
      %v2422 = vadd.f32 %v1510, %v2421
      %v2423 = vpop.f32.mrf.mxu0
      %2424 = vmatprep.mubr.bf16.mxu0 0
      %2425 = vmatmul.mubr.bf16.gmra.mxu0 %v2263
      %v2426 = vpop.f32.mrf.mxu0
      %v2427 = vadd.f32 %v1511, %v2426
      %v2428 = vpop.f32.mrf.mxu0
      %v2429 = vpop.f32.mrf.mxu0
      %v2430 = vadd.f32 %v1512, %v2429
      %v2431 = vpop.f32.mrf.mxu0
      %2432 = vmatprep.mubr.bf16.mxu0 0
      %2433 = vmatmul.mubr.bf16.gmra.mxu0 %v2264
      %v2434 = vpop.f32.mrf.mxu0
      %v2435 = vadd.f32 %v1513, %v2434
      %v2436 = vpop.f32.mrf.mxu0
      %v2437 = vpop.f32.mrf.mxu0
      %v2438 = vadd.f32 %v1514, %v2437
      %v2439 = vpop.f32.mrf.mxu0
      %2440 = vmatprep.mubr.bf16.mxu0 0
      %2441 = vmatmul.mubr.bf16.gmra.mxu0 %v2265
      %v2442 = vpop.f32.mrf.mxu0
      %v2443 = vadd.f32 %v1515, %v2442
      %v2444 = vpop.f32.mrf.mxu0
      %v2445 = vpop.f32.mrf.mxu0
      %v2446 = vadd.f32 %v1516, %v2445
      %v2447 = vpop.f32.mrf.mxu0
      %2448 = vmatprep.mubr.bf16.mxu0 0
      %2449 = vmatmul.mubr.bf16.gmra.mxu0 %v2266
      %v2450 = vpop.f32.mrf.mxu0
      %v2451 = vadd.f32 %v1517, %v2450
      %v2452 = vpop.f32.mrf.mxu0
      %v2453 = vpop.f32.mrf.mxu0
      %v2454 = vadd.f32 %v1518, %v2453
      %v2455 = vpop.f32.mrf.mxu0
      %2456 = vmatprep.mubr.bf16.mxu0 0
      %2457 = vmatmul.mubr.bf16.gmra.mxu0 %v2267
      %v2458 = vpop.f32.mrf.mxu0
      %v2459 = vadd.f32 %v1519, %v2458
      %v2460 = vpop.f32.mrf.mxu0
      %v2461 = vpop.f32.mrf.mxu0
      %v2462 = vadd.f32 %v1520, %v2461
      %v2463 = vpop.f32.mrf.mxu0
      %2464 = vmatprep.mubr.bf16.mxu0 0
      %2465 = vmatmul.mubr.bf16.gmra.mxu0 %v2268
      %v2466 = vpop.f32.mrf.mxu0
      %v2467 = vadd.f32 %v1521, %v2466
      %v2468 = vpop.f32.mrf.mxu0
      %v2469 = vpop.f32.mrf.mxu0
      %v2470 = vadd.f32 %v1522, %v2469
      %v2471 = vpop.f32.mrf.mxu0
      %2472 = vmatprep.mubr.bf16.mxu0 0
      %2473 = vmatmul.mubr.bf16.gmra.mxu0 %v2269
      %v2474 = vpop.f32.mrf.mxu0
      %v2475 = vadd.f32 %v1523, %v2474
      %v2476 = vpop.f32.mrf.mxu0
      %v2477 = vpop.f32.mrf.mxu0
      %v2478 = vadd.f32 %v1524, %v2477
      %v2479 = vpop.f32.mrf.mxu0
      %2480 = vmatprep.mubr.bf16.mxu0 0
      %2481 = vmatmul.mubr.bf16.gmra.mxu0 %v2270
      %v2482 = vpop.f32.mrf.mxu0
      %v2483 = vadd.f32 %v1525, %v2482
      %v2484 = vpop.f32.mrf.mxu0
      %v2485 = vpop.f32.mrf.mxu0
      %v2486 = vadd.f32 %v1526, %v2485
      %v2487 = vpop.f32.mrf.mxu0
      %2488 = vmatprep.mubr.bf16.mxu0 0
      %2489 = vmatmul.mubr.bf16.gmra.mxu0 %v2271
      %v2490 = vpop.f32.mrf.mxu0
      %v2491 = vadd.f32 %v1527, %v2490
      %v2492 = vpop.f32.mrf.mxu0
      %v2493 = vpop.f32.mrf.mxu0
      %v2494 = vadd.f32 %v1528, %v2493
      %v2495 = vpop.f32.mrf.mxu0
      %2496 = vmatprep.mubr.bf16.mxu0 0
      %2497 = vmatmul.mubr.bf16.gmra.mxu0 %v2272
      %v2498 = vpop.f32.mrf.mxu0
      %v2499 = vadd.f32 %v1529, %v2498
      %v2500 = vpop.f32.mrf.mxu0
      %v2501 = vpop.f32.mrf.mxu0
      %v2502 = vadd.f32 %v1530, %v2501
      %v2503 = vpop.f32.mrf.mxu0
      %2504 = vmatprep.mubr.bf16.mxu0 0
      %2505 = vmatmul.mubr.bf16.gmra.mxu0 %v2273
      %v2506 = vpop.f32.mrf.mxu0
      %v2507 = vadd.f32 %v1531, %v2506
      %v2508 = vpop.f32.mrf.mxu0
      %v2509 = vpop.f32.mrf.mxu0
      %v2510 = vadd.f32 %v1532, %v2509
      %v2511 = vpop.f32.mrf.mxu0
      %2512 = vmatprep.mubr.bf16.mxu0 0
      %2513 = vmatmul.mubr.bf16.gmra.mxu0 %v2274
      %v2514 = vpop.f32.mrf.mxu0
      %v2515 = vadd.f32 %v1533, %v2514
      %v2516 = vpop.f32.mrf.mxu0
      %v2517 = vpop.f32.mrf.mxu0
      %v2518 = vadd.f32 %v1534, %v2517
      %v2519 = vpop.f32.mrf.mxu0
      %2520 = vmatprep.mubr.bf16.mxu0 0
      %2521 = vmatmul.mubr.bf16.gmra.mxu0 %v2275
      %v2522 = vpop.f32.mrf.mxu0
      %v2523 = vadd.f32 %v1535, %v2522
      %v2524 = vpop.f32.mrf.mxu0
      %v2525 = vpop.f32.mrf.mxu0
      %v2526 = vadd.f32 %v1536, %v2525
      %v2527 = vpop.f32.mrf.mxu0
      %2528 = vmatprep.mubr.bf16.mxu0 0
      %2529 = vmatmul.mubr.bf16.gmra.mxu0 %v2276
      %v2530 = vpop.f32.mrf.mxu0
      %v2531 = vadd.f32 %v1537, %v2530
      %v2532 = vpop.f32.mrf.mxu0
      %v2533 = vpop.f32.mrf.mxu0
      %v2534 = vadd.f32 %v1538, %v2533
      %v2535 = vpop.f32.mrf.mxu0
      %2536 = vmatprep.mubr.bf16.mxu0 0
      %2537 = vmatmul.mubr.bf16.gmra.mxu0 %v2277
      %v2538 = vpop.f32.mrf.mxu0
      %v2539 = vadd.f32 %v1539, %v2538
      %v2540 = vpop.f32.mrf.mxu0
      %v2541 = vpop.f32.mrf.mxu0
      %v2542 = vadd.f32 %v1540, %v2541
      %v2543 = vpop.f32.mrf.mxu0
      %2544 = vmatprep.mubr.bf16.mxu0 0
      %2545 = vmatmul.mubr.bf16.gmra.mxu0 %v2278
      %v2546 = vpop.f32.mrf.mxu0
      %v2547 = vadd.f32 %v1541, %v2546
      %v2548 = vpop.f32.mrf.mxu0
      %v2549 = vpop.f32.mrf.mxu0
      %v2550 = vadd.f32 %v1542, %v2549
      %v2551 = vpop.f32.mrf.mxu0
      %2552 = vmatprep.mubr.bf16.mxu0 0
      %2553 = vmatmul.mubr.bf16.gmra.mxu0 %v2279
      %v2554 = vpop.f32.mrf.mxu0
      %v2555 = vadd.f32 %v1543, %v2554
      %v2556 = vpop.f32.mrf.mxu0
      %v2557 = vpop.f32.mrf.mxu0
      %v2558 = vadd.f32 %v1544, %v2557
      %v2559 = vpop.f32.mrf.mxu0
      %2560 = vmatprep.mubr.bf16.mxu0 0
      %2561 = vmatmul.mubr.bf16.gmra.mxu0 %v2280
      %v2562 = vpop.f32.mrf.mxu0
      %v2563 = vadd.f32 %v1545, %v2562
      %v2564 = vpop.f32.mrf.mxu0
      %v2565 = vpop.f32.mrf.mxu0
      %v2566 = vadd.f32 %v1546, %v2565
      %v2567 = vpop.f32.mrf.mxu0
      %2568 = vmatprep.mubr.bf16.mxu0 0
      %2569 = vmatmul.mubr.bf16.gmra.mxu0 %v2281
      %v2570 = vpop.f32.mrf.mxu0
      %v2571 = vadd.f32 %v1547, %v2570
      %v2572 = vpop.f32.mrf.mxu0
      %v2573 = vpop.f32.mrf.mxu0
      %v2574 = vadd.f32 %v1548, %v2573
      %v2575 = vpop.f32.mrf.mxu0
      %2576 = vmatprep.mubr.bf16.mxu0 0
      %2577 = vmatmul.mubr.bf16.gmra.mxu0 %v2282
      %v2578 = vpop.f32.mrf.mxu0
      %v2579 = vadd.f32 %v1549, %v2578
      %v2580 = vpop.f32.mrf.mxu0
      %v2581 = vpop.f32.mrf.mxu0
      %v2582 = vadd.f32 %v1550, %v2581
      %v2583 = vpop.f32.mrf.mxu0
      %2584 = vmatprep.mubr.bf16.mxu0 0
      %2585 = vmatmul.mubr.bf16.gmra.mxu0 %v2283
      %v2586 = vpop.f32.mrf.mxu0
      %v2587 = vadd.f32 %v1551, %v2586
      %v2588 = vpop.f32.mrf.mxu0
      %v2589 = vpop.f32.mrf.mxu0
      %v2590 = vadd.f32 %v1552, %v2589
      %v2591 = vpop.f32.mrf.mxu0
      %2592 = vmatprep.mubr.bf16.mxu0 0
      %2593 = vmatmul.mubr.bf16.gmra.mxu0 %v2284
      %v2594 = vpop.f32.mrf.mxu0
      %v2595 = vadd.f32 %v1553, %v2594
      %v2596 = vpop.f32.mrf.mxu0
      %v2597 = vpop.f32.mrf.mxu0
      %v2598 = vadd.f32 %v1554, %v2597
      %v2599 = vpop.f32.mrf.mxu0
      %2600 = vmatprep.mubr.bf16.mxu0 0
      %2601 = vmatmul.mubr.bf16.gmra.mxu0 %v2285
      %v2602 = vpop.f32.mrf.mxu0
      %v2603 = vadd.f32 %v1555, %v2602
      %v2604 = vpop.f32.mrf.mxu0
      %v2605 = vpop.f32.mrf.mxu0
      %v2606 = vadd.f32 %v1556, %v2605
      %v2607 = vpop.f32.mrf.mxu0
      %2608 = vmatprep.mubr.bf16.mxu0 0
      %2609 = vmatmul.mubr.bf16.gmra.mxu0 %v2286
      %v2610 = vpop.f32.mrf.mxu0
      %v2611 = vadd.f32 %v1557, %v2610
      %v2612 = vpop.f32.mrf.mxu0
      %v2613 = vpop.f32.mrf.mxu0
      %v2614 = vadd.f32 %v1558, %v2613
      %v2615 = vpop.f32.mrf.mxu0
      %2616 = vmatprep.mubr.bf16.mxu0 0
      %2617 = vmatmul.mubr.bf16.gmra.mxu0 %v2287
      %v2618 = vpop.f32.mrf.mxu0
      %v2619 = vadd.f32 %v1559, %v2618
      %v2620 = vpop.f32.mrf.mxu0
      %v2621 = vpop.f32.mrf.mxu0
      %v2622 = vadd.f32 %v1560, %v2621
      %v2623 = vpop.f32.mrf.mxu0
      %2624 = vdwg.mxu0
      %v2625 = vmax.f32 %v2371, 0.0
      %v2626 = vmax.f32 %v2374, 0.0
      %v2627 = vmax.f32 %v2379, 0.0
      %v2628 = vmax.f32 %v2382, 0.0
      %v2629 = vmax.f32 %v2387, 0.0
      %v2630 = vmax.f32 %v2390, 0.0
      %v2631 = vmax.f32 %v2395, 0.0
      %v2632 = vmax.f32 %v2398, 0.0
      %v2633 = vmax.f32 %v2403, 0.0
      %v2634 = vmax.f32 %v2406, 0.0
      %v2635 = vmax.f32 %v2411, 0.0
      %v2636 = vmax.f32 %v2414, 0.0
      %v2637 = vmax.f32 %v2419, 0.0
      %v2638 = vmax.f32 %v2422, 0.0
      %v2639 = vmax.f32 %v2427, 0.0
      %v2640 = vmax.f32 %v2430, 0.0
      %v2641 = vmax.f32 %v2435, 0.0
      %v2642 = vmax.f32 %v2438, 0.0
      %v2643 = vmax.f32 %v2443, 0.0
      %v2644 = vmax.f32 %v2446, 0.0
      %v2645 = vmax.f32 %v2451, 0.0
      %v2646 = vmax.f32 %v2454, 0.0
      %v2647 = vmax.f32 %v2459, 0.0
      %v2648 = vmax.f32 %v2462, 0.0
      %v2649 = vmax.f32 %v2467, 0.0
      %v2650 = vmax.f32 %v2470, 0.0
      %v2651 = vmax.f32 %v2475, 0.0
      %v2652 = vmax.f32 %v2478, 0.0
      %v2653 = vmax.f32 %v2483, 0.0
      %v2654 = vmax.f32 %v2486, 0.0
      %v2655 = vmax.f32 %v2491, 0.0
      %v2656 = vmax.f32 %v2494, 0.0
      %v2657 = vmax.f32 %v2499, 0.0
      %v2658 = vmax.f32 %v2502, 0.0
      %v2659 = vmax.f32 %v2507, 0.0
      %v2660 = vmax.f32 %v2510, 0.0
      %v2661 = vmax.f32 %v2515, 0.0
      %v2662 = vmax.f32 %v2518, 0.0
      %v2663 = vmax.f32 %v2523, 0.0
      %v2664 = vmax.f32 %v2526, 0.0
      %v2665 = vmax.f32 %v2531, 0.0
      %v2666 = vmax.f32 %v2534, 0.0
      %v2667 = vmax.f32 %v2539, 0.0
      %v2668 = vmax.f32 %v2542, 0.0
      %v2669 = vmax.f32 %v2547, 0.0
      %v2670 = vmax.f32 %v2550, 0.0
      %v2671 = vmax.f32 %v2555, 0.0
      %v2672 = vmax.f32 %v2558, 0.0
      %v2673 = vmax.f32 %v2563, 0.0
      %v2674 = vmax.f32 %v2566, 0.0
      %v2675 = vmax.f32 %v2571, 0.0
      %v2676 = vmax.f32 %v2574, 0.0
      %v2677 = vmax.f32 %v2579, 0.0
      %v2678 = vmax.f32 %v2582, 0.0
      %v2679 = vmax.f32 %v2587, 0.0
      %v2680 = vmax.f32 %v2590, 0.0
      %v2681 = vmax.f32 %v2595, 0.0
      %v2682 = vmax.f32 %v2598, 0.0
      %v2683 = vmax.f32 %v2603, 0.0
      %v2684 = vmax.f32 %v2606, 0.0
      %v2685 = vmax.f32 %v2611, 0.0
      %v2686 = vmax.f32 %v2614, 0.0
      %v2687 = vmax.f32 %v2619, 0.0
      %v2688 = vmax.f32 %v2622, 0.0
      %v2689 = vpack.c.bf16 %v2626, %v2625
      %v2690 = vpack.c.bf16 %v2628, %v2627
      %v2691 = vpack.c.bf16 %v2630, %v2629
      %v2692 = vpack.c.bf16 %v2632, %v2631
      %v2693 = vpack.c.bf16 %v2634, %v2633
      %v2694 = vpack.c.bf16 %v2636, %v2635
      %v2695 = vpack.c.bf16 %v2638, %v2637
      %v2696 = vpack.c.bf16 %v2640, %v2639
      %v2697 = vpack.c.bf16 %v2642, %v2641
      %v2698 = vpack.c.bf16 %v2644, %v2643
      %v2699 = vpack.c.bf16 %v2646, %v2645
      %v2700 = vpack.c.bf16 %v2648, %v2647
      %v2701 = vpack.c.bf16 %v2650, %v2649
      %v2702 = vpack.c.bf16 %v2652, %v2651
      %v2703 = vpack.c.bf16 %v2654, %v2653
      %v2704 = vpack.c.bf16 %v2656, %v2655
      %v2705 = vpack.c.bf16 %v2658, %v2657
      %v2706 = vpack.c.bf16 %v2660, %v2659
      %v2707 = vpack.c.bf16 %v2662, %v2661
      %v2708 = vpack.c.bf16 %v2664, %v2663
      %v2709 = vpack.c.bf16 %v2666, %v2665
      %v2710 = vpack.c.bf16 %v2668, %v2667
      %v2711 = vpack.c.bf16 %v2670, %v2669
      %v2712 = vpack.c.bf16 %v2672, %v2671
      %v2713 = vpack.c.bf16 %v2674, %v2673
      %v2714 = vpack.c.bf16 %v2676, %v2675
      %v2715 = vpack.c.bf16 %v2678, %v2677
      %v2716 = vpack.c.bf16 %v2680, %v2679
      %v2717 = vpack.c.bf16 %v2682, %v2681
      %v2718 = vpack.c.bf16 %v2684, %v2683
      %v2719 = vpack.c.bf16 %v2686, %v2685
      %v2720 = vpack.c.bf16 %v2688, %v2687
      %2721 = vmatprep.subr.bf16.mxu0 0
      %2722 = vmatpush1.bf16.msra.mxu0 %v2696
      %2723 = vmatprep.subr.bf16.mxu0 0
      %2724 = vmatpush1.bf16.msra.mxu0 %v2695
      %2725 = vmatprep.subr.bf16.mxu0 0
      %2726 = vmatpush1.bf16.msra.mxu0 %v2694
      %2727 = vmatprep.subr.bf16.mxu0 0
      %2728 = vmatpush1.bf16.msra.mxu0 %v2693
      %2729 = vmatprep.subr.bf16.mxu0 0
      %2730 = vmatpush1.bf16.msra.mxu0 %v2692
      %2731 = vmatprep.subr.bf16.mxu0 0
      %2732 = vmatpush1.bf16.msra.mxu0 %v2691
      %2733 = vmatprep.subr.bf16.mxu0 0
      %2734 = vmatpush1.bf16.msra.mxu0 %v2690
      %2735 = vmatprep.subr.bf16.mxu0 0
      %2736 = vmatpush1.bf16.msra.mxu0 %v2689
      %2737 = vmatprep.subr.bf16.mxu0 0
      %2738 = vmatpush2.bf16.msra.mxu0 0
      %2739 = vmatprep.subr.bf16.mxu0 0
      %2740 = vmatpush2.bf16.msra.mxu0 0
      %2741 = vmatprep.subr.bf16.mxu0 0
      %2742 = vmatpush2.bf16.msra.mxu0 0
      %2743 = vmatprep.subr.bf16.mxu0 0
      %2744 = vmatpush2.bf16.msra.mxu0 0
      %2745 = vmatprep.subr.bf16.mxu0 0
      %2746 = vmatpush2.bf16.msra.mxu0 0
      %2747 = vmatprep.subr.bf16.mxu0 0
      %2748 = vmatpush2.bf16.msra.mxu0 0
      %2749 = vmatprep.subr.bf16.mxu0 0
      %2750 = vmatpush2.bf16.msra.mxu0 0
      %2751 = vmatprep.subr.bf16.mxu0 0
      %2752 = vmatpush2.bf16.msra.mxu0 0
      %2753 = vmatprep.mubr.bf16.mxu0 0
      %2754 = vmatmul.mubr.bf16.gmra.mxu0 %v1657
      %v2755 = vpop.f32.mrf.mxu0
      %v2756 = vadd.f32 0.0, %v2755
      %v2757 = vpop.f32.mrf.mxu0
      %v2758 = vpop.f32.mrf.mxu0
      %v2759 = vadd.f32 0.0, %v2758
      %v2760 = vpop.f32.mrf.mxu0
      %2761 = vmatprep.mubr.bf16.mxu0 0
      %2762 = vmatmul.mubr.bf16.gmra.mxu0 %v1658
      %v2763 = vpop.f32.mrf.mxu0
      %v2764 = vadd.f32 0.0, %v2763
      %v2765 = vpop.f32.mrf.mxu0
      %v2766 = vpop.f32.mrf.mxu0
      %v2767 = vadd.f32 0.0, %v2766
      %v2768 = vpop.f32.mrf.mxu0
      %2769 = vmatprep.mubr.bf16.mxu0 0
      %2770 = vmatmul.mubr.bf16.gmra.mxu0 %v1659
      %v2771 = vpop.f32.mrf.mxu0
      %v2772 = vadd.f32 0.0, %v2771
      %v2773 = vpop.f32.mrf.mxu0
      %v2774 = vpop.f32.mrf.mxu0
      %v2775 = vadd.f32 0.0, %v2774
      %v2776 = vpop.f32.mrf.mxu0
      %2777 = vmatprep.mubr.bf16.mxu0 0
      %2778 = vmatmul.mubr.bf16.gmra.mxu0 %v1660
      %v2779 = vpop.f32.mrf.mxu0
      %v2780 = vadd.f32 0.0, %v2779
      %v2781 = vpop.f32.mrf.mxu0
      %v2782 = vpop.f32.mrf.mxu0
      %v2783 = vadd.f32 0.0, %v2782
      %v2784 = vpop.f32.mrf.mxu0
      %2785 = vmatprep.mubr.bf16.mxu0 0
      %2786 = vmatmul.mubr.bf16.gmra.mxu0 %v1661
      %v2787 = vpop.f32.mrf.mxu0
      %v2788 = vadd.f32 0.0, %v2787
      %v2789 = vpop.f32.mrf.mxu0
      %v2790 = vpop.f32.mrf.mxu0
      %v2791 = vadd.f32 0.0, %v2790
      %v2792 = vpop.f32.mrf.mxu0
      %2793 = vmatprep.mubr.bf16.mxu0 0
      %2794 = vmatmul.mubr.bf16.gmra.mxu0 %v1662
      %v2795 = vpop.f32.mrf.mxu0
      %v2796 = vadd.f32 0.0, %v2795
      %v2797 = vpop.f32.mrf.mxu0
      %v2798 = vpop.f32.mrf.mxu0
      %v2799 = vadd.f32 0.0, %v2798
      %v2800 = vpop.f32.mrf.mxu0
      %2801 = vmatprep.mubr.bf16.mxu0 0
      %2802 = vmatmul.mubr.bf16.gmra.mxu0 %v1663
      %v2803 = vpop.f32.mrf.mxu0
      %v2804 = vadd.f32 0.0, %v2803
      %v2805 = vpop.f32.mrf.mxu0
      %v2806 = vpop.f32.mrf.mxu0
      %v2807 = vadd.f32 0.0, %v2806
      %v2808 = vpop.f32.mrf.mxu0
      %2809 = vmatprep.mubr.bf16.mxu0 0
      %2810 = vmatmul.mubr.bf16.gmra.mxu0 %v1664
      %v2811 = vpop.f32.mrf.mxu0
      %v2812 = vadd.f32 0.0, %v2811
      %v2813 = vpop.f32.mrf.mxu0
      %v2814 = vpop.f32.mrf.mxu0
      %v2815 = vadd.f32 0.0, %v2814
      %v2816 = vpop.f32.mrf.mxu0
      %2817 = vdwg.mxu0
      %2818 = vmatprep.subr.bf16.mxu0 0
      %2819 = vmatpush1.bf16.msra.mxu0 %v2704
      %2820 = vmatprep.subr.bf16.mxu0 0
      %2821 = vmatpush1.bf16.msra.mxu0 %v2703
      %2822 = vmatprep.subr.bf16.mxu0 0
      %2823 = vmatpush1.bf16.msra.mxu0 %v2702
      %2824 = vmatprep.subr.bf16.mxu0 0
      %2825 = vmatpush1.bf16.msra.mxu0 %v2701
      %2826 = vmatprep.subr.bf16.mxu0 0
      %2827 = vmatpush1.bf16.msra.mxu0 %v2700
      %2828 = vmatprep.subr.bf16.mxu0 0
      %2829 = vmatpush1.bf16.msra.mxu0 %v2699
      %2830 = vmatprep.subr.bf16.mxu0 0
      %2831 = vmatpush1.bf16.msra.mxu0 %v2698
      %2832 = vmatprep.subr.bf16.mxu0 0
      %2833 = vmatpush1.bf16.msra.mxu0 %v2697
      %2834 = vmatprep.subr.bf16.mxu0 0
      %2835 = vmatpush2.bf16.msra.mxu0 0
      %2836 = vmatprep.subr.bf16.mxu0 0
      %2837 = vmatpush2.bf16.msra.mxu0 0
      %2838 = vmatprep.subr.bf16.mxu0 0
      %2839 = vmatpush2.bf16.msra.mxu0 0
      %2840 = vmatprep.subr.bf16.mxu0 0
      %2841 = vmatpush2.bf16.msra.mxu0 0
      %2842 = vmatprep.subr.bf16.mxu0 0
      %2843 = vmatpush2.bf16.msra.mxu0 0
      %2844 = vmatprep.subr.bf16.mxu0 0
      %2845 = vmatpush2.bf16.msra.mxu0 0
      %2846 = vmatprep.subr.bf16.mxu0 0
      %2847 = vmatpush2.bf16.msra.mxu0 0
      %2848 = vmatprep.subr.bf16.mxu0 0
      %2849 = vmatpush2.bf16.msra.mxu0 0
      %2850 = vmatprep.mubr.bf16.mxu0 0
      %2851 = vmatmul.mubr.bf16.gmra.mxu0 %v1819
      %v2852 = vpop.f32.mrf.mxu0
      %v2853 = vadd.f32 0.0, %v2852
      %v2854 = vpop.f32.mrf.mxu0
      %v2855 = vpop.f32.mrf.mxu0
      %v2856 = vadd.f32 0.0, %v2855
      %v2857 = vpop.f32.mrf.mxu0
      %2858 = vmatprep.mubr.bf16.mxu0 0
      %2859 = vmatmul.mubr.bf16.gmra.mxu0 %v1820
      %v2860 = vpop.f32.mrf.mxu0
      %v2861 = vadd.f32 0.0, %v2860
      %v2862 = vpop.f32.mrf.mxu0
      %v2863 = vpop.f32.mrf.mxu0
      %v2864 = vadd.f32 0.0, %v2863
      %v2865 = vpop.f32.mrf.mxu0
      %2866 = vmatprep.mubr.bf16.mxu0 0
      %2867 = vmatmul.mubr.bf16.gmra.mxu0 %v1821
      %v2868 = vpop.f32.mrf.mxu0
      %v2869 = vadd.f32 0.0, %v2868
      %v2870 = vpop.f32.mrf.mxu0
      %v2871 = vpop.f32.mrf.mxu0
      %v2872 = vadd.f32 0.0, %v2871
      %v2873 = vpop.f32.mrf.mxu0
      %2874 = vmatprep.mubr.bf16.mxu0 0
      %2875 = vmatmul.mubr.bf16.gmra.mxu0 %v1822
      %v2876 = vpop.f32.mrf.mxu0
      %v2877 = vadd.f32 0.0, %v2876
      %v2878 = vpop.f32.mrf.mxu0
      %v2879 = vpop.f32.mrf.mxu0
      %v2880 = vadd.f32 0.0, %v2879
      %v2881 = vpop.f32.mrf.mxu0
      %2882 = vmatprep.mubr.bf16.mxu0 0
      %2883 = vmatmul.mubr.bf16.gmra.mxu0 %v1823
      %v2884 = vpop.f32.mrf.mxu0
      %v2885 = vadd.f32 0.0, %v2884
      %v2886 = vpop.f32.mrf.mxu0
      %v2887 = vpop.f32.mrf.mxu0
      %v2888 = vadd.f32 0.0, %v2887
      %v2889 = vpop.f32.mrf.mxu0
      %2890 = vmatprep.mubr.bf16.mxu0 0
      %2891 = vmatmul.mubr.bf16.gmra.mxu0 %v1824
      %v2892 = vpop.f32.mrf.mxu0
      %v2893 = vadd.f32 0.0, %v2892
      %v2894 = vpop.f32.mrf.mxu0
      %v2895 = vpop.f32.mrf.mxu0
      %v2896 = vadd.f32 0.0, %v2895
      %v2897 = vpop.f32.mrf.mxu0
      %2898 = vmatprep.mubr.bf16.mxu0 0
      %2899 = vmatmul.mubr.bf16.gmra.mxu0 %v1825
      %v2900 = vpop.f32.mrf.mxu0
      %v2901 = vadd.f32 0.0, %v2900
      %v2902 = vpop.f32.mrf.mxu0
      %v2903 = vpop.f32.mrf.mxu0
      %v2904 = vadd.f32 0.0, %v2903
      %v2905 = vpop.f32.mrf.mxu0
      %2906 = vmatprep.mubr.bf16.mxu0 0
      %2907 = vmatmul.mubr.bf16.gmra.mxu0 %v1826
      %v2908 = vpop.f32.mrf.mxu0
      %v2909 = vadd.f32 0.0, %v2908
      %v2910 = vpop.f32.mrf.mxu0
      %v2911 = vpop.f32.mrf.mxu0
      %v2912 = vadd.f32 0.0, %v2911
      %v2913 = vpop.f32.mrf.mxu0
      %2914 = vdwg.mxu0
      %2915 = vmatprep.subr.bf16.mxu0 0
      %2916 = vmatpush1.bf16.msra.mxu0 %v2712
      %2917 = vmatprep.subr.bf16.mxu0 0
      %2918 = vmatpush1.bf16.msra.mxu0 %v2711
      %2919 = vmatprep.subr.bf16.mxu0 0
      %2920 = vmatpush1.bf16.msra.mxu0 %v2710
      %2921 = vmatprep.subr.bf16.mxu0 0
      %2922 = vmatpush1.bf16.msra.mxu0 %v2709
      %2923 = vmatprep.subr.bf16.mxu0 0
      %2924 = vmatpush1.bf16.msra.mxu0 %v2708
      %2925 = vmatprep.subr.bf16.mxu0 0
      %2926 = vmatpush1.bf16.msra.mxu0 %v2707
      %2927 = vmatprep.subr.bf16.mxu0 0
      %2928 = vmatpush1.bf16.msra.mxu0 %v2706
      %2929 = vmatprep.subr.bf16.mxu0 0
      %2930 = vmatpush1.bf16.msra.mxu0 %v2705
      %2931 = vmatprep.subr.bf16.mxu0 0
      %2932 = vmatpush2.bf16.msra.mxu0 0
      %2933 = vmatprep.subr.bf16.mxu0 0
      %2934 = vmatpush2.bf16.msra.mxu0 0
      %2935 = vmatprep.subr.bf16.mxu0 0
      %2936 = vmatpush2.bf16.msra.mxu0 0
      %2937 = vmatprep.subr.bf16.mxu0 0
      %2938 = vmatpush2.bf16.msra.mxu0 0
      %2939 = vmatprep.subr.bf16.mxu0 0
      %2940 = vmatpush2.bf16.msra.mxu0 0
      %2941 = vmatprep.subr.bf16.mxu0 0
      %2942 = vmatpush2.bf16.msra.mxu0 0
      %2943 = vmatprep.subr.bf16.mxu0 0
      %2944 = vmatpush2.bf16.msra.mxu0 0
      %2945 = vmatprep.subr.bf16.mxu0 0
      %2946 = vmatpush2.bf16.msra.mxu0 0
      %2947 = vmatprep.mubr.bf16.mxu0 0
      %2948 = vmatmul.mubr.bf16.gmra.mxu0 %v1981
      %v2949 = vpop.f32.mrf.mxu0
      %v2950 = vadd.f32 0.0, %v2949
      %v2951 = vpop.f32.mrf.mxu0
      %v2952 = vpop.f32.mrf.mxu0
      %v2953 = vadd.f32 0.0, %v2952
      %v2954 = vpop.f32.mrf.mxu0
      %2955 = vmatprep.mubr.bf16.mxu0 0
      %2956 = vmatmul.mubr.bf16.gmra.mxu0 %v1982
      %v2957 = vpop.f32.mrf.mxu0
      %v2958 = vadd.f32 0.0, %v2957
      %v2959 = vpop.f32.mrf.mxu0
      %v2960 = vpop.f32.mrf.mxu0
      %v2961 = vadd.f32 0.0, %v2960
      %v2962 = vpop.f32.mrf.mxu0
      %2963 = vmatprep.mubr.bf16.mxu0 0
      %2964 = vmatmul.mubr.bf16.gmra.mxu0 %v1983
      %v2965 = vpop.f32.mrf.mxu0
      %v2966 = vadd.f32 0.0, %v2965
      %v2967 = vpop.f32.mrf.mxu0
      %v2968 = vpop.f32.mrf.mxu0
      %v2969 = vadd.f32 0.0, %v2968
      %v2970 = vpop.f32.mrf.mxu0
      %2971 = vmatprep.mubr.bf16.mxu0 0
      %2972 = vmatmul.mubr.bf16.gmra.mxu0 %v1984
      %v2973 = vpop.f32.mrf.mxu0
      %v2974 = vadd.f32 0.0, %v2973
      %v2975 = vpop.f32.mrf.mxu0
      %v2976 = vpop.f32.mrf.mxu0
      %v2977 = vadd.f32 0.0, %v2976
      %v2978 = vpop.f32.mrf.mxu0
      %2979 = vmatprep.mubr.bf16.mxu0 0
      %2980 = vmatmul.mubr.bf16.gmra.mxu0 %v1985
      %v2981 = vpop.f32.mrf.mxu0
      %v2982 = vadd.f32 0.0, %v2981
      %v2983 = vpop.f32.mrf.mxu0
      %v2984 = vpop.f32.mrf.mxu0
      %v2985 = vadd.f32 0.0, %v2984
      %v2986 = vpop.f32.mrf.mxu0
      %2987 = vmatprep.mubr.bf16.mxu0 0
      %2988 = vmatmul.mubr.bf16.gmra.mxu0 %v1986
      %v2989 = vpop.f32.mrf.mxu0
      %v2990 = vadd.f32 0.0, %v2989
      %v2991 = vpop.f32.mrf.mxu0
      %v2992 = vpop.f32.mrf.mxu0
      %v2993 = vadd.f32 0.0, %v2992
      %v2994 = vpop.f32.mrf.mxu0
      %2995 = vmatprep.mubr.bf16.mxu0 0
      %2996 = vmatmul.mubr.bf16.gmra.mxu0 %v1987
      %v2997 = vpop.f32.mrf.mxu0
      %v2998 = vadd.f32 0.0, %v2997
      %v2999 = vpop.f32.mrf.mxu0
      %v3000 = vpop.f32.mrf.mxu0
      %v3001 = vadd.f32 0.0, %v3000
      %v3002 = vpop.f32.mrf.mxu0
      %3003 = vmatprep.mubr.bf16.mxu0 0
      %3004 = vmatmul.mubr.bf16.gmra.mxu0 %v1988
      %v3005 = vpop.f32.mrf.mxu0
      %v3006 = vadd.f32 0.0, %v3005
      %v3007 = vpop.f32.mrf.mxu0
      %v3008 = vpop.f32.mrf.mxu0
      %v3009 = vadd.f32 0.0, %v3008
      %v3010 = vpop.f32.mrf.mxu0
      %3011 = vdwg.mxu0
      %3012 = vmatprep.subr.bf16.mxu0 0
      %3013 = vmatpush1.bf16.msra.mxu0 %v2720
      %3014 = vmatprep.subr.bf16.mxu0 0
      %3015 = vmatpush1.bf16.msra.mxu0 %v2719
      %3016 = vmatprep.subr.bf16.mxu0 0
      %3017 = vmatpush1.bf16.msra.mxu0 %v2718
      %3018 = vmatprep.subr.bf16.mxu0 0
      %3019 = vmatpush1.bf16.msra.mxu0 %v2717
      %3020 = vmatprep.subr.bf16.mxu0 0
      %3021 = vmatpush1.bf16.msra.mxu0 %v2716
      %3022 = vmatprep.subr.bf16.mxu0 0
      %3023 = vmatpush1.bf16.msra.mxu0 %v2715
      %3024 = vmatprep.subr.bf16.mxu0 0
      %3025 = vmatpush1.bf16.msra.mxu0 %v2714
      %3026 = vmatprep.subr.bf16.mxu0 0
      %3027 = vmatpush1.bf16.msra.mxu0 %v2713
      %3028 = vmatprep.subr.bf16.mxu0 0
      %3029 = vmatpush2.bf16.msra.mxu0 0
      %3030 = vmatprep.subr.bf16.mxu0 0
      %3031 = vmatpush2.bf16.msra.mxu0 0
      %3032 = vmatprep.subr.bf16.mxu0 0
      %3033 = vmatpush2.bf16.msra.mxu0 0
      %3034 = vmatprep.subr.bf16.mxu0 0
      %3035 = vmatpush2.bf16.msra.mxu0 0
      %3036 = vmatprep.subr.bf16.mxu0 0
      %3037 = vmatpush2.bf16.msra.mxu0 0
      %3038 = vmatprep.subr.bf16.mxu0 0
      %3039 = vmatpush2.bf16.msra.mxu0 0
      %3040 = vmatprep.subr.bf16.mxu0 0
      %3041 = vmatpush2.bf16.msra.mxu0 0
      %3042 = vmatprep.subr.bf16.mxu0 0
      %3043 = vmatpush2.bf16.msra.mxu0 0
      %3044 = vmatprep.mubr.bf16.mxu0 0
      %3045 = vmatmul.mubr.bf16.gmra.mxu0 %v2143
      %v3046 = vpop.f32.mrf.mxu0
      %v3047 = vadd.f32 0.0, %v3046
      %v3048 = vpop.f32.mrf.mxu0
      %v3049 = vpop.f32.mrf.mxu0
      %v3050 = vadd.f32 0.0, %v3049
      %v3051 = vpop.f32.mrf.mxu0
      %3052 = vmatprep.mubr.bf16.mxu0 0
      %3053 = vmatmul.mubr.bf16.gmra.mxu0 %v2144
      %v3054 = vpop.f32.mrf.mxu0
      %v3055 = vadd.f32 0.0, %v3054
      %v3056 = vpop.f32.mrf.mxu0
      %v3057 = vpop.f32.mrf.mxu0
      %v3058 = vadd.f32 0.0, %v3057
      %v3059 = vpop.f32.mrf.mxu0
      %3060 = vmatprep.mubr.bf16.mxu0 0
      %3061 = vmatmul.mubr.bf16.gmra.mxu0 %v2145
      %v3062 = vpop.f32.mrf.mxu0
      %v3063 = vadd.f32 0.0, %v3062
      %v3064 = vpop.f32.mrf.mxu0
      %v3065 = vpop.f32.mrf.mxu0
      %v3066 = vadd.f32 0.0, %v3065
      %v3067 = vpop.f32.mrf.mxu0
      %3068 = vmatprep.mubr.bf16.mxu0 0
      %3069 = vmatmul.mubr.bf16.gmra.mxu0 %v2146
      %v3070 = vpop.f32.mrf.mxu0
      %v3071 = vadd.f32 0.0, %v3070
      %v3072 = vpop.f32.mrf.mxu0
      %v3073 = vpop.f32.mrf.mxu0
      %v3074 = vadd.f32 0.0, %v3073
      %v3075 = vpop.f32.mrf.mxu0
      %3076 = vmatprep.mubr.bf16.mxu0 0
      %3077 = vmatmul.mubr.bf16.gmra.mxu0 %v2147
      %v3078 = vpop.f32.mrf.mxu0
      %v3079 = vadd.f32 0.0, %v3078
      %v3080 = vpop.f32.mrf.mxu0
      %v3081 = vpop.f32.mrf.mxu0
      %v3082 = vadd.f32 0.0, %v3081
      %v3083 = vpop.f32.mrf.mxu0
      %3084 = vmatprep.mubr.bf16.mxu0 0
      %3085 = vmatmul.mubr.bf16.gmra.mxu0 %v2148
      %v3086 = vpop.f32.mrf.mxu0
      %v3087 = vadd.f32 0.0, %v3086
      %v3088 = vpop.f32.mrf.mxu0
      %v3089 = vpop.f32.mrf.mxu0
      %v3090 = vadd.f32 0.0, %v3089
      %v3091 = vpop.f32.mrf.mxu0
      %3092 = vmatprep.mubr.bf16.mxu0 0
      %3093 = vmatmul.mubr.bf16.gmra.mxu0 %v2149
      %v3094 = vpop.f32.mrf.mxu0
      %v3095 = vadd.f32 0.0, %v3094
      %v3096 = vpop.f32.mrf.mxu0
      %v3097 = vpop.f32.mrf.mxu0
      %v3098 = vadd.f32 0.0, %v3097
      %v3099 = vpop.f32.mrf.mxu0
      %3100 = vmatprep.mubr.bf16.mxu0 0
      %3101 = vmatmul.mubr.bf16.gmra.mxu0 %v2150
      %v3102 = vpop.f32.mrf.mxu0
      %v3103 = vadd.f32 0.0, %v3102
      %v3104 = vpop.f32.mrf.mxu0
      %v3105 = vpop.f32.mrf.mxu0
      %v3106 = vadd.f32 0.0, %v3105
      %v3107 = vpop.f32.mrf.mxu0
      %3108 = vdwg.mxu0
      %v3109 = vpack.c.bf16 %v2759, %v2756
      %v3110 = vpack.c.bf16 %v2767, %v2764
      %v3111 = vpack.c.bf16 %v2775, %v2772
      %v3112 = vpack.c.bf16 %v2783, %v2780
      %v3113 = vpack.c.bf16 %v2791, %v2788
      %v3114 = vpack.c.bf16 %v2799, %v2796
      %v3115 = vpack.c.bf16 %v2807, %v2804
      %v3116 = vpack.c.bf16 %v2815, %v2812
      %v3117 = vpack.c.bf16 %v2856, %v2853
      %v3118 = vpack.c.bf16 %v2864, %v2861
      %v3119 = vpack.c.bf16 %v2872, %v2869
      %v3120 = vpack.c.bf16 %v2880, %v2877
      %v3121 = vpack.c.bf16 %v2888, %v2885
      %v3122 = vpack.c.bf16 %v2896, %v2893
      %v3123 = vpack.c.bf16 %v2904, %v2901
      %v3124 = vpack.c.bf16 %v2912, %v2909
      %v3125 = vpack.c.bf16 %v2953, %v2950
      %v3126 = vpack.c.bf16 %v2961, %v2958
      %v3127 = vpack.c.bf16 %v2969, %v2966
      %v3128 = vpack.c.bf16 %v2977, %v2974
      %v3129 = vpack.c.bf16 %v2985, %v2982
      %v3130 = vpack.c.bf16 %v2993, %v2990
      %v3131 = vpack.c.bf16 %v3001, %v2998
      %v3132 = vpack.c.bf16 %v3009, %v3006
      %v3133 = vpack.c.bf16 %v3050, %v3047
      %v3134 = vpack.c.bf16 %v3058, %v3055
      %v3135 = vpack.c.bf16 %v3066, %v3063
      %v3136 = vpack.c.bf16 %v3074, %v3071
      %v3137 = vpack.c.bf16 %v3082, %v3079
      %v3138 = vpack.c.bf16 %v3090, %v3087
      %v3139 = vpack.c.bf16 %v3098, %v3095
      %v3140 = vpack.c.bf16 %v3106, %v3103
      %3141 = vmatprep.subr.bf16.mxu0 0
      %3142 = vmatpush1.bf16.msra.mxu0 %v2327
      %3143 = vmatprep.subr.bf16.mxu0 0
      %3144 = vmatpush1.bf16.msra.mxu0 %v2326
      %3145 = vmatprep.subr.bf16.mxu0 0
      %3146 = vmatpush1.bf16.msra.mxu0 %v2325
      %3147 = vmatprep.subr.bf16.mxu0 0
      %3148 = vmatpush1.bf16.msra.mxu0 %v2324
      %3149 = vmatprep.subr.bf16.mxu0 0
      %3150 = vmatpush1.bf16.msra.mxu0 %v2323
      %3151 = vmatprep.subr.bf16.mxu0 0
      %3152 = vmatpush1.bf16.msra.mxu0 %v2322
      %3153 = vmatprep.subr.bf16.mxu0 0
      %3154 = vmatpush1.bf16.msra.mxu0 %v2321
      %3155 = vmatprep.subr.bf16.mxu0 0
      %3156 = vmatpush1.bf16.msra.mxu0 %v2320
      %3157 = vmatprep.subr.bf16.mxu0 0
      %3158 = vmatpush2.bf16.msra.mxu0 0
      %3159 = vmatprep.subr.bf16.mxu0 0
      %3160 = vmatpush2.bf16.msra.mxu0 0
      %3161 = vmatprep.subr.bf16.mxu0 0
      %3162 = vmatpush2.bf16.msra.mxu0 0
      %3163 = vmatprep.subr.bf16.mxu0 0
      %3164 = vmatpush2.bf16.msra.mxu0 0
      %3165 = vmatprep.subr.bf16.mxu0 0
      %3166 = vmatpush2.bf16.msra.mxu0 0
      %3167 = vmatprep.subr.bf16.mxu0 0
      %3168 = vmatpush2.bf16.msra.mxu0 0
      %3169 = vmatprep.subr.bf16.mxu0 0
      %3170 = vmatpush2.bf16.msra.mxu0 0
      %3171 = vmatprep.subr.bf16.mxu0 0
      %3172 = vmatpush2.bf16.msra.mxu0 0
      %3173 = vmatprep.mubr.bf16.mxu0 0
      %3174 = vmatmul.mubr.bf16.gmra.mxu0 %v3109
      %v3175 = vpop.f32.mrf.mxu0
      %v3176 = vadd.f32 %v1497, %v3175
      %v3177 = vpop.f32.mrf.mxu0
      %v3178 = vpop.f32.mrf.mxu0
      %v3179 = vadd.f32 %v1498, %v3178
      %v3180 = vpop.f32.mrf.mxu0
      %3181 = vmatprep.mubr.bf16.mxu0 0
      %3182 = vmatmul.mubr.bf16.gmra.mxu0 %v3110
      %v3183 = vpop.f32.mrf.mxu0
      %v3184 = vadd.f32 %v1499, %v3183
      %v3185 = vpop.f32.mrf.mxu0
      %v3186 = vpop.f32.mrf.mxu0
      %v3187 = vadd.f32 %v1500, %v3186
      %v3188 = vpop.f32.mrf.mxu0
      %3189 = vmatprep.mubr.bf16.mxu0 0
      %3190 = vmatmul.mubr.bf16.gmra.mxu0 %v3111
      %v3191 = vpop.f32.mrf.mxu0
      %v3192 = vadd.f32 %v1501, %v3191
      %v3193 = vpop.f32.mrf.mxu0
      %v3194 = vpop.f32.mrf.mxu0
      %v3195 = vadd.f32 %v1502, %v3194
      %v3196 = vpop.f32.mrf.mxu0
      %3197 = vmatprep.mubr.bf16.mxu0 0
      %3198 = vmatmul.mubr.bf16.gmra.mxu0 %v3112
      %v3199 = vpop.f32.mrf.mxu0
      %v3200 = vadd.f32 %v1503, %v3199
      %v3201 = vpop.f32.mrf.mxu0
      %v3202 = vpop.f32.mrf.mxu0
      %v3203 = vadd.f32 %v1504, %v3202
      %v3204 = vpop.f32.mrf.mxu0
      %3205 = vmatprep.mubr.bf16.mxu0 0
      %3206 = vmatmul.mubr.bf16.gmra.mxu0 %v3113
      %v3207 = vpop.f32.mrf.mxu0
      %v3208 = vadd.f32 %v1505, %v3207
      %v3209 = vpop.f32.mrf.mxu0
      %v3210 = vpop.f32.mrf.mxu0
      %v3211 = vadd.f32 %v1506, %v3210
      %v3212 = vpop.f32.mrf.mxu0
      %3213 = vmatprep.mubr.bf16.mxu0 0
      %3214 = vmatmul.mubr.bf16.gmra.mxu0 %v3114
      %v3215 = vpop.f32.mrf.mxu0
      %v3216 = vadd.f32 %v1507, %v3215
      %v3217 = vpop.f32.mrf.mxu0
      %v3218 = vpop.f32.mrf.mxu0
      %v3219 = vadd.f32 %v1508, %v3218
      %v3220 = vpop.f32.mrf.mxu0
      %3221 = vmatprep.mubr.bf16.mxu0 0
      %3222 = vmatmul.mubr.bf16.gmra.mxu0 %v3115
      %v3223 = vpop.f32.mrf.mxu0
      %v3224 = vadd.f32 %v1509, %v3223
      %v3225 = vpop.f32.mrf.mxu0
      %v3226 = vpop.f32.mrf.mxu0
      %v3227 = vadd.f32 %v1510, %v3226
      %v3228 = vpop.f32.mrf.mxu0
      %3229 = vmatprep.mubr.bf16.mxu0 0
      %3230 = vmatmul.mubr.bf16.gmra.mxu0 %v3116
      %v3231 = vpop.f32.mrf.mxu0
      %v3232 = vadd.f32 %v1511, %v3231
      %v3233 = vpop.f32.mrf.mxu0
      %v3234 = vpop.f32.mrf.mxu0
      %v3235 = vadd.f32 %v1512, %v3234
      %v3236 = vpop.f32.mrf.mxu0
      %3237 = vmatprep.mubr.bf16.mxu0 0
      %3238 = vmatmul.mubr.bf16.gmra.mxu0 %v3117
      %v3239 = vpop.f32.mrf.mxu0
      %v3240 = vadd.f32 %v1513, %v3239
      %v3241 = vpop.f32.mrf.mxu0
      %v3242 = vpop.f32.mrf.mxu0
      %v3243 = vadd.f32 %v1514, %v3242
      %v3244 = vpop.f32.mrf.mxu0
      %3245 = vmatprep.mubr.bf16.mxu0 0
      %3246 = vmatmul.mubr.bf16.gmra.mxu0 %v3118
      %v3247 = vpop.f32.mrf.mxu0
      %v3248 = vadd.f32 %v1515, %v3247
      %v3249 = vpop.f32.mrf.mxu0
      %v3250 = vpop.f32.mrf.mxu0
      %v3251 = vadd.f32 %v1516, %v3250
      %v3252 = vpop.f32.mrf.mxu0
      %3253 = vmatprep.mubr.bf16.mxu0 0
      %3254 = vmatmul.mubr.bf16.gmra.mxu0 %v3119
      %v3255 = vpop.f32.mrf.mxu0
      %v3256 = vadd.f32 %v1517, %v3255
      %v3257 = vpop.f32.mrf.mxu0
      %v3258 = vpop.f32.mrf.mxu0
      %v3259 = vadd.f32 %v1518, %v3258
      %v3260 = vpop.f32.mrf.mxu0
      %3261 = vmatprep.mubr.bf16.mxu0 0
      %3262 = vmatmul.mubr.bf16.gmra.mxu0 %v3120
      %v3263 = vpop.f32.mrf.mxu0
      %v3264 = vadd.f32 %v1519, %v3263
      %v3265 = vpop.f32.mrf.mxu0
      %v3266 = vpop.f32.mrf.mxu0
      %v3267 = vadd.f32 %v1520, %v3266
      %v3268 = vpop.f32.mrf.mxu0
      %3269 = vmatprep.mubr.bf16.mxu0 0
      %3270 = vmatmul.mubr.bf16.gmra.mxu0 %v3121
      %v3271 = vpop.f32.mrf.mxu0
      %v3272 = vadd.f32 %v1521, %v3271
      %v3273 = vpop.f32.mrf.mxu0
      %v3274 = vpop.f32.mrf.mxu0
      %v3275 = vadd.f32 %v1522, %v3274
      %v3276 = vpop.f32.mrf.mxu0
      %3277 = vmatprep.mubr.bf16.mxu0 0
      %3278 = vmatmul.mubr.bf16.gmra.mxu0 %v3122
      %v3279 = vpop.f32.mrf.mxu0
      %v3280 = vadd.f32 %v1523, %v3279
      %v3281 = vpop.f32.mrf.mxu0
      %v3282 = vpop.f32.mrf.mxu0
      %v3283 = vadd.f32 %v1524, %v3282
      %v3284 = vpop.f32.mrf.mxu0
      %3285 = vmatprep.mubr.bf16.mxu0 0
      %3286 = vmatmul.mubr.bf16.gmra.mxu0 %v3123
      %v3287 = vpop.f32.mrf.mxu0
      %v3288 = vadd.f32 %v1525, %v3287
      %v3289 = vpop.f32.mrf.mxu0
      %v3290 = vpop.f32.mrf.mxu0
      %v3291 = vadd.f32 %v1526, %v3290
      %v3292 = vpop.f32.mrf.mxu0
      %3293 = vmatprep.mubr.bf16.mxu0 0
      %3294 = vmatmul.mubr.bf16.gmra.mxu0 %v3124
      %v3295 = vpop.f32.mrf.mxu0
      %v3296 = vadd.f32 %v1527, %v3295
      %v3297 = vpop.f32.mrf.mxu0
      %v3298 = vpop.f32.mrf.mxu0
      %v3299 = vadd.f32 %v1528, %v3298
      %v3300 = vpop.f32.mrf.mxu0
      %3301 = vmatprep.mubr.bf16.mxu0 0
      %3302 = vmatmul.mubr.bf16.gmra.mxu0 %v3125
      %v3303 = vpop.f32.mrf.mxu0
      %v3304 = vadd.f32 %v1529, %v3303
      %v3305 = vpop.f32.mrf.mxu0
      %v3306 = vpop.f32.mrf.mxu0
      %v3307 = vadd.f32 %v1530, %v3306
      %v3308 = vpop.f32.mrf.mxu0
      %3309 = vmatprep.mubr.bf16.mxu0 0
      %3310 = vmatmul.mubr.bf16.gmra.mxu0 %v3126
      %v3311 = vpop.f32.mrf.mxu0
      %v3312 = vadd.f32 %v1531, %v3311
      %v3313 = vpop.f32.mrf.mxu0
      %v3314 = vpop.f32.mrf.mxu0
      %v3315 = vadd.f32 %v1532, %v3314
      %v3316 = vpop.f32.mrf.mxu0
      %3317 = vmatprep.mubr.bf16.mxu0 0
      %3318 = vmatmul.mubr.bf16.gmra.mxu0 %v3127
      %v3319 = vpop.f32.mrf.mxu0
      %v3320 = vadd.f32 %v1533, %v3319
      %v3321 = vpop.f32.mrf.mxu0
      %v3322 = vpop.f32.mrf.mxu0
      %v3323 = vadd.f32 %v1534, %v3322
      %v3324 = vpop.f32.mrf.mxu0
      %3325 = vmatprep.mubr.bf16.mxu0 0
      %3326 = vmatmul.mubr.bf16.gmra.mxu0 %v3128
      %v3327 = vpop.f32.mrf.mxu0
      %v3328 = vadd.f32 %v1535, %v3327
      %v3329 = vpop.f32.mrf.mxu0
      %v3330 = vpop.f32.mrf.mxu0
      %v3331 = vadd.f32 %v1536, %v3330
      %v3332 = vpop.f32.mrf.mxu0
      %3333 = vmatprep.mubr.bf16.mxu0 0
      %3334 = vmatmul.mubr.bf16.gmra.mxu0 %v3129
      %v3335 = vpop.f32.mrf.mxu0
      %v3336 = vadd.f32 %v1537, %v3335
      %v3337 = vpop.f32.mrf.mxu0
      %v3338 = vpop.f32.mrf.mxu0
      %v3339 = vadd.f32 %v1538, %v3338
      %v3340 = vpop.f32.mrf.mxu0
      %3341 = vmatprep.mubr.bf16.mxu0 0
      %3342 = vmatmul.mubr.bf16.gmra.mxu0 %v3130
      %v3343 = vpop.f32.mrf.mxu0
      %v3344 = vadd.f32 %v1539, %v3343
      %v3345 = vpop.f32.mrf.mxu0
      %v3346 = vpop.f32.mrf.mxu0
      %v3347 = vadd.f32 %v1540, %v3346
      %v3348 = vpop.f32.mrf.mxu0
      %3349 = vmatprep.mubr.bf16.mxu0 0
      %3350 = vmatmul.mubr.bf16.gmra.mxu0 %v3131
      %v3351 = vpop.f32.mrf.mxu0
      %v3352 = vadd.f32 %v1541, %v3351
      %v3353 = vpop.f32.mrf.mxu0
      %v3354 = vpop.f32.mrf.mxu0
      %v3355 = vadd.f32 %v1542, %v3354
      %v3356 = vpop.f32.mrf.mxu0
      %3357 = vmatprep.mubr.bf16.mxu0 0
      %3358 = vmatmul.mubr.bf16.gmra.mxu0 %v3132
      %v3359 = vpop.f32.mrf.mxu0
      %v3360 = vadd.f32 %v1543, %v3359
      %v3361 = vpop.f32.mrf.mxu0
      %v3362 = vpop.f32.mrf.mxu0
      %v3363 = vadd.f32 %v1544, %v3362
      %v3364 = vpop.f32.mrf.mxu0
      %3365 = vmatprep.mubr.bf16.mxu0 0
      %3366 = vmatmul.mubr.bf16.gmra.mxu0 %v3133
      %v3367 = vpop.f32.mrf.mxu0
      %v3368 = vadd.f32 %v1545, %v3367
      %v3369 = vpop.f32.mrf.mxu0
      %v3370 = vpop.f32.mrf.mxu0
      %v3371 = vadd.f32 %v1546, %v3370
      %v3372 = vpop.f32.mrf.mxu0
      %3373 = vmatprep.mubr.bf16.mxu0 0
      %3374 = vmatmul.mubr.bf16.gmra.mxu0 %v3134
      %v3375 = vpop.f32.mrf.mxu0
      %v3376 = vadd.f32 %v1547, %v3375
      %v3377 = vpop.f32.mrf.mxu0
      %v3378 = vpop.f32.mrf.mxu0
      %v3379 = vadd.f32 %v1548, %v3378
      %v3380 = vpop.f32.mrf.mxu0
      %3381 = vmatprep.mubr.bf16.mxu0 0
      %3382 = vmatmul.mubr.bf16.gmra.mxu0 %v3135
      %v3383 = vpop.f32.mrf.mxu0
      %v3384 = vadd.f32 %v1549, %v3383
      %v3385 = vpop.f32.mrf.mxu0
      %v3386 = vpop.f32.mrf.mxu0
      %v3387 = vadd.f32 %v1550, %v3386
      %v3388 = vpop.f32.mrf.mxu0
      %3389 = vmatprep.mubr.bf16.mxu0 0
      %3390 = vmatmul.mubr.bf16.gmra.mxu0 %v3136
      %v3391 = vpop.f32.mrf.mxu0
      %v3392 = vadd.f32 %v1551, %v3391
      %v3393 = vpop.f32.mrf.mxu0
      %v3394 = vpop.f32.mrf.mxu0
      %v3395 = vadd.f32 %v1552, %v3394
      %v3396 = vpop.f32.mrf.mxu0
      %3397 = vmatprep.mubr.bf16.mxu0 0
      %3398 = vmatmul.mubr.bf16.gmra.mxu0 %v3137
      %v3399 = vpop.f32.mrf.mxu0
      %v3400 = vadd.f32 %v1553, %v3399
      %v3401 = vpop.f32.mrf.mxu0
      %v3402 = vpop.f32.mrf.mxu0
      %v3403 = vadd.f32 %v1554, %v3402
      %v3404 = vpop.f32.mrf.mxu0
      %3405 = vmatprep.mubr.bf16.mxu0 0
      %3406 = vmatmul.mubr.bf16.gmra.mxu0 %v3138
      %v3407 = vpop.f32.mrf.mxu0
      %v3408 = vadd.f32 %v1555, %v3407
      %v3409 = vpop.f32.mrf.mxu0
      %v3410 = vpop.f32.mrf.mxu0
      %v3411 = vadd.f32 %v1556, %v3410
      %v3412 = vpop.f32.mrf.mxu0
      %3413 = vmatprep.mubr.bf16.mxu0 0
      %3414 = vmatmul.mubr.bf16.gmra.mxu0 %v3139
      %v3415 = vpop.f32.mrf.mxu0
      %v3416 = vadd.f32 %v1557, %v3415
      %v3417 = vpop.f32.mrf.mxu0
      %v3418 = vpop.f32.mrf.mxu0
      %v3419 = vadd.f32 %v1558, %v3418
      %v3420 = vpop.f32.mrf.mxu0
      %3421 = vmatprep.mubr.bf16.mxu0 0
      %3422 = vmatmul.mubr.bf16.gmra.mxu0 %v3140
      %v3423 = vpop.f32.mrf.mxu0
      %v3424 = vadd.f32 %v1559, %v3423
      %v3425 = vpop.f32.mrf.mxu0
      %v3426 = vpop.f32.mrf.mxu0
      %v3427 = vadd.f32 %v1560, %v3426
      %v3428 = vpop.f32.mrf.mxu0
      %3429 = vdwg.mxu0
      %v3430 = vmax.f32 %v3176, 0.0
      %v3431 = vmax.f32 %v3179, 0.0
      %v3432 = vmax.f32 %v3184, 0.0
      %v3433 = vmax.f32 %v3187, 0.0
      %v3434 = vmax.f32 %v3192, 0.0
      %v3435 = vmax.f32 %v3195, 0.0
      %v3436 = vmax.f32 %v3200, 0.0
      %v3437 = vmax.f32 %v3203, 0.0
      %v3438 = vmax.f32 %v3208, 0.0
      %v3439 = vmax.f32 %v3211, 0.0
      %v3440 = vmax.f32 %v3216, 0.0
      %v3441 = vmax.f32 %v3219, 0.0
      %v3442 = vmax.f32 %v3224, 0.0
      %v3443 = vmax.f32 %v3227, 0.0
      %v3444 = vmax.f32 %v3232, 0.0
      %v3445 = vmax.f32 %v3235, 0.0
      %v3446 = vmax.f32 %v3240, 0.0
      %v3447 = vmax.f32 %v3243, 0.0
      %v3448 = vmax.f32 %v3248, 0.0
      %v3449 = vmax.f32 %v3251, 0.0
      %v3450 = vmax.f32 %v3256, 0.0
      %v3451 = vmax.f32 %v3259, 0.0
      %v3452 = vmax.f32 %v3264, 0.0
      %v3453 = vmax.f32 %v3267, 0.0
      %v3454 = vmax.f32 %v3272, 0.0
      %v3455 = vmax.f32 %v3275, 0.0
      %v3456 = vmax.f32 %v3280, 0.0
      %v3457 = vmax.f32 %v3283, 0.0
      %v3458 = vmax.f32 %v3288, 0.0
      %v3459 = vmax.f32 %v3291, 0.0
      %v3460 = vmax.f32 %v3296, 0.0
      %v3461 = vmax.f32 %v3299, 0.0
      %v3462 = vmax.f32 %v3304, 0.0
      %v3463 = vmax.f32 %v3307, 0.0
      %v3464 = vmax.f32 %v3312, 0.0
      %v3465 = vmax.f32 %v3315, 0.0
      %v3466 = vmax.f32 %v3320, 0.0
      %v3467 = vmax.f32 %v3323, 0.0
      %v3468 = vmax.f32 %v3328, 0.0
      %v3469 = vmax.f32 %v3331, 0.0
      %v3470 = vmax.f32 %v3336, 0.0
      %v3471 = vmax.f32 %v3339, 0.0
      %v3472 = vmax.f32 %v3344, 0.0
      %v3473 = vmax.f32 %v3347, 0.0
      %v3474 = vmax.f32 %v3352, 0.0
      %v3475 = vmax.f32 %v3355, 0.0
      %v3476 = vmax.f32 %v3360, 0.0
      %v3477 = vmax.f32 %v3363, 0.0
      %v3478 = vmax.f32 %v3368, 0.0
      %v3479 = vmax.f32 %v3371, 0.0
      %v3480 = vmax.f32 %v3376, 0.0
      %v3481 = vmax.f32 %v3379, 0.0
      %v3482 = vmax.f32 %v3384, 0.0
      %v3483 = vmax.f32 %v3387, 0.0
      %v3484 = vmax.f32 %v3392, 0.0
      %v3485 = vmax.f32 %v3395, 0.0
      %v3486 = vmax.f32 %v3400, 0.0
      %v3487 = vmax.f32 %v3403, 0.0
      %v3488 = vmax.f32 %v3408, 0.0
      %v3489 = vmax.f32 %v3411, 0.0
      %v3490 = vmax.f32 %v3416, 0.0
      %v3491 = vmax.f32 %v3419, 0.0
      %v3492 = vmax.f32 %v3424, 0.0
      %v3493 = vmax.f32 %v3427, 0.0
      %v3494 = vpack.c.bf16 %v3431, %v3430
      %v3495 = vpack.c.bf16 %v3433, %v3432
      %v3496 = vpack.c.bf16 %v3435, %v3434
      %v3497 = vpack.c.bf16 %v3437, %v3436
      %v3498 = vpack.c.bf16 %v3439, %v3438
      %v3499 = vpack.c.bf16 %v3441, %v3440
      %v3500 = vpack.c.bf16 %v3443, %v3442
      %v3501 = vpack.c.bf16 %v3445, %v3444
      %v3502 = vpack.c.bf16 %v3447, %v3446
      %v3503 = vpack.c.bf16 %v3449, %v3448
      %v3504 = vpack.c.bf16 %v3451, %v3450
      %v3505 = vpack.c.bf16 %v3453, %v3452
      %v3506 = vpack.c.bf16 %v3455, %v3454
      %v3507 = vpack.c.bf16 %v3457, %v3456
      %v3508 = vpack.c.bf16 %v3459, %v3458
      %v3509 = vpack.c.bf16 %v3461, %v3460
      %v3510 = vpack.c.bf16 %v3463, %v3462
      %v3511 = vpack.c.bf16 %v3465, %v3464
      %v3512 = vpack.c.bf16 %v3467, %v3466
      %v3513 = vpack.c.bf16 %v3469, %v3468
      %v3514 = vpack.c.bf16 %v3471, %v3470
      %v3515 = vpack.c.bf16 %v3473, %v3472
      %v3516 = vpack.c.bf16 %v3475, %v3474
      %v3517 = vpack.c.bf16 %v3477, %v3476
      %v3518 = vpack.c.bf16 %v3479, %v3478
      %v3519 = vpack.c.bf16 %v3481, %v3480
      %v3520 = vpack.c.bf16 %v3483, %v3482
      %v3521 = vpack.c.bf16 %v3485, %v3484
      %v3522 = vpack.c.bf16 %v3487, %v3486
      %v3523 = vpack.c.bf16 %v3489, %v3488
      %v3524 = vpack.c.bf16 %v3491, %v3490
      %v3525 = vpack.c.bf16 %v3493, %v3492
      %3526 = vmatprep.subr.bf16.mxu0 0
      %3527 = vmatpush1.bf16.msra.mxu0 %v3501
      %3528 = vmatprep.subr.bf16.mxu0 0
      %3529 = vmatpush1.bf16.msra.mxu0 %v3500
      %3530 = vmatprep.subr.bf16.mxu0 0
      %3531 = vmatpush1.bf16.msra.mxu0 %v3499
      %3532 = vmatprep.subr.bf16.mxu0 0
      %3533 = vmatpush1.bf16.msra.mxu0 %v3498
      %3534 = vmatprep.subr.bf16.mxu0 0
      %3535 = vmatpush1.bf16.msra.mxu0 %v3497
      %3536 = vmatprep.subr.bf16.mxu0 0
      %3537 = vmatpush1.bf16.msra.mxu0 %v3496
      %3538 = vmatprep.subr.bf16.mxu0 0
      %3539 = vmatpush1.bf16.msra.mxu0 %v3495
      %3540 = vmatprep.subr.bf16.mxu0 0
      %3541 = vmatpush1.bf16.msra.mxu0 %v3494
      %3542 = vmatprep.subr.bf16.mxu0 0
      %3543 = vmatpush2.bf16.msra.mxu0 0
      %3544 = vmatprep.subr.bf16.mxu0 0
      %3545 = vmatpush2.bf16.msra.mxu0 0
      %3546 = vmatprep.subr.bf16.mxu0 0
      %3547 = vmatpush2.bf16.msra.mxu0 0
      %3548 = vmatprep.subr.bf16.mxu0 0
      %3549 = vmatpush2.bf16.msra.mxu0 0
      %3550 = vmatprep.subr.bf16.mxu0 0
      %3551 = vmatpush2.bf16.msra.mxu0 0
      %3552 = vmatprep.subr.bf16.mxu0 0
      %3553 = vmatpush2.bf16.msra.mxu0 0
      %3554 = vmatprep.subr.bf16.mxu0 0
      %3555 = vmatpush2.bf16.msra.mxu0 0
      %3556 = vmatprep.subr.bf16.mxu0 0
      %3557 = vmatpush2.bf16.msra.mxu0 0
      %3558 = vmatprep.mubr.bf16.mxu0 0
      %3559 = vmatmul.mubr.bf16.gmra.mxu0 %v1657
      %v3560 = vpop.f32.mrf.mxu0
      %v3561 = vadd.f32 0.0, %v3560
      %v3562 = vpop.f32.mrf.mxu0
      %v3563 = vpop.f32.mrf.mxu0
      %v3564 = vadd.f32 0.0, %v3563
      %v3565 = vpop.f32.mrf.mxu0
      %3566 = vmatprep.mubr.bf16.mxu0 0
      %3567 = vmatmul.mubr.bf16.gmra.mxu0 %v1658
      %v3568 = vpop.f32.mrf.mxu0
      %v3569 = vadd.f32 0.0, %v3568
      %v3570 = vpop.f32.mrf.mxu0
      %v3571 = vpop.f32.mrf.mxu0
      %v3572 = vadd.f32 0.0, %v3571
      %v3573 = vpop.f32.mrf.mxu0
      %3574 = vmatprep.mubr.bf16.mxu0 0
      %3575 = vmatmul.mubr.bf16.gmra.mxu0 %v1659
      %v3576 = vpop.f32.mrf.mxu0
      %v3577 = vadd.f32 0.0, %v3576
      %v3578 = vpop.f32.mrf.mxu0
      %v3579 = vpop.f32.mrf.mxu0
      %v3580 = vadd.f32 0.0, %v3579
      %v3581 = vpop.f32.mrf.mxu0
      %3582 = vmatprep.mubr.bf16.mxu0 0
      %3583 = vmatmul.mubr.bf16.gmra.mxu0 %v1660
      %v3584 = vpop.f32.mrf.mxu0
      %v3585 = vadd.f32 0.0, %v3584
      %v3586 = vpop.f32.mrf.mxu0
      %v3587 = vpop.f32.mrf.mxu0
      %v3588 = vadd.f32 0.0, %v3587
      %v3589 = vpop.f32.mrf.mxu0
      %3590 = vmatprep.mubr.bf16.mxu0 0
      %3591 = vmatmul.mubr.bf16.gmra.mxu0 %v1661
      %v3592 = vpop.f32.mrf.mxu0
      %v3593 = vadd.f32 0.0, %v3592
      %v3594 = vpop.f32.mrf.mxu0
      %v3595 = vpop.f32.mrf.mxu0
      %v3596 = vadd.f32 0.0, %v3595
      %v3597 = vpop.f32.mrf.mxu0
      %3598 = vmatprep.mubr.bf16.mxu0 0
      %3599 = vmatmul.mubr.bf16.gmra.mxu0 %v1662
      %v3600 = vpop.f32.mrf.mxu0
      %v3601 = vadd.f32 0.0, %v3600
      %v3602 = vpop.f32.mrf.mxu0
      %v3603 = vpop.f32.mrf.mxu0
      %v3604 = vadd.f32 0.0, %v3603
      %v3605 = vpop.f32.mrf.mxu0
      %3606 = vmatprep.mubr.bf16.mxu0 0
      %3607 = vmatmul.mubr.bf16.gmra.mxu0 %v1663
      %v3608 = vpop.f32.mrf.mxu0
      %v3609 = vadd.f32 0.0, %v3608
      %v3610 = vpop.f32.mrf.mxu0
      %v3611 = vpop.f32.mrf.mxu0
      %v3612 = vadd.f32 0.0, %v3611
      %v3613 = vpop.f32.mrf.mxu0
      %3614 = vmatprep.mubr.bf16.mxu0 0
      %3615 = vmatmul.mubr.bf16.gmra.mxu0 %v1664
      %v3616 = vpop.f32.mrf.mxu0
      %v3617 = vadd.f32 0.0, %v3616
      %v3618 = vpop.f32.mrf.mxu0
      %v3619 = vpop.f32.mrf.mxu0
      %v3620 = vadd.f32 0.0, %v3619
      %v3621 = vpop.f32.mrf.mxu0
      %3622 = vdwg.mxu0
      %3623 = vmatprep.subr.bf16.mxu0 0
      %3624 = vmatpush1.bf16.msra.mxu0 %v3509
      %3625 = vmatprep.subr.bf16.mxu0 0
      %3626 = vmatpush1.bf16.msra.mxu0 %v3508
      %3627 = vmatprep.subr.bf16.mxu0 0
      %3628 = vmatpush1.bf16.msra.mxu0 %v3507
      %3629 = vmatprep.subr.bf16.mxu0 0
      %3630 = vmatpush1.bf16.msra.mxu0 %v3506
      %3631 = vmatprep.subr.bf16.mxu0 0
      %3632 = vmatpush1.bf16.msra.mxu0 %v3505
      %3633 = vmatprep.subr.bf16.mxu0 0
      %3634 = vmatpush1.bf16.msra.mxu0 %v3504
      %3635 = vmatprep.subr.bf16.mxu0 0
      %3636 = vmatpush1.bf16.msra.mxu0 %v3503
      %3637 = vmatprep.subr.bf16.mxu0 0
      %3638 = vmatpush1.bf16.msra.mxu0 %v3502
      %3639 = vmatprep.subr.bf16.mxu0 0
      %3640 = vmatpush2.bf16.msra.mxu0 0
      %3641 = vmatprep.subr.bf16.mxu0 0
      %3642 = vmatpush2.bf16.msra.mxu0 0
      %3643 = vmatprep.subr.bf16.mxu0 0
      %3644 = vmatpush2.bf16.msra.mxu0 0
      %3645 = vmatprep.subr.bf16.mxu0 0
      %3646 = vmatpush2.bf16.msra.mxu0 0
      %3647 = vmatprep.subr.bf16.mxu0 0
      %3648 = vmatpush2.bf16.msra.mxu0 0
      %3649 = vmatprep.subr.bf16.mxu0 0
      %3650 = vmatpush2.bf16.msra.mxu0 0
      %3651 = vmatprep.subr.bf16.mxu0 0
      %3652 = vmatpush2.bf16.msra.mxu0 0
      %3653 = vmatprep.subr.bf16.mxu0 0
      %3654 = vmatpush2.bf16.msra.mxu0 0
      %3655 = vmatprep.mubr.bf16.mxu0 0
      %3656 = vmatmul.mubr.bf16.gmra.mxu0 %v1819
      %v3657 = vpop.f32.mrf.mxu0
      %v3658 = vadd.f32 0.0, %v3657
      %v3659 = vpop.f32.mrf.mxu0
      %v3660 = vpop.f32.mrf.mxu0
      %v3661 = vadd.f32 0.0, %v3660
      %v3662 = vpop.f32.mrf.mxu0
      %3663 = vmatprep.mubr.bf16.mxu0 0
      %3664 = vmatmul.mubr.bf16.gmra.mxu0 %v1820
      %v3665 = vpop.f32.mrf.mxu0
      %v3666 = vadd.f32 0.0, %v3665
      %v3667 = vpop.f32.mrf.mxu0
      %v3668 = vpop.f32.mrf.mxu0
      %v3669 = vadd.f32 0.0, %v3668
      %v3670 = vpop.f32.mrf.mxu0
      %3671 = vmatprep.mubr.bf16.mxu0 0
      %3672 = vmatmul.mubr.bf16.gmra.mxu0 %v1821
      %v3673 = vpop.f32.mrf.mxu0
      %v3674 = vadd.f32 0.0, %v3673
      %v3675 = vpop.f32.mrf.mxu0
      %v3676 = vpop.f32.mrf.mxu0
      %v3677 = vadd.f32 0.0, %v3676
      %v3678 = vpop.f32.mrf.mxu0
      %3679 = vmatprep.mubr.bf16.mxu0 0
      %3680 = vmatmul.mubr.bf16.gmra.mxu0 %v1822
      %v3681 = vpop.f32.mrf.mxu0
      %v3682 = vadd.f32 0.0, %v3681
      %v3683 = vpop.f32.mrf.mxu0
      %v3684 = vpop.f32.mrf.mxu0
      %v3685 = vadd.f32 0.0, %v3684
      %v3686 = vpop.f32.mrf.mxu0
      %3687 = vmatprep.mubr.bf16.mxu0 0
      %3688 = vmatmul.mubr.bf16.gmra.mxu0 %v1823
      %v3689 = vpop.f32.mrf.mxu0
      %v3690 = vadd.f32 0.0, %v3689
      %v3691 = vpop.f32.mrf.mxu0
      %v3692 = vpop.f32.mrf.mxu0
      %v3693 = vadd.f32 0.0, %v3692
      %v3694 = vpop.f32.mrf.mxu0
      %3695 = vmatprep.mubr.bf16.mxu0 0
      %3696 = vmatmul.mubr.bf16.gmra.mxu0 %v1824
      %v3697 = vpop.f32.mrf.mxu0
      %v3698 = vadd.f32 0.0, %v3697
      %v3699 = vpop.f32.mrf.mxu0
      %v3700 = vpop.f32.mrf.mxu0
      %v3701 = vadd.f32 0.0, %v3700
      %v3702 = vpop.f32.mrf.mxu0
      %3703 = vmatprep.mubr.bf16.mxu0 0
      %3704 = vmatmul.mubr.bf16.gmra.mxu0 %v1825
      %v3705 = vpop.f32.mrf.mxu0
      %v3706 = vadd.f32 0.0, %v3705
      %v3707 = vpop.f32.mrf.mxu0
      %v3708 = vpop.f32.mrf.mxu0
      %v3709 = vadd.f32 0.0, %v3708
      %v3710 = vpop.f32.mrf.mxu0
      %3711 = vmatprep.mubr.bf16.mxu0 0
      %3712 = vmatmul.mubr.bf16.gmra.mxu0 %v1826
      %v3713 = vpop.f32.mrf.mxu0
      %v3714 = vadd.f32 0.0, %v3713
      %v3715 = vpop.f32.mrf.mxu0
      %v3716 = vpop.f32.mrf.mxu0
      %v3717 = vadd.f32 0.0, %v3716
      %v3718 = vpop.f32.mrf.mxu0
      %3719 = vdwg.mxu0
      %3720 = vmatprep.subr.bf16.mxu0 0
      %3721 = vmatpush1.bf16.msra.mxu0 %v3517
      %3722 = vmatprep.subr.bf16.mxu0 0
      %3723 = vmatpush1.bf16.msra.mxu0 %v3516
      %3724 = vmatprep.subr.bf16.mxu0 0
      %3725 = vmatpush1.bf16.msra.mxu0 %v3515
      %3726 = vmatprep.subr.bf16.mxu0 0
      %3727 = vmatpush1.bf16.msra.mxu0 %v3514
      %3728 = vmatprep.subr.bf16.mxu0 0
      %3729 = vmatpush1.bf16.msra.mxu0 %v3513
      %3730 = vmatprep.subr.bf16.mxu0 0
      %3731 = vmatpush1.bf16.msra.mxu0 %v3512
      %3732 = vmatprep.subr.bf16.mxu0 0
      %3733 = vmatpush1.bf16.msra.mxu0 %v3511
      %3734 = vmatprep.subr.bf16.mxu0 0
      %3735 = vmatpush1.bf16.msra.mxu0 %v3510
      %3736 = vmatprep.subr.bf16.mxu0 0
      %3737 = vmatpush2.bf16.msra.mxu0 0
      %3738 = vmatprep.subr.bf16.mxu0 0
      %3739 = vmatpush2.bf16.msra.mxu0 0
      %3740 = vmatprep.subr.bf16.mxu0 0
      %3741 = vmatpush2.bf16.msra.mxu0 0
      %3742 = vmatprep.subr.bf16.mxu0 0
      %3743 = vmatpush2.bf16.msra.mxu0 0
      %3744 = vmatprep.subr.bf16.mxu0 0
      %3745 = vmatpush2.bf16.msra.mxu0 0
      %3746 = vmatprep.subr.bf16.mxu0 0
      %3747 = vmatpush2.bf16.msra.mxu0 0
      %3748 = vmatprep.subr.bf16.mxu0 0
      %3749 = vmatpush2.bf16.msra.mxu0 0
      %3750 = vmatprep.subr.bf16.mxu0 0
      %3751 = vmatpush2.bf16.msra.mxu0 0
      %3752 = vmatprep.mubr.bf16.mxu0 0
      %3753 = vmatmul.mubr.bf16.gmra.mxu0 %v1981
      %v3754 = vpop.f32.mrf.mxu0
      %v3755 = vadd.f32 0.0, %v3754
      %v3756 = vpop.f32.mrf.mxu0
      %v3757 = vpop.f32.mrf.mxu0
      %v3758 = vadd.f32 0.0, %v3757
      %v3759 = vpop.f32.mrf.mxu0
      %3760 = vmatprep.mubr.bf16.mxu0 0
      %3761 = vmatmul.mubr.bf16.gmra.mxu0 %v1982
      %v3762 = vpop.f32.mrf.mxu0
      %v3763 = vadd.f32 0.0, %v3762
      %v3764 = vpop.f32.mrf.mxu0
      %v3765 = vpop.f32.mrf.mxu0
      %v3766 = vadd.f32 0.0, %v3765
      %v3767 = vpop.f32.mrf.mxu0
      %3768 = vmatprep.mubr.bf16.mxu0 0
      %3769 = vmatmul.mubr.bf16.gmra.mxu0 %v1983
      %v3770 = vpop.f32.mrf.mxu0
      %v3771 = vadd.f32 0.0, %v3770
      %v3772 = vpop.f32.mrf.mxu0
      %v3773 = vpop.f32.mrf.mxu0
      %v3774 = vadd.f32 0.0, %v3773
      %v3775 = vpop.f32.mrf.mxu0
      %3776 = vmatprep.mubr.bf16.mxu0 0
      %3777 = vmatmul.mubr.bf16.gmra.mxu0 %v1984
      %v3778 = vpop.f32.mrf.mxu0
      %v3779 = vadd.f32 0.0, %v3778
      %v3780 = vpop.f32.mrf.mxu0
      %v3781 = vpop.f32.mrf.mxu0
      %v3782 = vadd.f32 0.0, %v3781
      %v3783 = vpop.f32.mrf.mxu0
      %3784 = vmatprep.mubr.bf16.mxu0 0
      %3785 = vmatmul.mubr.bf16.gmra.mxu0 %v1985
      %v3786 = vpop.f32.mrf.mxu0
      %v3787 = vadd.f32 0.0, %v3786
      %v3788 = vpop.f32.mrf.mxu0
      %v3789 = vpop.f32.mrf.mxu0
      %v3790 = vadd.f32 0.0, %v3789
      %v3791 = vpop.f32.mrf.mxu0
      %3792 = vmatprep.mubr.bf16.mxu0 0
      %3793 = vmatmul.mubr.bf16.gmra.mxu0 %v1986
      %v3794 = vpop.f32.mrf.mxu0
      %v3795 = vadd.f32 0.0, %v3794
      %v3796 = vpop.f32.mrf.mxu0
      %v3797 = vpop.f32.mrf.mxu0
      %v3798 = vadd.f32 0.0, %v3797
      %v3799 = vpop.f32.mrf.mxu0
      %3800 = vmatprep.mubr.bf16.mxu0 0
      %3801 = vmatmul.mubr.bf16.gmra.mxu0 %v1987
      %v3802 = vpop.f32.mrf.mxu0
      %v3803 = vadd.f32 0.0, %v3802
      %v3804 = vpop.f32.mrf.mxu0
      %v3805 = vpop.f32.mrf.mxu0
      %v3806 = vadd.f32 0.0, %v3805
      %v3807 = vpop.f32.mrf.mxu0
      %3808 = vmatprep.mubr.bf16.mxu0 0
      %3809 = vmatmul.mubr.bf16.gmra.mxu0 %v1988
      %v3810 = vpop.f32.mrf.mxu0
      %v3811 = vadd.f32 0.0, %v3810
      %v3812 = vpop.f32.mrf.mxu0
      %v3813 = vpop.f32.mrf.mxu0
      %v3814 = vadd.f32 0.0, %v3813
      %v3815 = vpop.f32.mrf.mxu0
      %3816 = vdwg.mxu0
      %3817 = vmatprep.subr.bf16.mxu0 0
      %3818 = vmatpush1.bf16.msra.mxu0 %v3525
      %3819 = vmatprep.subr.bf16.mxu0 0
      %3820 = vmatpush1.bf16.msra.mxu0 %v3524
      %3821 = vmatprep.subr.bf16.mxu0 0
      %3822 = vmatpush1.bf16.msra.mxu0 %v3523
      %3823 = vmatprep.subr.bf16.mxu0 0
      %3824 = vmatpush1.bf16.msra.mxu0 %v3522
      %3825 = vmatprep.subr.bf16.mxu0 0
      %3826 = vmatpush1.bf16.msra.mxu0 %v3521
      %3827 = vmatprep.subr.bf16.mxu0 0
      %3828 = vmatpush1.bf16.msra.mxu0 %v3520
      %3829 = vmatprep.subr.bf16.mxu0 0
      %3830 = vmatpush1.bf16.msra.mxu0 %v3519
      %3831 = vmatprep.subr.bf16.mxu0 0
      %3832 = vmatpush1.bf16.msra.mxu0 %v3518
      %3833 = vmatprep.subr.bf16.mxu0 0
      %3834 = vmatpush2.bf16.msra.mxu0 0
      %3835 = vmatprep.subr.bf16.mxu0 0
      %3836 = vmatpush2.bf16.msra.mxu0 0
      %3837 = vmatprep.subr.bf16.mxu0 0
      %3838 = vmatpush2.bf16.msra.mxu0 0
      %3839 = vmatprep.subr.bf16.mxu0 0
      %3840 = vmatpush2.bf16.msra.mxu0 0
      %3841 = vmatprep.subr.bf16.mxu0 0
      %3842 = vmatpush2.bf16.msra.mxu0 0
      %3843 = vmatprep.subr.bf16.mxu0 0
      %3844 = vmatpush2.bf16.msra.mxu0 0
      %3845 = vmatprep.subr.bf16.mxu0 0
      %3846 = vmatpush2.bf16.msra.mxu0 0
      %3847 = vmatprep.subr.bf16.mxu0 0
      %3848 = vmatpush2.bf16.msra.mxu0 0
      %3849 = vmatprep.mubr.bf16.mxu0 0
      %3850 = vmatmul.mubr.bf16.gmra.mxu0 %v2143
      %v3851 = vpop.f32.mrf.mxu0
      %v3852 = vadd.f32 0.0, %v3851
      %v3853 = vpop.f32.mrf.mxu0
      %v3854 = vpop.f32.mrf.mxu0
      %v3855 = vadd.f32 0.0, %v3854
      %v3856 = vpop.f32.mrf.mxu0
      %3857 = vmatprep.mubr.bf16.mxu0 0
      %3858 = vmatmul.mubr.bf16.gmra.mxu0 %v2144
      %v3859 = vpop.f32.mrf.mxu0
      %v3860 = vadd.f32 0.0, %v3859
      %v3861 = vpop.f32.mrf.mxu0
      %v3862 = vpop.f32.mrf.mxu0
      %v3863 = vadd.f32 0.0, %v3862
      %v3864 = vpop.f32.mrf.mxu0
      %3865 = vmatprep.mubr.bf16.mxu0 0
      %3866 = vmatmul.mubr.bf16.gmra.mxu0 %v2145
      %v3867 = vpop.f32.mrf.mxu0
      %v3868 = vadd.f32 0.0, %v3867
      %v3869 = vpop.f32.mrf.mxu0
      %v3870 = vpop.f32.mrf.mxu0
      %v3871 = vadd.f32 0.0, %v3870
      %v3872 = vpop.f32.mrf.mxu0
      %3873 = vmatprep.mubr.bf16.mxu0 0
      %3874 = vmatmul.mubr.bf16.gmra.mxu0 %v2146
      %v3875 = vpop.f32.mrf.mxu0
      %v3876 = vadd.f32 0.0, %v3875
      %v3877 = vpop.f32.mrf.mxu0
      %v3878 = vpop.f32.mrf.mxu0
      %v3879 = vadd.f32 0.0, %v3878
      %v3880 = vpop.f32.mrf.mxu0
      %3881 = vmatprep.mubr.bf16.mxu0 0
      %3882 = vmatmul.mubr.bf16.gmra.mxu0 %v2147
      %v3883 = vpop.f32.mrf.mxu0
      %v3884 = vadd.f32 0.0, %v3883
      %v3885 = vpop.f32.mrf.mxu0
      %v3886 = vpop.f32.mrf.mxu0
      %v3887 = vadd.f32 0.0, %v3886
      %v3888 = vpop.f32.mrf.mxu0
      %3889 = vmatprep.mubr.bf16.mxu0 0
      %3890 = vmatmul.mubr.bf16.gmra.mxu0 %v2148
      %v3891 = vpop.f32.mrf.mxu0
      %v3892 = vadd.f32 0.0, %v3891
      %v3893 = vpop.f32.mrf.mxu0
      %v3894 = vpop.f32.mrf.mxu0
      %v3895 = vadd.f32 0.0, %v3894
      %v3896 = vpop.f32.mrf.mxu0
      %3897 = vmatprep.mubr.bf16.mxu0 0
      %3898 = vmatmul.mubr.bf16.gmra.mxu0 %v2149
      %v3899 = vpop.f32.mrf.mxu0
      %v3900 = vadd.f32 0.0, %v3899
      %v3901 = vpop.f32.mrf.mxu0
      %v3902 = vpop.f32.mrf.mxu0
      %v3903 = vadd.f32 0.0, %v3902
      %v3904 = vpop.f32.mrf.mxu0
      %3905 = vmatprep.mubr.bf16.mxu0 0
      %3906 = vmatmul.mubr.bf16.gmra.mxu0 %v2150
      %v3907 = vpop.f32.mrf.mxu0
      %v3908 = vadd.f32 0.0, %v3907
      %v3909 = vpop.f32.mrf.mxu0
      %v3910 = vpop.f32.mrf.mxu0
      %v3911 = vadd.f32 0.0, %v3910
      %v3912 = vpop.f32.mrf.mxu0
      %3913 = vdwg.mxu0
      %v3914 = vpack.c.bf16 %v3564, %v3561
      %v3915 = vpack.c.bf16 %v3572, %v3569
      %v3916 = vpack.c.bf16 %v3580, %v3577
      %v3917 = vpack.c.bf16 %v3588, %v3585
      %v3918 = vpack.c.bf16 %v3596, %v3593
      %v3919 = vpack.c.bf16 %v3604, %v3601
      %v3920 = vpack.c.bf16 %v3612, %v3609
      %v3921 = vpack.c.bf16 %v3620, %v3617
      %v3922 = vpack.c.bf16 %v3661, %v3658
      %v3923 = vpack.c.bf16 %v3669, %v3666
      %v3924 = vpack.c.bf16 %v3677, %v3674
      %v3925 = vpack.c.bf16 %v3685, %v3682
      %v3926 = vpack.c.bf16 %v3693, %v3690
      %v3927 = vpack.c.bf16 %v3701, %v3698
      %v3928 = vpack.c.bf16 %v3709, %v3706
      %v3929 = vpack.c.bf16 %v3717, %v3714
      %v3930 = vpack.c.bf16 %v3758, %v3755
      %v3931 = vpack.c.bf16 %v3766, %v3763
      %v3932 = vpack.c.bf16 %v3774, %v3771
      %v3933 = vpack.c.bf16 %v3782, %v3779
      %v3934 = vpack.c.bf16 %v3790, %v3787
      %v3935 = vpack.c.bf16 %v3798, %v3795
      %v3936 = vpack.c.bf16 %v3806, %v3803
      %v3937 = vpack.c.bf16 %v3814, %v3811
      %v3938 = vpack.c.bf16 %v3855, %v3852
      %v3939 = vpack.c.bf16 %v3863, %v3860
      %v3940 = vpack.c.bf16 %v3871, %v3868
      %v3941 = vpack.c.bf16 %v3879, %v3876
      %v3942 = vpack.c.bf16 %v3887, %v3884
      %v3943 = vpack.c.bf16 %v3895, %v3892
      %v3944 = vpack.c.bf16 %v3903, %v3900
      %v3945 = vpack.c.bf16 %v3911, %v3908
      %3946 = vmatprep.subr.bf16.mxu0 0
      %3947 = vmatpush1.bf16.msra.mxu0 %v2327
      %3948 = vmatprep.subr.bf16.mxu0 0
      %3949 = vmatpush1.bf16.msra.mxu0 %v2326
      %3950 = vmatprep.subr.bf16.mxu0 0
      %3951 = vmatpush1.bf16.msra.mxu0 %v2325
      %3952 = vmatprep.subr.bf16.mxu0 0
      %3953 = vmatpush1.bf16.msra.mxu0 %v2324
      %3954 = vmatprep.subr.bf16.mxu0 0
      %3955 = vmatpush1.bf16.msra.mxu0 %v2323
      %3956 = vmatprep.subr.bf16.mxu0 0
      %3957 = vmatpush1.bf16.msra.mxu0 %v2322
      %3958 = vmatprep.subr.bf16.mxu0 0
      %3959 = vmatpush1.bf16.msra.mxu0 %v2321
      %3960 = vmatprep.subr.bf16.mxu0 0
      %3961 = vmatpush1.bf16.msra.mxu0 %v2320
      %3962 = vmatprep.subr.bf16.mxu0 0
      %3963 = vmatpush2.bf16.msra.mxu0 0
      %3964 = vmatprep.subr.bf16.mxu0 0
      %3965 = vmatpush2.bf16.msra.mxu0 0
      %3966 = vmatprep.subr.bf16.mxu0 0
      %3967 = vmatpush2.bf16.msra.mxu0 0
      %3968 = vmatprep.subr.bf16.mxu0 0
      %3969 = vmatpush2.bf16.msra.mxu0 0
      %3970 = vmatprep.subr.bf16.mxu0 0
      %3971 = vmatpush2.bf16.msra.mxu0 0
      %3972 = vmatprep.subr.bf16.mxu0 0
      %3973 = vmatpush2.bf16.msra.mxu0 0
      %3974 = vmatprep.subr.bf16.mxu0 0
      %3975 = vmatpush2.bf16.msra.mxu0 0
      %3976 = vmatprep.subr.bf16.mxu0 0
      %3977 = vmatpush2.bf16.msra.mxu0 0
      %3978 = vmatprep.mubr.bf16.mxu0 0
      %3979 = vmatmul.mubr.bf16.gmra.mxu0 %v3914
      %v3980 = vpop.f32.mrf.mxu0
      %v3981 = vadd.f32 %v1497, %v3980
      %v3982 = vpop.f32.mrf.mxu0
      %v3983 = vpop.f32.mrf.mxu0
      %v3984 = vadd.f32 %v1498, %v3983
      %v3985 = vpop.f32.mrf.mxu0
      %3986 = vmatprep.mubr.bf16.mxu0 0
      %3987 = vmatmul.mubr.bf16.gmra.mxu0 %v3915
      %v3988 = vpop.f32.mrf.mxu0
      %v3989 = vadd.f32 %v1499, %v3988
      %v3990 = vpop.f32.mrf.mxu0
      %v3991 = vpop.f32.mrf.mxu0
      %v3992 = vadd.f32 %v1500, %v3991
      %v3993 = vpop.f32.mrf.mxu0
      %3994 = vmatprep.mubr.bf16.mxu0 0
      %3995 = vmatmul.mubr.bf16.gmra.mxu0 %v3916
      %v3996 = vpop.f32.mrf.mxu0
      %v3997 = vadd.f32 %v1501, %v3996
      %v3998 = vpop.f32.mrf.mxu0
      %v3999 = vpop.f32.mrf.mxu0
      %v4000 = vadd.f32 %v1502, %v3999
      %v4001 = vpop.f32.mrf.mxu0
      %4002 = vmatprep.mubr.bf16.mxu0 0
      %4003 = vmatmul.mubr.bf16.gmra.mxu0 %v3917
      %v4004 = vpop.f32.mrf.mxu0
      %v4005 = vadd.f32 %v1503, %v4004
      %v4006 = vpop.f32.mrf.mxu0
      %v4007 = vpop.f32.mrf.mxu0
      %v4008 = vadd.f32 %v1504, %v4007
      %v4009 = vpop.f32.mrf.mxu0
      %4010 = vmatprep.mubr.bf16.mxu0 0
      %4011 = vmatmul.mubr.bf16.gmra.mxu0 %v3918
      %v4012 = vpop.f32.mrf.mxu0
      %v4013 = vadd.f32 %v1505, %v4012
      %v4014 = vpop.f32.mrf.mxu0
      %v4015 = vpop.f32.mrf.mxu0
      %v4016 = vadd.f32 %v1506, %v4015
      %v4017 = vpop.f32.mrf.mxu0
      %4018 = vmatprep.mubr.bf16.mxu0 0
      %4019 = vmatmul.mubr.bf16.gmra.mxu0 %v3919
      %v4020 = vpop.f32.mrf.mxu0
      %v4021 = vadd.f32 %v1507, %v4020
      %v4022 = vpop.f32.mrf.mxu0
      %v4023 = vpop.f32.mrf.mxu0
      %v4024 = vadd.f32 %v1508, %v4023
      %v4025 = vpop.f32.mrf.mxu0
      %4026 = vmatprep.mubr.bf16.mxu0 0
      %4027 = vmatmul.mubr.bf16.gmra.mxu0 %v3920
      %v4028 = vpop.f32.mrf.mxu0
      %v4029 = vadd.f32 %v1509, %v4028
      %v4030 = vpop.f32.mrf.mxu0
      %v4031 = vpop.f32.mrf.mxu0
      %v4032 = vadd.f32 %v1510, %v4031
      %v4033 = vpop.f32.mrf.mxu0
      %4034 = vmatprep.mubr.bf16.mxu0 0
      %4035 = vmatmul.mubr.bf16.gmra.mxu0 %v3921
      %v4036 = vpop.f32.mrf.mxu0
      %v4037 = vadd.f32 %v1511, %v4036
      %v4038 = vpop.f32.mrf.mxu0
      %v4039 = vpop.f32.mrf.mxu0
      %v4040 = vadd.f32 %v1512, %v4039
      %v4041 = vpop.f32.mrf.mxu0
      %4042 = vmatprep.mubr.bf16.mxu0 0
      %4043 = vmatmul.mubr.bf16.gmra.mxu0 %v3922
      %v4044 = vpop.f32.mrf.mxu0
      %v4045 = vadd.f32 %v1513, %v4044
      %v4046 = vpop.f32.mrf.mxu0
      %v4047 = vpop.f32.mrf.mxu0
      %v4048 = vadd.f32 %v1514, %v4047
      %v4049 = vpop.f32.mrf.mxu0
      %4050 = vmatprep.mubr.bf16.mxu0 0
      %4051 = vmatmul.mubr.bf16.gmra.mxu0 %v3923
      %v4052 = vpop.f32.mrf.mxu0
      %v4053 = vadd.f32 %v1515, %v4052
      %v4054 = vpop.f32.mrf.mxu0
      %v4055 = vpop.f32.mrf.mxu0
      %v4056 = vadd.f32 %v1516, %v4055
      %v4057 = vpop.f32.mrf.mxu0
      %4058 = vmatprep.mubr.bf16.mxu0 0
      %4059 = vmatmul.mubr.bf16.gmra.mxu0 %v3924
      %v4060 = vpop.f32.mrf.mxu0
      %v4061 = vadd.f32 %v1517, %v4060
      %v4062 = vpop.f32.mrf.mxu0
      %v4063 = vpop.f32.mrf.mxu0
      %v4064 = vadd.f32 %v1518, %v4063
      %v4065 = vpop.f32.mrf.mxu0
      %4066 = vmatprep.mubr.bf16.mxu0 0
      %4067 = vmatmul.mubr.bf16.gmra.mxu0 %v3925
      %v4068 = vpop.f32.mrf.mxu0
      %v4069 = vadd.f32 %v1519, %v4068
      %v4070 = vpop.f32.mrf.mxu0
      %v4071 = vpop.f32.mrf.mxu0
      %v4072 = vadd.f32 %v1520, %v4071
      %v4073 = vpop.f32.mrf.mxu0
      %4074 = vmatprep.mubr.bf16.mxu0 0
      %4075 = vmatmul.mubr.bf16.gmra.mxu0 %v3926
      %v4076 = vpop.f32.mrf.mxu0
      %v4077 = vadd.f32 %v1521, %v4076
      %v4078 = vpop.f32.mrf.mxu0
      %v4079 = vpop.f32.mrf.mxu0
      %v4080 = vadd.f32 %v1522, %v4079
      %v4081 = vpop.f32.mrf.mxu0
      %4082 = vmatprep.mubr.bf16.mxu0 0
      %4083 = vmatmul.mubr.bf16.gmra.mxu0 %v3927
      %v4084 = vpop.f32.mrf.mxu0
      %v4085 = vadd.f32 %v1523, %v4084
      %v4086 = vpop.f32.mrf.mxu0
      %v4087 = vpop.f32.mrf.mxu0
      %v4088 = vadd.f32 %v1524, %v4087
      %v4089 = vpop.f32.mrf.mxu0
      %4090 = vmatprep.mubr.bf16.mxu0 0
      %4091 = vmatmul.mubr.bf16.gmra.mxu0 %v3928
      %v4092 = vpop.f32.mrf.mxu0
      %v4093 = vadd.f32 %v1525, %v4092
      %v4094 = vpop.f32.mrf.mxu0
      %v4095 = vpop.f32.mrf.mxu0
      %v4096 = vadd.f32 %v1526, %v4095
      %v4097 = vpop.f32.mrf.mxu0
      %4098 = vmatprep.mubr.bf16.mxu0 0
      %4099 = vmatmul.mubr.bf16.gmra.mxu0 %v3929
      %v4100 = vpop.f32.mrf.mxu0
      %v4101 = vadd.f32 %v1527, %v4100
      %v4102 = vpop.f32.mrf.mxu0
      %v4103 = vpop.f32.mrf.mxu0
      %v4104 = vadd.f32 %v1528, %v4103
      %v4105 = vpop.f32.mrf.mxu0
      %4106 = vmatprep.mubr.bf16.mxu0 0
      %4107 = vmatmul.mubr.bf16.gmra.mxu0 %v3930
      %v4108 = vpop.f32.mrf.mxu0
      %v4109 = vadd.f32 %v1529, %v4108
      %v4110 = vpop.f32.mrf.mxu0
      %v4111 = vpop.f32.mrf.mxu0
      %v4112 = vadd.f32 %v1530, %v4111
      %v4113 = vpop.f32.mrf.mxu0
      %4114 = vmatprep.mubr.bf16.mxu0 0
      %4115 = vmatmul.mubr.bf16.gmra.mxu0 %v3931
      %v4116 = vpop.f32.mrf.mxu0
      %v4117 = vadd.f32 %v1531, %v4116
      %v4118 = vpop.f32.mrf.mxu0
      %v4119 = vpop.f32.mrf.mxu0
      %v4120 = vadd.f32 %v1532, %v4119
      %v4121 = vpop.f32.mrf.mxu0
      %4122 = vmatprep.mubr.bf16.mxu0 0
      %4123 = vmatmul.mubr.bf16.gmra.mxu0 %v3932
      %v4124 = vpop.f32.mrf.mxu0
      %v4125 = vadd.f32 %v1533, %v4124
      %v4126 = vpop.f32.mrf.mxu0
      %v4127 = vpop.f32.mrf.mxu0
      %v4128 = vadd.f32 %v1534, %v4127
      %v4129 = vpop.f32.mrf.mxu0
      %4130 = vmatprep.mubr.bf16.mxu0 0
      %4131 = vmatmul.mubr.bf16.gmra.mxu0 %v3933
      %v4132 = vpop.f32.mrf.mxu0
      %v4133 = vadd.f32 %v1535, %v4132
      %v4134 = vpop.f32.mrf.mxu0
      %v4135 = vpop.f32.mrf.mxu0
      %v4136 = vadd.f32 %v1536, %v4135
      %v4137 = vpop.f32.mrf.mxu0
      %4138 = vmatprep.mubr.bf16.mxu0 0
      %4139 = vmatmul.mubr.bf16.gmra.mxu0 %v3934
      %v4140 = vpop.f32.mrf.mxu0
      %v4141 = vadd.f32 %v1537, %v4140
      %v4142 = vpop.f32.mrf.mxu0
      %v4143 = vpop.f32.mrf.mxu0
      %v4144 = vadd.f32 %v1538, %v4143
      %v4145 = vpop.f32.mrf.mxu0
      %4146 = vmatprep.mubr.bf16.mxu0 0
      %4147 = vmatmul.mubr.bf16.gmra.mxu0 %v3935
      %v4148 = vpop.f32.mrf.mxu0
      %v4149 = vadd.f32 %v1539, %v4148
      %v4150 = vpop.f32.mrf.mxu0
      %v4151 = vpop.f32.mrf.mxu0
      %v4152 = vadd.f32 %v1540, %v4151
      %v4153 = vpop.f32.mrf.mxu0
      %4154 = vmatprep.mubr.bf16.mxu0 0
      %4155 = vmatmul.mubr.bf16.gmra.mxu0 %v3936
      %v4156 = vpop.f32.mrf.mxu0
      %v4157 = vadd.f32 %v1541, %v4156
      %v4158 = vpop.f32.mrf.mxu0
      %v4159 = vpop.f32.mrf.mxu0
      %v4160 = vadd.f32 %v1542, %v4159
      %v4161 = vpop.f32.mrf.mxu0
      %4162 = vmatprep.mubr.bf16.mxu0 0
      %4163 = vmatmul.mubr.bf16.gmra.mxu0 %v3937
      %v4164 = vpop.f32.mrf.mxu0
      %v4165 = vadd.f32 %v1543, %v4164
      %v4166 = vpop.f32.mrf.mxu0
      %v4167 = vpop.f32.mrf.mxu0
      %v4168 = vadd.f32 %v1544, %v4167
      %v4169 = vpop.f32.mrf.mxu0
      %4170 = vmatprep.mubr.bf16.mxu0 0
      %4171 = vmatmul.mubr.bf16.gmra.mxu0 %v3938
      %v4172 = vpop.f32.mrf.mxu0
      %v4173 = vadd.f32 %v1545, %v4172
      %v4174 = vpop.f32.mrf.mxu0
      %v4175 = vpop.f32.mrf.mxu0
      %v4176 = vadd.f32 %v1546, %v4175
      %v4177 = vpop.f32.mrf.mxu0
      %4178 = vmatprep.mubr.bf16.mxu0 0
      %4179 = vmatmul.mubr.bf16.gmra.mxu0 %v3939
      %v4180 = vpop.f32.mrf.mxu0
      %v4181 = vadd.f32 %v1547, %v4180
      %v4182 = vpop.f32.mrf.mxu0
      %v4183 = vpop.f32.mrf.mxu0
      %v4184 = vadd.f32 %v1548, %v4183
      %v4185 = vpop.f32.mrf.mxu0
      %4186 = vmatprep.mubr.bf16.mxu0 0
      %4187 = vmatmul.mubr.bf16.gmra.mxu0 %v3940
      %v4188 = vpop.f32.mrf.mxu0
      %v4189 = vadd.f32 %v1549, %v4188
      %v4190 = vpop.f32.mrf.mxu0
      %v4191 = vpop.f32.mrf.mxu0
      %v4192 = vadd.f32 %v1550, %v4191
      %v4193 = vpop.f32.mrf.mxu0
      %4194 = vmatprep.mubr.bf16.mxu0 0
      %4195 = vmatmul.mubr.bf16.gmra.mxu0 %v3941
      %v4196 = vpop.f32.mrf.mxu0
      %v4197 = vadd.f32 %v1551, %v4196
      %v4198 = vpop.f32.mrf.mxu0
      %v4199 = vpop.f32.mrf.mxu0
      %v4200 = vadd.f32 %v1552, %v4199
      %v4201 = vpop.f32.mrf.mxu0
      %4202 = vmatprep.mubr.bf16.mxu0 0
      %4203 = vmatmul.mubr.bf16.gmra.mxu0 %v3942
      %v4204 = vpop.f32.mrf.mxu0
      %v4205 = vadd.f32 %v1553, %v4204
      %v4206 = vpop.f32.mrf.mxu0
      %v4207 = vpop.f32.mrf.mxu0
      %v4208 = vadd.f32 %v1554, %v4207
      %v4209 = vpop.f32.mrf.mxu0
      %4210 = vmatprep.mubr.bf16.mxu0 0
      %4211 = vmatmul.mubr.bf16.gmra.mxu0 %v3943
      %v4212 = vpop.f32.mrf.mxu0
      %v4213 = vadd.f32 %v1555, %v4212
      %v4214 = vpop.f32.mrf.mxu0
      %v4215 = vpop.f32.mrf.mxu0
      %v4216 = vadd.f32 %v1556, %v4215
      %v4217 = vpop.f32.mrf.mxu0
      %4218 = vmatprep.mubr.bf16.mxu0 0
      %4219 = vmatmul.mubr.bf16.gmra.mxu0 %v3944
      %v4220 = vpop.f32.mrf.mxu0
      %v4221 = vadd.f32 %v1557, %v4220
      %v4222 = vpop.f32.mrf.mxu0
      %v4223 = vpop.f32.mrf.mxu0
      %v4224 = vadd.f32 %v1558, %v4223
      %v4225 = vpop.f32.mrf.mxu0
      %4226 = vmatprep.mubr.bf16.mxu0 0
      %4227 = vmatmul.mubr.bf16.gmra.mxu0 %v3945
      %v4228 = vpop.f32.mrf.mxu0
      %v4229 = vadd.f32 %v1559, %v4228
      %v4230 = vpop.f32.mrf.mxu0
      %v4231 = vpop.f32.mrf.mxu0
      %v4232 = vadd.f32 %v1560, %v4231
      %v4233 = vpop.f32.mrf.mxu0
      %4234 = vdwg.mxu0
      %v4235 = vmax.f32 %v3981, 0.0
      %v4236 = vmax.f32 %v3984, 0.0
      %v4237 = vmax.f32 %v3989, 0.0
      %v4238 = vmax.f32 %v3992, 0.0
      %v4239 = vmax.f32 %v3997, 0.0
      %v4240 = vmax.f32 %v4000, 0.0
      %v4241 = vmax.f32 %v4005, 0.0
      %v4242 = vmax.f32 %v4008, 0.0
      %v4243 = vmax.f32 %v4013, 0.0
      %v4244 = vmax.f32 %v4016, 0.0
      %v4245 = vmax.f32 %v4021, 0.0
      %v4246 = vmax.f32 %v4024, 0.0
      %v4247 = vmax.f32 %v4029, 0.0
      %v4248 = vmax.f32 %v4032, 0.0
      %v4249 = vmax.f32 %v4037, 0.0
      %v4250 = vmax.f32 %v4040, 0.0
      %v4251 = vmax.f32 %v4045, 0.0
      %v4252 = vmax.f32 %v4048, 0.0
      %v4253 = vmax.f32 %v4053, 0.0
      %v4254 = vmax.f32 %v4056, 0.0
      %v4255 = vmax.f32 %v4061, 0.0
      %v4256 = vmax.f32 %v4064, 0.0
      %v4257 = vmax.f32 %v4069, 0.0
      %v4258 = vmax.f32 %v4072, 0.0
      %v4259 = vmax.f32 %v4077, 0.0
      %v4260 = vmax.f32 %v4080, 0.0
      %v4261 = vmax.f32 %v4085, 0.0
      %v4262 = vmax.f32 %v4088, 0.0
      %v4263 = vmax.f32 %v4093, 0.0
      %v4264 = vmax.f32 %v4096, 0.0
      %v4265 = vmax.f32 %v4101, 0.0
      %v4266 = vmax.f32 %v4104, 0.0
      %v4267 = vmax.f32 %v4109, 0.0
      %v4268 = vmax.f32 %v4112, 0.0
      %v4269 = vmax.f32 %v4117, 0.0
      %v4270 = vmax.f32 %v4120, 0.0
      %v4271 = vmax.f32 %v4125, 0.0
      %v4272 = vmax.f32 %v4128, 0.0
      %v4273 = vmax.f32 %v4133, 0.0
      %v4274 = vmax.f32 %v4136, 0.0
      %v4275 = vmax.f32 %v4141, 0.0
      %v4276 = vmax.f32 %v4144, 0.0
      %v4277 = vmax.f32 %v4149, 0.0
      %v4278 = vmax.f32 %v4152, 0.0
      %v4279 = vmax.f32 %v4157, 0.0
      %v4280 = vmax.f32 %v4160, 0.0
      %v4281 = vmax.f32 %v4165, 0.0
      %v4282 = vmax.f32 %v4168, 0.0
      %v4283 = vmax.f32 %v4173, 0.0
      %v4284 = vmax.f32 %v4176, 0.0
      %v4285 = vmax.f32 %v4181, 0.0
      %v4286 = vmax.f32 %v4184, 0.0
      %v4287 = vmax.f32 %v4189, 0.0
      %v4288 = vmax.f32 %v4192, 0.0
      %v4289 = vmax.f32 %v4197, 0.0
      %v4290 = vmax.f32 %v4200, 0.0
      %v4291 = vmax.f32 %v4205, 0.0
      %v4292 = vmax.f32 %v4208, 0.0
      %v4293 = vmax.f32 %v4213, 0.0
      %v4294 = vmax.f32 %v4216, 0.0
      %v4295 = vmax.f32 %v4221, 0.0
      %v4296 = vmax.f32 %v4224, 0.0
      %v4297 = vmax.f32 %v4229, 0.0
      %v4298 = vmax.f32 %v4232, 0.0
      %v4299 = vpack.c.bf16 %v4236, %v4235
      %v4300 = vpack.c.bf16 %v4238, %v4237
      %v4301 = vpack.c.bf16 %v4240, %v4239
      %v4302 = vpack.c.bf16 %v4242, %v4241
      %v4303 = vpack.c.bf16 %v4244, %v4243
      %v4304 = vpack.c.bf16 %v4246, %v4245
      %v4305 = vpack.c.bf16 %v4248, %v4247
      %v4306 = vpack.c.bf16 %v4250, %v4249
      %v4307 = vpack.c.bf16 %v4252, %v4251
      %v4308 = vpack.c.bf16 %v4254, %v4253
      %v4309 = vpack.c.bf16 %v4256, %v4255
      %v4310 = vpack.c.bf16 %v4258, %v4257
      %v4311 = vpack.c.bf16 %v4260, %v4259
      %v4312 = vpack.c.bf16 %v4262, %v4261
      %v4313 = vpack.c.bf16 %v4264, %v4263
      %v4314 = vpack.c.bf16 %v4266, %v4265
      %v4315 = vpack.c.bf16 %v4268, %v4267
      %v4316 = vpack.c.bf16 %v4270, %v4269
      %v4317 = vpack.c.bf16 %v4272, %v4271
      %v4318 = vpack.c.bf16 %v4274, %v4273
      %v4319 = vpack.c.bf16 %v4276, %v4275
      %v4320 = vpack.c.bf16 %v4278, %v4277
      %v4321 = vpack.c.bf16 %v4280, %v4279
      %v4322 = vpack.c.bf16 %v4282, %v4281
      %v4323 = vpack.c.bf16 %v4284, %v4283
      %v4324 = vpack.c.bf16 %v4286, %v4285
      %v4325 = vpack.c.bf16 %v4288, %v4287
      %v4326 = vpack.c.bf16 %v4290, %v4289
      %v4327 = vpack.c.bf16 %v4292, %v4291
      %v4328 = vpack.c.bf16 %v4294, %v4293
      %v4329 = vpack.c.bf16 %v4296, %v4295
      %v4330 = vpack.c.bf16 %v4298, %v4297
      %v4331 = vld [vmem:[%s8] sm:$0xf]
      %v4332 = vld [vmem:[%s8 + $0x4] sm:$0xf]
      %v4333 = vld [vmem:[%s8 + $0x8] sm:$0xf]
      %v4334 = vld [vmem:[%s8 + $0xc] sm:$0xf]
      %v4335 = vld [vmem:[%s8 + $0x10] sm:$0xf]
      %v4336 = vld [vmem:[%s8 + $0x14] sm:$0xf]
      %v4337 = vld [vmem:[%s8 + $0x18] sm:$0xf]
      %v4338 = vld [vmem:[%s8 + $0x1c] sm:$0xf]
      %v4339 = vld [vmem:[%s8 + $0x20] sm:$0xf]
      %v4340 = vld [vmem:[%s8 + $0x24] sm:$0xf]
      %v4341 = vld [vmem:[%s8 + $0x28] sm:$0xf]
      %v4342 = vld [vmem:[%s8 + $0x2c] sm:$0xf]
      %v4343 = vld [vmem:[%s8 + $0x30] sm:$0xf]
      %v4344 = vld [vmem:[%s8 + $0x34] sm:$0xf]
      %v4345 = vld [vmem:[%s8 + $0x38] sm:$0xf]
      %v4346 = vld [vmem:[%s8 + $0x3c] sm:$0xf]
      %v4347 = vld [vmem:[%s9] sm:$0x1]
      %v4349 = vlaneseq
      %v4350 = vshrl.u32 %v4349, 7
      %v4351 = vsub.s32 0, %v4350
      %v4352 = vrot.slane %v4347, %v4351
      %v4370 = vunpack.c.l.b16 %v4331
      %v4371 = vunpack.c.l.b16 %v4332
      %v4372 = vunpack.c.l.b16 %v4333
      %v4373 = vunpack.c.l.b16 %v4334
      %v4374 = vunpack.c.l.b16 %v4335
      %v4375 = vunpack.c.l.b16 %v4336
      %v4376 = vunpack.c.l.b16 %v4337
      %v4377 = vunpack.c.l.b16 %v4338
      %v4378 = vunpack.c.l.b16 %v4339
      %v4379 = vunpack.c.l.b16 %v4340
      %v4380 = vunpack.c.l.b16 %v4341
      %v4381 = vunpack.c.l.b16 %v4342
      %v4382 = vunpack.c.l.b16 %v4343
      %v4383 = vunpack.c.l.b16 %v4344
      %v4384 = vunpack.c.l.b16 %v4345
      %v4385 = vunpack.c.l.b16 %v4346
      %v4386 = vpack.c.b16 %v4371, %v4370
      %v4387 = vpack.c.b16 %v4373, %v4372
      %v4388 = vpack.c.b16 %v4375, %v4374
      %v4389 = vpack.c.b16 %v4377, %v4376
      %v4390 = vpack.c.b16 %v4379, %v4378
      %v4391 = vpack.c.b16 %v4381, %v4380
      %v4392 = vpack.c.b16 %v4383, %v4382
      %v4393 = vpack.c.b16 %v4385, %v4384
      %4402 = vmatprep.subr.bf16.mxu0 0
      %4403 = vmatpush1.bf16.msra.mxu0 %v4393
      %4404 = vmatprep.subr.bf16.mxu0 0
      %4405 = vmatpush1.bf16.msra.mxu0 %v4392
      %4406 = vmatprep.subr.bf16.mxu0 0
      %4407 = vmatpush1.bf16.msra.mxu0 %v4391
      %4408 = vmatprep.subr.bf16.mxu0 0
      %4409 = vmatpush1.bf16.msra.mxu0 %v4390
      %4410 = vmatprep.subr.bf16.mxu0 0
      %4411 = vmatpush1.bf16.msra.mxu0 %v4389
      %4412 = vmatprep.subr.bf16.mxu0 0
      %4413 = vmatpush1.bf16.msra.mxu0 %v4388
      %4414 = vmatprep.subr.bf16.mxu0 0
      %4415 = vmatpush1.bf16.msra.mxu0 %v4387
      %4416 = vmatprep.subr.bf16.mxu0 0
      %4417 = vmatpush1.bf16.msra.mxu0 %v4386
      %4418 = vmatprep.subr.bf16.mxu0 0
      %4419 = vmatpush2.bf16.msra.mxu0 0
      %4420 = vmatprep.subr.bf16.mxu0 0
      %4421 = vmatpush2.bf16.msra.mxu0 0
      %4422 = vmatprep.subr.bf16.mxu0 0
      %4423 = vmatpush2.bf16.msra.mxu0 0
      %4424 = vmatprep.subr.bf16.mxu0 0
      %4425 = vmatpush2.bf16.msra.mxu0 0
      %4426 = vmatprep.subr.bf16.mxu0 0
      %4427 = vmatpush2.bf16.msra.mxu0 0
      %4428 = vmatprep.subr.bf16.mxu0 0
      %4429 = vmatpush2.bf16.msra.mxu0 0
      %4430 = vmatprep.subr.bf16.mxu0 0
      %4431 = vmatpush2.bf16.msra.mxu0 0
      %4432 = vmatprep.subr.bf16.mxu0 0
      %4433 = vmatpush2.bf16.msra.mxu0 0
      %4434 = vmatprep.mubr.bf16.mxu0 0
      %4435 = vmatmul.mubr.bf16.gmra.mxu0 %v4299
      %v4436 = vpop.f32.mrf.mxu0
      %v4437 = vadd.f32 %v4352, %v4436
      %v4438 = vpop.f32.mrf.mxu0
      %v4439 = vpop.f32.mrf.mxu0
      %v4440 = vadd.f32 %v4352, %v4439
      %v4441 = vpop.f32.mrf.mxu0
      %4442 = vmatprep.mubr.bf16.mxu0 0
      %4443 = vmatmul.mubr.bf16.gmra.mxu0 %v4300
      %v4444 = vpop.f32.mrf.mxu0
      %v4445 = vadd.f32 %v4352, %v4444
      %v4446 = vpop.f32.mrf.mxu0
      %v4447 = vpop.f32.mrf.mxu0
      %v4448 = vadd.f32 %v4352, %v4447
      %v4449 = vpop.f32.mrf.mxu0
      %4450 = vmatprep.mubr.bf16.mxu0 0
      %4451 = vmatmul.mubr.bf16.gmra.mxu0 %v4301
      %v4452 = vpop.f32.mrf.mxu0
      %v4453 = vadd.f32 %v4352, %v4452
      %v4454 = vpop.f32.mrf.mxu0
      %v4455 = vpop.f32.mrf.mxu0
      %v4456 = vadd.f32 %v4352, %v4455
      %v4457 = vpop.f32.mrf.mxu0
      %4458 = vmatprep.mubr.bf16.mxu0 0
      %4459 = vmatmul.mubr.bf16.gmra.mxu0 %v4302
      %v4460 = vpop.f32.mrf.mxu0
      %v4461 = vadd.f32 %v4352, %v4460
      %v4462 = vpop.f32.mrf.mxu0
      %v4463 = vpop.f32.mrf.mxu0
      %v4464 = vadd.f32 %v4352, %v4463
      %v4465 = vpop.f32.mrf.mxu0
      %4466 = vmatprep.mubr.bf16.mxu0 0
      %4467 = vmatmul.mubr.bf16.gmra.mxu0 %v4303
      %v4468 = vpop.f32.mrf.mxu0
      %v4469 = vadd.f32 %v4352, %v4468
      %v4470 = vpop.f32.mrf.mxu0
      %v4471 = vpop.f32.mrf.mxu0
      %v4472 = vadd.f32 %v4352, %v4471
      %v4473 = vpop.f32.mrf.mxu0
      %4474 = vmatprep.mubr.bf16.mxu0 0
      %4475 = vmatmul.mubr.bf16.gmra.mxu0 %v4304
      %v4476 = vpop.f32.mrf.mxu0
      %v4477 = vadd.f32 %v4352, %v4476
      %v4478 = vpop.f32.mrf.mxu0
      %v4479 = vpop.f32.mrf.mxu0
      %v4480 = vadd.f32 %v4352, %v4479
      %v4481 = vpop.f32.mrf.mxu0
      %4482 = vmatprep.mubr.bf16.mxu0 0
      %4483 = vmatmul.mubr.bf16.gmra.mxu0 %v4305
      %v4484 = vpop.f32.mrf.mxu0
      %v4485 = vadd.f32 %v4352, %v4484
      %v4486 = vpop.f32.mrf.mxu0
      %v4487 = vpop.f32.mrf.mxu0
      %v4488 = vadd.f32 %v4352, %v4487
      %v4489 = vpop.f32.mrf.mxu0
      %4490 = vmatprep.mubr.bf16.mxu0 0
      %4491 = vmatmul.mubr.bf16.gmra.mxu0 %v4306
      %v4492 = vpop.f32.mrf.mxu0
      %v4493 = vadd.f32 %v4352, %v4492
      %v4494 = vpop.f32.mrf.mxu0
      %v4495 = vpop.f32.mrf.mxu0
      %v4496 = vadd.f32 %v4352, %v4495
      %v4497 = vpop.f32.mrf.mxu0
      %4498 = vmatprep.mubr.bf16.mxu0 0
      %4499 = vmatmul.mubr.bf16.gmra.mxu0 %v4307
      %v4500 = vpop.f32.mrf.mxu0
      %v4501 = vadd.f32 %v4352, %v4500
      %v4502 = vpop.f32.mrf.mxu0
      %v4503 = vpop.f32.mrf.mxu0
      %v4504 = vadd.f32 %v4352, %v4503
      %v4505 = vpop.f32.mrf.mxu0
      %4506 = vmatprep.mubr.bf16.mxu0 0
      %4507 = vmatmul.mubr.bf16.gmra.mxu0 %v4308
      %v4508 = vpop.f32.mrf.mxu0
      %v4509 = vadd.f32 %v4352, %v4508
      %v4510 = vpop.f32.mrf.mxu0
      %v4511 = vpop.f32.mrf.mxu0
      %v4512 = vadd.f32 %v4352, %v4511
      %v4513 = vpop.f32.mrf.mxu0
      %4514 = vmatprep.mubr.bf16.mxu0 0
      %4515 = vmatmul.mubr.bf16.gmra.mxu0 %v4309
      %v4516 = vpop.f32.mrf.mxu0
      %v4517 = vadd.f32 %v4352, %v4516
      %v4518 = vpop.f32.mrf.mxu0
      %v4519 = vpop.f32.mrf.mxu0
      %v4520 = vadd.f32 %v4352, %v4519
      %v4521 = vpop.f32.mrf.mxu0
      %4522 = vmatprep.mubr.bf16.mxu0 0
      %4523 = vmatmul.mubr.bf16.gmra.mxu0 %v4310
      %v4524 = vpop.f32.mrf.mxu0
      %v4525 = vadd.f32 %v4352, %v4524
      %v4526 = vpop.f32.mrf.mxu0
      %v4527 = vpop.f32.mrf.mxu0
      %v4528 = vadd.f32 %v4352, %v4527
      %v4529 = vpop.f32.mrf.mxu0
      %4530 = vmatprep.mubr.bf16.mxu0 0
      %4531 = vmatmul.mubr.bf16.gmra.mxu0 %v4311
      %v4532 = vpop.f32.mrf.mxu0
      %v4533 = vadd.f32 %v4352, %v4532
      %v4534 = vpop.f32.mrf.mxu0
      %v4535 = vpop.f32.mrf.mxu0
      %v4536 = vadd.f32 %v4352, %v4535
      %v4537 = vpop.f32.mrf.mxu0
      %4538 = vmatprep.mubr.bf16.mxu0 0
      %4539 = vmatmul.mubr.bf16.gmra.mxu0 %v4312
      %v4540 = vpop.f32.mrf.mxu0
      %v4541 = vadd.f32 %v4352, %v4540
      %v4542 = vpop.f32.mrf.mxu0
      %v4543 = vpop.f32.mrf.mxu0
      %v4544 = vadd.f32 %v4352, %v4543
      %v4545 = vpop.f32.mrf.mxu0
      %4546 = vmatprep.mubr.bf16.mxu0 0
      %4547 = vmatmul.mubr.bf16.gmra.mxu0 %v4313
      %v4548 = vpop.f32.mrf.mxu0
      %v4549 = vadd.f32 %v4352, %v4548
      %v4550 = vpop.f32.mrf.mxu0
      %v4551 = vpop.f32.mrf.mxu0
      %v4552 = vadd.f32 %v4352, %v4551
      %v4553 = vpop.f32.mrf.mxu0
      %4554 = vmatprep.mubr.bf16.mxu0 0
      %4555 = vmatmul.mubr.bf16.gmra.mxu0 %v4314
      %v4556 = vpop.f32.mrf.mxu0
      %v4557 = vadd.f32 %v4352, %v4556
      %v4558 = vpop.f32.mrf.mxu0
      %v4559 = vpop.f32.mrf.mxu0
      %v4560 = vadd.f32 %v4352, %v4559
      %v4561 = vpop.f32.mrf.mxu0
      %4562 = vmatprep.mubr.bf16.mxu0 0
      %4563 = vmatmul.mubr.bf16.gmra.mxu0 %v4315
      %v4564 = vpop.f32.mrf.mxu0
      %v4565 = vadd.f32 %v4352, %v4564
      %v4566 = vpop.f32.mrf.mxu0
      %v4567 = vpop.f32.mrf.mxu0
      %v4568 = vadd.f32 %v4352, %v4567
      %v4569 = vpop.f32.mrf.mxu0
      %4570 = vmatprep.mubr.bf16.mxu0 0
      %4571 = vmatmul.mubr.bf16.gmra.mxu0 %v4316
      %v4572 = vpop.f32.mrf.mxu0
      %v4573 = vadd.f32 %v4352, %v4572
      %v4574 = vpop.f32.mrf.mxu0
      %v4575 = vpop.f32.mrf.mxu0
      %v4576 = vadd.f32 %v4352, %v4575
      %v4577 = vpop.f32.mrf.mxu0
      %4578 = vmatprep.mubr.bf16.mxu0 0
      %4579 = vmatmul.mubr.bf16.gmra.mxu0 %v4317
      %v4580 = vpop.f32.mrf.mxu0
      %v4581 = vadd.f32 %v4352, %v4580
      %v4582 = vpop.f32.mrf.mxu0
      %v4583 = vpop.f32.mrf.mxu0
      %v4584 = vadd.f32 %v4352, %v4583
      %v4585 = vpop.f32.mrf.mxu0
      %4586 = vmatprep.mubr.bf16.mxu0 0
      %4587 = vmatmul.mubr.bf16.gmra.mxu0 %v4318
      %v4588 = vpop.f32.mrf.mxu0
      %v4589 = vadd.f32 %v4352, %v4588
      %v4590 = vpop.f32.mrf.mxu0
      %v4591 = vpop.f32.mrf.mxu0
      %v4592 = vadd.f32 %v4352, %v4591
      %v4593 = vpop.f32.mrf.mxu0
      %4594 = vmatprep.mubr.bf16.mxu0 0
      %4595 = vmatmul.mubr.bf16.gmra.mxu0 %v4319
      %v4596 = vpop.f32.mrf.mxu0
      %v4597 = vadd.f32 %v4352, %v4596
      %v4598 = vpop.f32.mrf.mxu0
      %v4599 = vpop.f32.mrf.mxu0
      %v4600 = vadd.f32 %v4352, %v4599
      %v4601 = vpop.f32.mrf.mxu0
      %4602 = vmatprep.mubr.bf16.mxu0 0
      %4603 = vmatmul.mubr.bf16.gmra.mxu0 %v4320
      %v4604 = vpop.f32.mrf.mxu0
      %v4605 = vadd.f32 %v4352, %v4604
      %v4606 = vpop.f32.mrf.mxu0
      %v4607 = vpop.f32.mrf.mxu0
      %v4608 = vadd.f32 %v4352, %v4607
      %v4609 = vpop.f32.mrf.mxu0
      %4610 = vmatprep.mubr.bf16.mxu0 0
      %4611 = vmatmul.mubr.bf16.gmra.mxu0 %v4321
      %v4612 = vpop.f32.mrf.mxu0
      %v4613 = vadd.f32 %v4352, %v4612
      %v4614 = vpop.f32.mrf.mxu0
      %v4615 = vpop.f32.mrf.mxu0
      %v4616 = vadd.f32 %v4352, %v4615
      %v4617 = vpop.f32.mrf.mxu0
      %4618 = vmatprep.mubr.bf16.mxu0 0
      %4619 = vmatmul.mubr.bf16.gmra.mxu0 %v4322
      %v4620 = vpop.f32.mrf.mxu0
      %v4621 = vadd.f32 %v4352, %v4620
      %v4622 = vpop.f32.mrf.mxu0
      %v4623 = vpop.f32.mrf.mxu0
      %v4624 = vadd.f32 %v4352, %v4623
      %v4625 = vpop.f32.mrf.mxu0
      %4626 = vmatprep.mubr.bf16.mxu0 0
      %4627 = vmatmul.mubr.bf16.gmra.mxu0 %v4323
      %v4628 = vpop.f32.mrf.mxu0
      %v4629 = vadd.f32 %v4352, %v4628
      %v4630 = vpop.f32.mrf.mxu0
      %v4631 = vpop.f32.mrf.mxu0
      %v4632 = vadd.f32 %v4352, %v4631
      %v4633 = vpop.f32.mrf.mxu0
      %4634 = vmatprep.mubr.bf16.mxu0 0
      %4635 = vmatmul.mubr.bf16.gmra.mxu0 %v4324
      %v4636 = vpop.f32.mrf.mxu0
      %v4637 = vadd.f32 %v4352, %v4636
      %v4638 = vpop.f32.mrf.mxu0
      %v4639 = vpop.f32.mrf.mxu0
      %v4640 = vadd.f32 %v4352, %v4639
      %v4641 = vpop.f32.mrf.mxu0
      %4642 = vmatprep.mubr.bf16.mxu0 0
      %4643 = vmatmul.mubr.bf16.gmra.mxu0 %v4325
      %v4644 = vpop.f32.mrf.mxu0
      %v4645 = vadd.f32 %v4352, %v4644
      %v4646 = vpop.f32.mrf.mxu0
      %v4647 = vpop.f32.mrf.mxu0
      %v4648 = vadd.f32 %v4352, %v4647
      %v4649 = vpop.f32.mrf.mxu0
      %4650 = vmatprep.mubr.bf16.mxu0 0
      %4651 = vmatmul.mubr.bf16.gmra.mxu0 %v4326
      %v4652 = vpop.f32.mrf.mxu0
      %v4653 = vadd.f32 %v4352, %v4652
      %v4654 = vpop.f32.mrf.mxu0
      %v4655 = vpop.f32.mrf.mxu0
      %v4656 = vadd.f32 %v4352, %v4655
      %v4657 = vpop.f32.mrf.mxu0
      %4658 = vmatprep.mubr.bf16.mxu0 0
      %4659 = vmatmul.mubr.bf16.gmra.mxu0 %v4327
      %v4660 = vpop.f32.mrf.mxu0
      %v4661 = vadd.f32 %v4352, %v4660
      %v4662 = vpop.f32.mrf.mxu0
      %v4663 = vpop.f32.mrf.mxu0
      %v4664 = vadd.f32 %v4352, %v4663
      %v4665 = vpop.f32.mrf.mxu0
      %4666 = vmatprep.mubr.bf16.mxu0 0
      %4667 = vmatmul.mubr.bf16.gmra.mxu0 %v4328
      %v4668 = vpop.f32.mrf.mxu0
      %v4669 = vadd.f32 %v4352, %v4668
      %v4670 = vpop.f32.mrf.mxu0
      %v4671 = vpop.f32.mrf.mxu0
      %v4672 = vadd.f32 %v4352, %v4671
      %v4673 = vpop.f32.mrf.mxu0
      %4674 = vmatprep.mubr.bf16.mxu0 0
      %4675 = vmatmul.mubr.bf16.gmra.mxu0 %v4329
      %v4676 = vpop.f32.mrf.mxu0
      %v4677 = vadd.f32 %v4352, %v4676
      %v4678 = vpop.f32.mrf.mxu0
      %v4679 = vpop.f32.mrf.mxu0
      %v4680 = vadd.f32 %v4352, %v4679
      %v4681 = vpop.f32.mrf.mxu0
      %4682 = vmatprep.mubr.bf16.mxu0 0
      %4683 = vmatmul.mubr.bf16.gmra.mxu0 %v4330
      %v4684 = vpop.f32.mrf.mxu0
      %v4685 = vadd.f32 %v4352, %v4684
      %v4686 = vpop.f32.mrf.mxu0
      %v4687 = vpop.f32.mrf.mxu0
      %v4688 = vadd.f32 %v4352, %v4687
      %v4689 = vpop.f32.mrf.mxu0
      %4690 = vdwg.mxu0
      %v4691 = vmax.f32 %v4437, 0.0
      %v4692 = vmax.f32 %v4440, 0.0
      %v4693 = vmax.f32 %v4445, 0.0
      %v4694 = vmax.f32 %v4448, 0.0
      %v4695 = vmax.f32 %v4453, 0.0
      %v4696 = vmax.f32 %v4456, 0.0
      %v4697 = vmax.f32 %v4461, 0.0
      %v4698 = vmax.f32 %v4464, 0.0
      %v4699 = vmax.f32 %v4469, 0.0
      %v4700 = vmax.f32 %v4472, 0.0
      %v4701 = vmax.f32 %v4477, 0.0
      %v4702 = vmax.f32 %v4480, 0.0
      %v4703 = vmax.f32 %v4485, 0.0
      %v4704 = vmax.f32 %v4488, 0.0
      %v4705 = vmax.f32 %v4493, 0.0
      %v4706 = vmax.f32 %v4496, 0.0
      %v4707 = vmax.f32 %v4501, 0.0
      %v4708 = vmax.f32 %v4504, 0.0
      %v4709 = vmax.f32 %v4509, 0.0
      %v4710 = vmax.f32 %v4512, 0.0
      %v4711 = vmax.f32 %v4517, 0.0
      %v4712 = vmax.f32 %v4520, 0.0
      %v4713 = vmax.f32 %v4525, 0.0
      %v4714 = vmax.f32 %v4528, 0.0
      %v4715 = vmax.f32 %v4533, 0.0
      %v4716 = vmax.f32 %v4536, 0.0
      %v4717 = vmax.f32 %v4541, 0.0
      %v4718 = vmax.f32 %v4544, 0.0
      %v4719 = vmax.f32 %v4549, 0.0
      %v4720 = vmax.f32 %v4552, 0.0
      %v4721 = vmax.f32 %v4557, 0.0
      %v4722 = vmax.f32 %v4560, 0.0
      %v4723 = vmax.f32 %v4565, 0.0
      %v4724 = vmax.f32 %v4568, 0.0
      %v4725 = vmax.f32 %v4573, 0.0
      %v4726 = vmax.f32 %v4576, 0.0
      %v4727 = vmax.f32 %v4581, 0.0
      %v4728 = vmax.f32 %v4584, 0.0
      %v4729 = vmax.f32 %v4589, 0.0
      %v4730 = vmax.f32 %v4592, 0.0
      %v4731 = vmax.f32 %v4597, 0.0
      %v4732 = vmax.f32 %v4600, 0.0
      %v4733 = vmax.f32 %v4605, 0.0
      %v4734 = vmax.f32 %v4608, 0.0
      %v4735 = vmax.f32 %v4613, 0.0
      %v4736 = vmax.f32 %v4616, 0.0
      %v4737 = vmax.f32 %v4621, 0.0
      %v4738 = vmax.f32 %v4624, 0.0
      %v4739 = vmax.f32 %v4629, 0.0
      %v4740 = vmax.f32 %v4632, 0.0
      %v4741 = vmax.f32 %v4637, 0.0
      %v4742 = vmax.f32 %v4640, 0.0
      %v4743 = vmax.f32 %v4645, 0.0
      %v4744 = vmax.f32 %v4648, 0.0
      %v4745 = vmax.f32 %v4653, 0.0
      %v4746 = vmax.f32 %v4656, 0.0
      %v4747 = vmax.f32 %v4661, 0.0
      %v4748 = vmax.f32 %v4664, 0.0
      %v4749 = vmax.f32 %v4669, 0.0
      %v4750 = vmax.f32 %v4672, 0.0
      %v4751 = vmax.f32 %v4677, 0.0
      %v4752 = vmax.f32 %v4680, 0.0
      %v4753 = vmax.f32 %v4685, 0.0
      %v4754 = vmax.f32 %v4688, 0.0
      %v4755 = vld [vmem:[%s529] sm:$0xff]
      %v4756 = vld [vmem:[%s529 + $0x8] sm:$0xff]
      %v4757 = vpack.c.bf16 %v4692, %v4691
      %v4758 = vpack.c.bf16 %v4694, %v4693
      %v4759 = vpack.c.bf16 %v4696, %v4695
      %v4760 = vpack.c.bf16 %v4698, %v4697
      %v4761 = vpack.c.bf16 %v4700, %v4699
      %v4762 = vpack.c.bf16 %v4702, %v4701
      %v4763 = vpack.c.bf16 %v4704, %v4703
      %v4764 = vpack.c.bf16 %v4706, %v4705
      %v4765 = vpack.c.bf16 %v4708, %v4707
      %v4766 = vpack.c.bf16 %v4710, %v4709
      %v4767 = vpack.c.bf16 %v4712, %v4711
      %v4768 = vpack.c.bf16 %v4714, %v4713
      %v4769 = vpack.c.bf16 %v4716, %v4715
      %v4770 = vpack.c.bf16 %v4718, %v4717
      %v4771 = vpack.c.bf16 %v4720, %v4719
      %v4772 = vpack.c.bf16 %v4722, %v4721
      %v4775 = vunpack.c.l.b16 %v4755
      %v4776 = vunpack.c.h.b16 %v4755
      %v4777 = vunpack.c.l.b16 %v4756
      %v4778 = vunpack.c.h.b16 %v4756
      %v4779 = vpack.c.b16 %v4777, %v4775
      %v4780 = vpack.c.b16 %v4778, %v4776
      %4783 = vmatprep.subr.bf16.mxu0 0
      %4784 = vmatpush1.bf16.msra.mxu0 %v4764
      %4785 = vmatprep.subr.bf16.mxu0 0
      %4786 = vmatpush1.bf16.msra.mxu0 %v4763
      %4787 = vmatprep.subr.bf16.mxu0 0
      %4788 = vmatpush1.bf16.msra.mxu0 %v4762
      %4789 = vmatprep.subr.bf16.mxu0 0
      %4790 = vmatpush1.bf16.msra.mxu0 %v4761
      %4791 = vmatprep.subr.bf16.mxu0 0
      %4792 = vmatpush1.bf16.msra.mxu0 %v4760
      %4793 = vmatprep.subr.bf16.mxu0 0
      %4794 = vmatpush1.bf16.msra.mxu0 %v4759
      %4795 = vmatprep.subr.bf16.mxu0 0
      %4796 = vmatpush1.bf16.msra.mxu0 %v4758
      %4797 = vmatprep.subr.bf16.mxu0 0
      %4798 = vmatpush1.bf16.msra.mxu0 %v4757
      %4799 = vmatprep.subr.bf16.mxu0 0
      %4800 = vmatpush2.bf16.msra.mxu0 %v4772
      %4801 = vmatprep.subr.bf16.mxu0 0
      %4802 = vmatpush2.bf16.msra.mxu0 %v4771
      %4803 = vmatprep.subr.bf16.mxu0 0
      %4804 = vmatpush2.bf16.msra.mxu0 %v4770
      %4805 = vmatprep.subr.bf16.mxu0 0
      %4806 = vmatpush2.bf16.msra.mxu0 %v4769
      %4807 = vmatprep.subr.bf16.mxu0 0
      %4808 = vmatpush2.bf16.msra.mxu0 %v4768
      %4809 = vmatprep.subr.bf16.mxu0 0
      %4810 = vmatpush2.bf16.msra.mxu0 %v4767
      %4811 = vmatprep.subr.bf16.mxu0 0
      %4812 = vmatpush2.bf16.msra.mxu0 %v4766
      %4813 = vmatprep.subr.bf16.mxu0 0
      %4814 = vmatpush2.bf16.msra.mxu0 %v4765
      %4815 = vmatprep.mubr.bf16.mxu0 %v4780
      %4816 = vmatmul.mubr.bf16.gmra.mxu0 %v4779
      %v4817 = vpop.f32.mrf.mxu0
      %v4818 = vadd.f32 0.0, %v4817
      %v4819 = vpop.f32.mrf.mxu0
      %v4820 = vpop.f32.mrf.mxu0
      %v4821 = vadd.f32 0.0, %v4820
      %v4822 = vpop.f32.mrf.mxu0
      %4823 = vdwg.mxu0
      %s4824 = scalar_lea.vmem %s529, 16
      %v4825 = vld [vmem:[%s4824] sm:$0xff]
      %v4826 = vld [vmem:[%s4824 + $0x8] sm:$0xff]
      %v4827 = vpack.c.bf16 %v4724, %v4723
      %v4828 = vpack.c.bf16 %v4726, %v4725
      %v4829 = vpack.c.bf16 %v4728, %v4727
      %v4830 = vpack.c.bf16 %v4730, %v4729
      %v4831 = vpack.c.bf16 %v4732, %v4731
      %v4832 = vpack.c.bf16 %v4734, %v4733
      %v4833 = vpack.c.bf16 %v4736, %v4735
      %v4834 = vpack.c.bf16 %v4738, %v4737
      %v4835 = vpack.c.bf16 %v4740, %v4739
      %v4836 = vpack.c.bf16 %v4742, %v4741
      %v4837 = vpack.c.bf16 %v4744, %v4743
      %v4838 = vpack.c.bf16 %v4746, %v4745
      %v4839 = vpack.c.bf16 %v4748, %v4747
      %v4840 = vpack.c.bf16 %v4750, %v4749
      %v4841 = vpack.c.bf16 %v4752, %v4751
      %v4842 = vpack.c.bf16 %v4754, %v4753
      %v4845 = vunpack.c.l.b16 %v4825
      %v4846 = vunpack.c.h.b16 %v4825
      %v4847 = vunpack.c.l.b16 %v4826
      %v4848 = vunpack.c.h.b16 %v4826
      %v4849 = vpack.c.b16 %v4847, %v4845
      %v4850 = vpack.c.b16 %v4848, %v4846
      %4853 = vmatprep.subr.bf16.mxu0 0
      %4854 = vmatpush1.bf16.msra.mxu0 %v4834
      %4855 = vmatprep.subr.bf16.mxu0 0
      %4856 = vmatpush1.bf16.msra.mxu0 %v4833
      %4857 = vmatprep.subr.bf16.mxu0 0
      %4858 = vmatpush1.bf16.msra.mxu0 %v4832
      %4859 = vmatprep.subr.bf16.mxu0 0
      %4860 = vmatpush1.bf16.msra.mxu0 %v4831
      %4861 = vmatprep.subr.bf16.mxu0 0
      %4862 = vmatpush1.bf16.msra.mxu0 %v4830
      %4863 = vmatprep.subr.bf16.mxu0 0
      %4864 = vmatpush1.bf16.msra.mxu0 %v4829
      %4865 = vmatprep.subr.bf16.mxu0 0
      %4866 = vmatpush1.bf16.msra.mxu0 %v4828
      %4867 = vmatprep.subr.bf16.mxu0 0
      %4868 = vmatpush1.bf16.msra.mxu0 %v4827
      %4869 = vmatprep.subr.bf16.mxu0 0
      %4870 = vmatpush2.bf16.msra.mxu0 %v4842
      %4871 = vmatprep.subr.bf16.mxu0 0
      %4872 = vmatpush2.bf16.msra.mxu0 %v4841
      %4873 = vmatprep.subr.bf16.mxu0 0
      %4874 = vmatpush2.bf16.msra.mxu0 %v4840
      %4875 = vmatprep.subr.bf16.mxu0 0
      %4876 = vmatpush2.bf16.msra.mxu0 %v4839
      %4877 = vmatprep.subr.bf16.mxu0 0
      %4878 = vmatpush2.bf16.msra.mxu0 %v4838
      %4879 = vmatprep.subr.bf16.mxu0 0
      %4880 = vmatpush2.bf16.msra.mxu0 %v4837
      %4881 = vmatprep.subr.bf16.mxu0 0
      %4882 = vmatpush2.bf16.msra.mxu0 %v4836
      %4883 = vmatprep.subr.bf16.mxu0 0
      %4884 = vmatpush2.bf16.msra.mxu0 %v4835
      %4885 = vmatprep.mubr.bf16.mxu0 %v4850
      %4886 = vmatmul.mubr.bf16.gmra.mxu0 %v4849
      %v4887 = vpop.f32.mrf.mxu0
      %v4888 = vadd.f32 0.0, %v4887
      %v4889 = vpop.f32.mrf.mxu0
      %v4890 = vpop.f32.mrf.mxu0
      %v4891 = vadd.f32 0.0, %v4890
      %v4892 = vpop.f32.mrf.mxu0
      %4893 = vdwg.mxu0
      %v4894 = vmax.f32 %v4818, 0.0
      %v4895 = vmax.f32 %v4821, 0.0
      %v4896 = vmax.f32 %v4888, 0.0
      %v4897 = vmax.f32 %v4891, 0.0
      %v4898 = vpack.c.bf16 %v4895, %v4894
      %v4899 = vpack.c.bf16 %v4897, %v4896
      %v4900 = vld [vmem:[%s10] sm:$0xf]
      %v4901 = vld [vmem:[%s10 + $0x4] sm:$0xf]
      %v4902 = vld [vmem:[%s10 + $0x8] sm:$0xf]
      %v4903 = vld [vmem:[%s10 + $0xc] sm:$0xf]
      %v4904 = vld [vmem:[%s10 + $0x10] sm:$0xf]
      %v4905 = vld [vmem:[%s10 + $0x14] sm:$0xf]
      %v4906 = vld [vmem:[%s10 + $0x18] sm:$0xf]
      %v4907 = vld [vmem:[%s10 + $0x1c] sm:$0xf]
      %v4908 = vld [vmem:[%s10 + $0x20] sm:$0xf]
      %v4909 = vld [vmem:[%s10 + $0x24] sm:$0xf]
      %v4910 = vld [vmem:[%s10 + $0x28] sm:$0xf]
      %v4911 = vld [vmem:[%s10 + $0x2c] sm:$0xf]
      %v4912 = vld [vmem:[%s10 + $0x30] sm:$0xf]
      %v4913 = vld [vmem:[%s10 + $0x34] sm:$0xf]
      %v4914 = vld [vmem:[%s10 + $0x38] sm:$0xf]
      %v4915 = vld [vmem:[%s10 + $0x3c] sm:$0xf]
      %v4916 = vld [vmem:[%s11] sm:$0x1]
      %v4918 = vlaneseq
      %v4919 = vshrl.u32 %v4918, 7
      %v4920 = vsub.s32 0, %v4919
      %v4921 = vrot.slane %v4916, %v4920
      %v4939 = vunpack.c.l.b16 %v4900
      %v4940 = vunpack.c.l.b16 %v4901
      %v4941 = vunpack.c.l.b16 %v4902
      %v4942 = vunpack.c.l.b16 %v4903
      %v4943 = vunpack.c.l.b16 %v4904
      %v4944 = vunpack.c.l.b16 %v4905
      %v4945 = vunpack.c.l.b16 %v4906
      %v4946 = vunpack.c.l.b16 %v4907
      %v4947 = vunpack.c.l.b16 %v4908
      %v4948 = vunpack.c.l.b16 %v4909
      %v4949 = vunpack.c.l.b16 %v4910
      %v4950 = vunpack.c.l.b16 %v4911
      %v4951 = vunpack.c.l.b16 %v4912
      %v4952 = vunpack.c.l.b16 %v4913
      %v4953 = vunpack.c.l.b16 %v4914
      %v4954 = vunpack.c.l.b16 %v4915
      %v4955 = vpack.c.b16 %v4940, %v4939
      %v4956 = vpack.c.b16 %v4942, %v4941
      %v4957 = vpack.c.b16 %v4944, %v4943
      %v4958 = vpack.c.b16 %v4946, %v4945
      %v4959 = vpack.c.b16 %v4948, %v4947
      %v4960 = vpack.c.b16 %v4950, %v4949
      %v4961 = vpack.c.b16 %v4952, %v4951
      %v4962 = vpack.c.b16 %v4954, %v4953
      %4971 = vmatprep.subr.bf16.mxu0 0
      %4972 = vmatpush1.bf16.msra.mxu0 %v4962
      %4973 = vmatprep.subr.bf16.mxu0 0
      %4974 = vmatpush1.bf16.msra.mxu0 %v4961
      %4975 = vmatprep.subr.bf16.mxu0 0
      %4976 = vmatpush1.bf16.msra.mxu0 %v4960
      %4977 = vmatprep.subr.bf16.mxu0 0
      %4978 = vmatpush1.bf16.msra.mxu0 %v4959
      %4979 = vmatprep.subr.bf16.mxu0 0
      %4980 = vmatpush1.bf16.msra.mxu0 %v4958
      %4981 = vmatprep.subr.bf16.mxu0 0
      %4982 = vmatpush1.bf16.msra.mxu0 %v4957
      %4983 = vmatprep.subr.bf16.mxu0 0
      %4984 = vmatpush1.bf16.msra.mxu0 %v4956
      %4985 = vmatprep.subr.bf16.mxu0 0
      %4986 = vmatpush1.bf16.msra.mxu0 %v4955
      %4987 = vmatprep.subr.bf16.mxu0 0
      %4988 = vmatpush2.bf16.msra.mxu0 0
      %4989 = vmatprep.subr.bf16.mxu0 0
      %4990 = vmatpush2.bf16.msra.mxu0 0
      %4991 = vmatprep.subr.bf16.mxu0 0
      %4992 = vmatpush2.bf16.msra.mxu0 0
      %4993 = vmatprep.subr.bf16.mxu0 0
      %4994 = vmatpush2.bf16.msra.mxu0 0
      %4995 = vmatprep.subr.bf16.mxu0 0
      %4996 = vmatpush2.bf16.msra.mxu0 0
      %4997 = vmatprep.subr.bf16.mxu0 0
      %4998 = vmatpush2.bf16.msra.mxu0 0
      %4999 = vmatprep.subr.bf16.mxu0 0
      %5000 = vmatpush2.bf16.msra.mxu0 0
      %5001 = vmatprep.subr.bf16.mxu0 0
      %5002 = vmatpush2.bf16.msra.mxu0 0
      %5003 = vmatprep.mubr.bf16.mxu0 0
      %5004 = vmatmul.mubr.bf16.gmra.mxu0 %v4898
      %v5005 = vpop.f32.mrf.mxu0
      %v5006 = vadd.f32 %v4921, %v5005
      %v5007 = vpop.f32.mrf.mxu0
      %v5008 = vpop.f32.mrf.mxu0
      %v5009 = vadd.f32 %v4921, %v5008
      %v5010 = vpop.f32.mrf.mxu0
      %5011 = vmatprep.mubr.bf16.mxu0 0
      %5012 = vmatmul.mubr.bf16.gmra.mxu0 %v4899
      %v5013 = vpop.f32.mrf.mxu0
      %v5014 = vadd.f32 %v4921, %v5013
      %v5015 = vpop.f32.mrf.mxu0
      %v5016 = vpop.f32.mrf.mxu0
      %v5017 = vadd.f32 %v4921, %v5016
      %v5018 = vpop.f32.mrf.mxu0
      %5019 = vdwg.mxu0
      %v5020 = vmax.f32 %v5006, 0.0
      %v5021 = vmax.f32 %v5009, 0.0
      %v5022 = vmax.f32 %v5014, 0.0
      %v5023 = vmax.f32 %v5017, 0.0
      %v5024 = vpack.c.bf16 %v5021, %v5020
      %v5025 = vpack.c.bf16 %v5023, %v5022
      %v5026 = vld [vmem:[%s12] sm:$0xf]
      %v5027 = vld [vmem:[%s12 + $0x4] sm:$0xf]
      %v5028 = vld [vmem:[%s12 + $0x8] sm:$0xf]
      %v5029 = vld [vmem:[%s12 + $0xc] sm:$0xf]
      %v5030 = vld [vmem:[%s12 + $0x10] sm:$0xf]
      %v5031 = vld [vmem:[%s12 + $0x14] sm:$0xf]
      %v5032 = vld [vmem:[%s12 + $0x18] sm:$0xf]
      %v5033 = vld [vmem:[%s12 + $0x1c] sm:$0xf]
      %v5034 = vld [vmem:[%s12 + $0x20] sm:$0xf]
      %v5035 = vld [vmem:[%s12 + $0x24] sm:$0xf]
      %v5036 = vld [vmem:[%s12 + $0x28] sm:$0xf]
      %v5037 = vld [vmem:[%s12 + $0x2c] sm:$0xf]
      %v5038 = vld [vmem:[%s12 + $0x30] sm:$0xf]
      %v5039 = vld [vmem:[%s12 + $0x34] sm:$0xf]
      %v5040 = vld [vmem:[%s12 + $0x38] sm:$0xf]
      %v5041 = vld [vmem:[%s12 + $0x3c] sm:$0xf]
      %v5042 = vld [vmem:[%s13] sm:$0x1]
      %v5044 = vlaneseq
      %v5045 = vshrl.u32 %v5044, 7
      %v5046 = vsub.s32 0, %v5045
      %v5047 = vrot.slane %v5042, %v5046
      %v5065 = vunpack.c.l.b16 %v5026
      %v5066 = vunpack.c.l.b16 %v5027
      %v5067 = vunpack.c.l.b16 %v5028
      %v5068 = vunpack.c.l.b16 %v5029
      %v5069 = vunpack.c.l.b16 %v5030
      %v5070 = vunpack.c.l.b16 %v5031
      %v5071 = vunpack.c.l.b16 %v5032
      %v5072 = vunpack.c.l.b16 %v5033
      %v5073 = vunpack.c.l.b16 %v5034
      %v5074 = vunpack.c.l.b16 %v5035
      %v5075 = vunpack.c.l.b16 %v5036
      %v5076 = vunpack.c.l.b16 %v5037
      %v5077 = vunpack.c.l.b16 %v5038
      %v5078 = vunpack.c.l.b16 %v5039
      %v5079 = vunpack.c.l.b16 %v5040
      %v5080 = vunpack.c.l.b16 %v5041
      %v5081 = vpack.c.b16 %v5066, %v5065
      %v5082 = vpack.c.b16 %v5068, %v5067
      %v5083 = vpack.c.b16 %v5070, %v5069
      %v5084 = vpack.c.b16 %v5072, %v5071
      %v5085 = vpack.c.b16 %v5074, %v5073
      %v5086 = vpack.c.b16 %v5076, %v5075
      %v5087 = vpack.c.b16 %v5078, %v5077
      %v5088 = vpack.c.b16 %v5080, %v5079
      %5097 = vmatprep.subr.bf16.mxu0 0
      %5098 = vmatpush1.bf16.msra.mxu0 %v5088
      %5099 = vmatprep.subr.bf16.mxu0 0
      %5100 = vmatpush1.bf16.msra.mxu0 %v5087
      %5101 = vmatprep.subr.bf16.mxu0 0
      %5102 = vmatpush1.bf16.msra.mxu0 %v5086
      %5103 = vmatprep.subr.bf16.mxu0 0
      %5104 = vmatpush1.bf16.msra.mxu0 %v5085
      %5105 = vmatprep.subr.bf16.mxu0 0
      %5106 = vmatpush1.bf16.msra.mxu0 %v5084
      %5107 = vmatprep.subr.bf16.mxu0 0
      %5108 = vmatpush1.bf16.msra.mxu0 %v5083
      %5109 = vmatprep.subr.bf16.mxu0 0
      %5110 = vmatpush1.bf16.msra.mxu0 %v5082
      %5111 = vmatprep.subr.bf16.mxu0 0
      %5112 = vmatpush1.bf16.msra.mxu0 %v5081
      %5113 = vmatprep.subr.bf16.mxu0 0
      %5114 = vmatpush2.bf16.msra.mxu0 0
      %5115 = vmatprep.subr.bf16.mxu0 0
      %5116 = vmatpush2.bf16.msra.mxu0 0
      %5117 = vmatprep.subr.bf16.mxu0 0
      %5118 = vmatpush2.bf16.msra.mxu0 0
      %5119 = vmatprep.subr.bf16.mxu0 0
      %5120 = vmatpush2.bf16.msra.mxu0 0
      %5121 = vmatprep.subr.bf16.mxu0 0
      %5122 = vmatpush2.bf16.msra.mxu0 0
      %5123 = vmatprep.subr.bf16.mxu0 0
      %5124 = vmatpush2.bf16.msra.mxu0 0
      %5125 = vmatprep.subr.bf16.mxu0 0
      %5126 = vmatpush2.bf16.msra.mxu0 0
      %5127 = vmatprep.subr.bf16.mxu0 0
      %5128 = vmatpush2.bf16.msra.mxu0 0
      %5129 = vmatprep.mubr.bf16.mxu0 0
      %5130 = vmatmul.mubr.bf16.gmra.mxu0 %v5024
      %v5131 = vpop.f32.mrf.mxu0
      %v5132 = vadd.f32 %v5047, %v5131
      %v5133 = vpop.f32.mrf.mxu0
      %v5134 = vpop.f32.mrf.mxu0
      %v5135 = vadd.f32 %v5047, %v5134
      %v5136 = vpop.f32.mrf.mxu0
      %5137 = vmatprep.mubr.bf16.mxu0 0
      %5138 = vmatmul.mubr.bf16.gmra.mxu0 %v5025
      %v5139 = vpop.f32.mrf.mxu0
      %v5140 = vadd.f32 %v5047, %v5139
      %v5141 = vpop.f32.mrf.mxu0
      %v5142 = vpop.f32.mrf.mxu0
      %v5143 = vadd.f32 %v5047, %v5142
      %v5144 = vpop.f32.mrf.mxu0
      %5145 = vdwg.mxu0
      %5146 = vmax.xlane.f32.xlu0 %v5132
      %v5147 = vpop.xlane.xlu0 %5146
      %5148 = vmax.xlane.f32.xlu0 %v5135
      %v5149 = vpop.xlane.xlu0 %5148
      %5150 = vmax.xlane.f32.xlu0 %v5140
      %v5151 = vpop.xlane.xlu0 %5150
      %5152 = vmax.xlane.f32.xlu0 %v5143
      %v5153 = vpop.xlane.xlu0 %5152
      %v5154 = vsub.f32 %v5132, %v5147
      %v5155 = vsub.f32 %v5135, %v5149
      %v5156 = vsub.f32 %v5140, %v5151
      %v5157 = vsub.f32 %v5143, %v5153
      %v5158 = vmul.f32 %v5154, 1.442695
      %v5159 = vpow.pop %v5158
      %v5160 = vmul.f32 %v5155, 1.442695
      %v5161 = vpow.pop %v5160
      %v5162 = vmul.f32 %v5156, 1.442695
      %v5163 = vpow.pop %v5162
      %v5164 = vmul.f32 %v5157, 1.442695
      %v5165 = vpow.pop %v5164
      %5166 = vadd.xlane.f32.xlu0 %v5159
      %v5167 = vpop.xlane.xlu0 %5166
      %5168 = vadd.xlane.f32.xlu0 %v5161
      %v5169 = vpop.xlane.xlu0 %5168
      %5170 = vadd.xlane.f32.xlu0 %v5163
      %v5171 = vpop.xlane.xlu0 %5170
      %5172 = vadd.xlane.f32.xlu0 %v5165
      %v5173 = vpop.xlane.xlu0 %5172
      %v5174 = vlog2.pop %v5167
      %v5175 = vmul.f32 %v5174, 0.6931472
      %v5176 = vlog2.pop %v5169
      %v5177 = vmul.f32 %v5176, 0.6931472
      %v5178 = vlog2.pop %v5171
      %v5179 = vmul.f32 %v5178, 0.6931472
      %v5180 = vlog2.pop %v5173
      %v5181 = vmul.f32 %v5180, 0.6931472
      %v5182 = vsub.f32 %v5154, %v5175
      %v5183 = vsub.f32 %v5155, %v5177
      %v5184 = vsub.f32 %v5156, %v5179
      %v5185 = vsub.f32 %v5157, %v5181
      %v5186 = vld [vmem:[%s535] sm:$0xff]
      %v5187 = vld [vmem:[%s535 + $0x8] sm:$0xff]
      %v5188 = vld [vmem:[%s535 + $0x10] sm:$0xff]
      %v5189 = vld [vmem:[%s535 + $0x18] sm:$0xff]
      %5190 = vset.pattern.permute.xlu0 0
      %5191 = vperm.xlu0 %5190, %v5186
      %v5192 = vpop.permute.xlu0 %5191
      %5193 = vset.pattern.permute.xlu0 0
      %5194 = vperm.xlu0 %5193, %v5187
      %v5195 = vpop.permute.xlu0 %5194
      %5196 = vset.pattern.permute.xlu0 0
      %5197 = vperm.xlu0 %5196, %v5188
      %v5198 = vpop.permute.xlu0 %5197
      %5199 = vset.pattern.permute.xlu0 0
      %5200 = vperm.xlu0 %5199, %v5189
      %v5201 = vpop.permute.xlu0 %5200
      %vm5202 = vcmp.eq.s32.totalorder %v608, %v5192
      %vm5203 = vcmp.eq.s32.totalorder %v608, %v5195
      %vm5204 = vcmp.eq.s32.totalorder %v608, %v5198
      %vm5205 = vcmp.eq.s32.totalorder %v608, %v5201
      %v5206 = vsel %vm5202, %v5182, 0.0
      %v5207 = vsel %vm5203, %v5183, 0.0
      %v5208 = vsel %vm5204, %v5184, 0.0
      %v5209 = vsel %vm5205, %v5185, 0.0
      %5210 = vadd.xlane.f32.xlu0 %v5206
      %v5211 = vpop.xlane.xlu0 %5210
      %5212 = vadd.xlane.f32.xlu0 %v5207
      %v5213 = vpop.xlane.xlu0 %5212
      %5214 = vadd.xlane.f32.xlu0 %v5208
      %v5215 = vpop.xlane.xlu0 %5214
      %5216 = vadd.xlane.f32.xlu0 %v5209
      %v5217 = vpop.xlane.xlu0 %5216
      %vm5218 = vcmask 7168
      %v5219 = vsel %vm5218, %v5211, 0.0
      %v5220 = vsel %vm5218, %v5213, 0.0
      %v5221 = vadd.f32 %v5219, %v5220
      %v5222 = vsel %vm5218, %v5215, 0.0
      %v5223 = vadd.f32 %v5221, %v5222
      %v5224 = vsel %vm5218, %v5217, 0.0
      %v5225 = vadd.f32 %v5223, %v5224
      %5226 = vadd.xlane.f32.xlu0 %v5225
      %v5227 = vpop.xlane.xlu0 %5226
      %v5228 = vrot.slane %v5227, 4
      %v5229 = vadd.f32 %v5227, %v5228
      %v5230 = vrot.slane %v5229, 2
      %v5231 = vadd.f32 %v5229, %v5230
      %v5232 = vrot.slane %v5231, 1
      %v5233 = vadd.f32 %v5231, %v5232
      %s5234 = vtos %v5233
      %v5235 = vrcp.pop 32.0
      %s5236 = vtos %v5235
      %s5237 = smul.f32 %s5234, %s5236
      %s5238 = ssub.f32 0.0, %s5237
      %5239 = vmax.xlane.f32.xlu0 %v5182
      %v5240 = vpop.xlane.xlu0 %5239
      %5241 = vmax.xlane.f32.xlu0 %v5183
      %v5242 = vpop.xlane.xlu0 %5241
      %5243 = vmax.xlane.f32.xlu0 %v5184
      %v5244 = vpop.xlane.xlu0 %5243
      %5245 = vmax.xlane.f32.xlu0 %v5185
      %v5246 = vpop.xlane.xlu0 %5245
      %vm5247 = vcmp.eq.f32.partialorder %v5182, %v5240
      %vm5248 = vcmp.eq.f32.partialorder %v5183, %v5242
      %vm5249 = vcmp.eq.f32.partialorder %v5184, %v5244
      %vm5250 = vcmp.eq.f32.partialorder %v5185, %v5246
      %v5251 = vsel %vm5247, %v608, 128
      %v5252 = vsel %vm5248, %v608, 128
      %v5253 = vsel %vm5249, %v608, 128
      %v5254 = vsel %vm5250, %v608, 128
      %v5255 = vand.u32 %v5251, 65535
      %v5256 = vshra.s32 %v5251, 16
      %v5257 = vcvt.s32.f32 %v5255
      %v5258 = vcvt.s32.f32 %v5256
      %5259 = vmin.xlane.f32.xlu0 %v5258
      %v5260 = vpop.xlane.xlu0 %5259
      %vm5261 = vcmp.eq.f32.partialorder %v5258, %v5260
      %v5262 = vsel %vm5261, %v5257, inf
      %5263 = vmin.xlane.f32.xlu0 %v5262
      %v5264 = vpop.xlane.xlu0 %5263
      %v5265 = vcvt.f32.s32 %v5264
      %v5266 = vcvt.f32.s32 %v5260
      %v5267 = vshll.u32 %v5266, 16
      %v5268 = vadd.s32 %v5267, %v5265
      %v5269 = vand.u32 %v5252, 65535
      %v5270 = vshra.s32 %v5252, 16
      %v5271 = vcvt.s32.f32 %v5269
      %v5272 = vcvt.s32.f32 %v5270
      %5273 = vmin.xlane.f32.xlu0 %v5272
      %v5274 = vpop.xlane.xlu0 %5273
      %vm5275 = vcmp.eq.f32.partialorder %v5272, %v5274
      %v5276 = vsel %vm5275, %v5271, inf
      %5277 = vmin.xlane.f32.xlu0 %v5276
      %v5278 = vpop.xlane.xlu0 %5277
      %v5279 = vcvt.f32.s32 %v5278
      %v5280 = vcvt.f32.s32 %v5274
      %v5281 = vshll.u32 %v5280, 16
      %v5282 = vadd.s32 %v5281, %v5279
      %v5283 = vand.u32 %v5253, 65535
      %v5284 = vshra.s32 %v5253, 16
      %v5285 = vcvt.s32.f32 %v5283
      %v5286 = vcvt.s32.f32 %v5284
      %5287 = vmin.xlane.f32.xlu0 %v5286
      %v5288 = vpop.xlane.xlu0 %5287
      %vm5289 = vcmp.eq.f32.partialorder %v5286, %v5288
      %v5290 = vsel %vm5289, %v5285, inf
      %5291 = vmin.xlane.f32.xlu0 %v5290
      %v5292 = vpop.xlane.xlu0 %5291
      %v5293 = vcvt.f32.s32 %v5292
      %v5294 = vcvt.f32.s32 %v5288
      %v5295 = vshll.u32 %v5294, 16
      %v5296 = vadd.s32 %v5295, %v5293
      %v5297 = vand.u32 %v5254, 65535
      %v5298 = vshra.s32 %v5254, 16
      %v5299 = vcvt.s32.f32 %v5297
      %v5300 = vcvt.s32.f32 %v5298
      %5301 = vmin.xlane.f32.xlu0 %v5300
      %v5302 = vpop.xlane.xlu0 %5301
      %vm5303 = vcmp.eq.f32.partialorder %v5300, %v5302
      %v5304 = vsel %vm5303, %v5299, inf
      %5305 = vmin.xlane.f32.xlu0 %v5304
      %v5306 = vpop.xlane.xlu0 %5305
      %v5307 = vcvt.f32.s32 %v5306
      %v5308 = vcvt.f32.s32 %v5302
      %v5309 = vshll.u32 %v5308, 16
      %v5310 = vadd.s32 %v5309, %v5307
      %vm5311 = vcmp.eq.s32.totalorder %v5268, %v5186
      %vm5312 = vcmp.eq.s32.totalorder %v5282, %v5187
      %vm5313 = vcmp.eq.s32.totalorder %v5296, %v5188
      %vm5314 = vcmp.eq.s32.totalorder %v5310, %v5189
      %v5315 = vsel %vm5311, 1, 0
      %v5316 = vsel %vm5312, 1, 0
      %v5317 = vsel %vm5313, 1, 0
      %v5318 = vsel %vm5314, 1, 0
      %v5319 = vcvt.s32.f32 %v5315
      %v5320 = vcvt.s32.f32 %v5316
      %v5321 = vcvt.s32.f32 %v5317
      %v5322 = vcvt.s32.f32 %v5318
      %v5323 = vsel %vm5218, %v5319, 0.0
      %v5324 = vsel %vm5218, %v5320, 0.0
      %v5325 = vadd.f32 %v5323, %v5324
      %v5326 = vsel %vm5218, %v5321, 0.0
      %v5327 = vadd.f32 %v5325, %v5326
      %v5328 = vsel %vm5218, %v5322, 0.0
      %v5329 = vadd.f32 %v5327, %v5328
      %5330 = vadd.xlane.f32.xlu0 %v5329
      %v5331 = vpop.xlane.xlu0 %5330
      %v5332 = vrot.slane %v5331, 4
      %v5333 = vadd.f32 %v5331, %v5332
      %v5334 = vrot.slane %v5333, 2
      %v5335 = vadd.f32 %v5333, %v5334
      %v5336 = vrot.slane %v5335, 1
      %v5337 = vadd.f32 %v5335, %v5336
      %s5338 = vtos %v5337
      %v5339 = vrcp.pop 32.0
      %s5340 = vtos %v5339
      %s5341 = smul.f32 %s5338, %s5340
      %v5342 = vlaneseq
      %v5343 = vshrl.u32 %v5342, 7
      %vm5344 = vcmp.eq.s32.totalorder %v5343, 0
      %vm5345 = vcmp.eq.s32.totalorder %v608, 0
      %vm5346 = vcmp.eq.s32.totalorder %v608, 1
      %v5347 = vstv %s5341
      %v5348 = vsel %vm5346, %v5347, 0.0
      %v5349 = vstv %s5238
      %v5350 = vsel %vm5345, %v5349, %v5348
      %v5351 = vsel %vm5344, %v5350, 0.0
      %5352 = vst [vmem:[%s541] sm:$0xff] %v5182
      %5353 = vst [vmem:[%s541 + $0x8] sm:$0xff] %v5183
      %5354 = vst [vmem:[%s541 + $0x10] sm:$0xff] %v5184
      %5355 = vst [vmem:[%s541 + $0x18] sm:$0xff] %v5185
      %5356 = vst [vmem:[%s541 + $0x20] sm:$0xff] %v5351
      %p5357 = scmp.lt.s32.totalorder %s25, 1
      %s5358 = scalar_select %p5357, %s25, 1
      %s5359 = smul.addr %s5358, 5
      %s5360 = smul.addr %s5359, 8
      %s5361 = scalar_lea.vmem %s14, %s5360
      // Predicated region
      $region77: #{classifier_forward.1} parent=75 // pred_check
        %p5362 = pneg %p357
      $region78: #{classifier_forward.1} parent=75 // pred_check_branch
        %5364 = sbr.rel (%p5362) target = $region80
      $region79: #{classifier_forward.1} parent=75 // pred_region
        _
      $region80: #{classifier_forward.1} parent=75 // pred_fallthru
        _
    $region76: #{classifier_forward.1} parent=5 // pred_fallthru
      _
    %p5365 = scmp.le.s32.totalorder 2, %s20
    // Predicated region
    $region81: #{classifier_forward.1} parent=5 // pred_check
      %p5366 = pneg %p5365
    $region82: #{classifier_forward.1} parent=5 // pred_check_branch
      %5368 = sbr.rel (%p5366) target = $region84
    $region83: #{classifier_forward.1} parent=5 // pred_region
      %s5369 = ssub.s32 %s20, 2
      // Predicated region
      $region85: #{classifier_forward.1} parent=83 // pred_check
        %p5370 = pneg %p363
      $region86: #{classifier_forward.1} parent=83 // pred_check_branch
        %5372 = sbr.rel (%p5370) target = $region88
      $region87: #{classifier_forward.1} parent=83 // pred_region
        %p5373 = scmp.lt.s32.totalorder %s26, 1
        %s5374 = scalar_select %p5373, %s26, 1
        %s5375 = smul.addr %s5374, 5
        %s5376 = smul.addr %s5375, 8
        %s5377 = scalar_lea.vmem %s14, %s5376
      $region88: #{classifier_forward.1} parent=83 // pred_fallthru
        _
    $region84: #{classifier_forward.1} parent=5 // pred_fallthru
      _
  $region6: #{classifier_forward.1} parent=0 // loop_footer
    %s24 = sadd.s32 1, %s20
  $region7: #{classifier_forward.1} parent=0 // loop_footer_branch
    %19 = sbr.rel target = $region3
  $region8: #{classifier_forward.1} parent=0 // loop_exit
    _

</llo_original>
